<compile_context>
chip_gen: v7x
topology: tpu7x:2x2x1
jax: 0.10.0
libtpu: 0.0.40
codegen_flags: <defaults>
</compile_context>

<pallas_src>
import functools
import math
import time

import jax
import jax.numpy as jnp
from jax import lax
from jax.experimental import pallas as pl
from jax.experimental.pallas import tpu as pltpu


# ----------------------------------------------------------------------------
# Per-generation tuning (MXU width + scoped-VMEM budget)
# ----------------------------------------------------------------------------
def _device_tuning():
    try:
        kind = jax.devices()[0].device_kind.lower()
    except Exception:
        kind = ""
    narrow_mxu = any(t in kind for t in ("v5 lite", "v5e", "v5lite", "v4"))
    tm = tn = 128 if narrow_mxu else 256
    tk = 512
    if "v7" in kind:
        vmem = 48 * 1024 * 1024          # v7x: 64 MiB physical VMEM -> stay under
    elif any(t in kind for t in ("v4", "v5", "v6")):
        vmem = 100 * 1024 * 1024         # 128 MiB physical VMEM on v4/v5e/v6e
    else:
        vmem = 48 * 1024 * 1024          # conservative default
    return tm, tn, tk, vmem


_TM, _TN, _TK, _VMEM_LIMIT = _device_tuning()
_LN_TM = 512                             # LayerNorm is HBM-bound -> bigger row tiles
_ATT_T = 512                             # flash-attention q/kv tile


def _cparams(dimension_semantics):
    return pltpu.CompilerParams(dimension_semantics=dimension_semantics,
                                vmem_limit_bytes=_VMEM_LIMIT)


def _round_up(x, m):
    return (x + m - 1) // m * m


def _pick_tile(dim, target):
    """One full block when the dim is small (allowed regardless of (8,128)
    alignment because block == full dim), otherwise an aligned `target` tile
    (caller pads the dim up to a multiple of it)."""
    return dim if dim <= target else target


def _pad_rows(a, rows):
    if a.shape[0] == rows:
        return a
    return jnp.pad(a, ((0, rows - a.shape[0]),) + ((0, 0),) * (a.ndim - 1))


def _pad2(a, shape):
    if tuple(a.shape) == tuple(shape):
        return a
    return jnp.pad(a, ((0, shape[0] - a.shape[0]), (0, shape[1] - a.shape[1])))


# ----------------------------------------------------------------------------
# Tiled matmul (+ optional bias) — bf16 operands, f32 accumulation
# ----------------------------------------------------------------------------
def _matmul_kernel(x_ref, w_ref, o_ref, acc_ref):
    @pl.when(pl.program_id(2) == 0)
    def _():
        acc_ref[...] = jnp.zeros_like(acc_ref)

    acc_ref[...] += jnp.dot(x_ref[...], w_ref[...],
                            preferred_element_type=jnp.float32)

    @pl.when(pl.program_id(2) == pl.num_programs(2) - 1)
    def _():
        o_ref[...] = acc_ref[...].astype(o_ref.dtype)


def _matmul_bias_kernel(x_ref, w_ref, b_ref, o_ref, acc_ref):
    @pl.when(pl.program_id(2) == 0)
    def _():
        acc_ref[...] = jnp.zeros_like(acc_ref)

    acc_ref[...] += jnp.dot(x_ref[...], w_ref[...],
                            preferred_element_type=jnp.float32)

    @pl.when(pl.program_id(2) == pl.num_programs(2) - 1)
    def _():
        o_ref[...] = (acc_ref[...] + b_ref[...]).astype(o_ref.dtype)


def matmul(x, w, b=None, *, out_dtype=jnp.float32):
    """x: (M, K), w: (K, N), b: (N,) or None -> (M, N).  bf16 MXU, f32 acc."""
    M, K = x.shape
    N = w.shape[1]
    tm, tn, tk = _pick_tile(M, _TM), _pick_tile(N, _TN), _pick_tile(K, _TK)
    Mp, Np, Kp = _round_up(M, tm), _round_up(N, tn), _round_up(K, tk)

    xp = _pad2(x, (Mp, Kp)).astype(jnp.bfloat16)
    wp = _pad2(w, (Kp, Np)).astype(jnp.bfloat16)

    in_specs = [pl.BlockSpec((tm, tk), lambda i, j, k: (i, k)),
                pl.BlockSpec((tk, tn), lambda i, j, k: (k, j))]
    args = [xp, wp]
    if b is None:
        kernel = _matmul_kernel
    else:
        kernel = _matmul_bias_kernel
        in_specs.append(pl.BlockSpec((1, tn), lambda i, j, k: (0, j)))
        args.append(_pad2(b.reshape(1, N).astype(jnp.float32), (1, Np)))

    out = pl.pallas_call(
        kernel,
        out_shape=jax.ShapeDtypeStruct((Mp, Np), out_dtype),
        grid=(Mp // tm, Np // tn, Kp // tk),
        in_specs=in_specs,
        out_specs=pl.BlockSpec((tm, tn), lambda i, j, k: (i, j)),
        scratch_shapes=[pltpu.VMEM((tm, tn), jnp.float32)],
        compiler_params=_cparams(("parallel", "parallel", "arbitrary")),
    )(*args)
    if Mp != M or Np != N:
        out = out[:M, :N]
    return out


# ----------------------------------------------------------------------------
# Fused LayerNorm + matmul (+ bias): qkv projection with norm1 folded in
# ----------------------------------------------------------------------------
def _ln_matmul_kernel(x_ref, g_ref, b_ref, w_ref, bias_ref, o_ref, *, eps):
    x = x_ref[...]
    mu = jnp.mean(x, axis=-1, keepdims=True)
    xc = x - mu
    var = jnp.mean(xc * xc, axis=-1, keepdims=True)
    xn = ((xc * jax.lax.rsqrt(var + eps)) * g_ref[...] + b_ref[...]
          ).astype(jnp.bfloat16)
    acc = jnp.dot(xn, w_ref[...], preferred_element_type=jnp.float32) + bias_ref[...]
    o_ref[...] = acc.astype(o_ref.dtype)


def ln_matmul(x, gamma, beta, w, b, *, eps, out_dtype=jnp.float32):
    """out = LayerNorm(x) @ w + b, with the LN computed per row-tile in the
    matmul prologue (requires the full K dim resident, which holds for ViT C)."""
    M, K = x.shape
    N = w.shape[1]
    tm, tn = _pick_tile(M, _TM), _pick_tile(N, _TN)
    Mp, Np = _round_up(M, tm), _round_up(N, tn)

    xp = _pad_rows(x, Mp)
    wp = _pad2(w.astype(jnp.bfloat16), (K, Np))
    bp = _pad2(b.reshape(1, N).astype(jnp.float32), (1, Np))

    out = pl.pallas_call(
        functools.partial(_ln_matmul_kernel, eps=eps),
        out_shape=jax.ShapeDtypeStruct((Mp, Np), out_dtype),
        grid=(Mp // tm, Np // tn),
        in_specs=[pl.BlockSpec((tm, K), lambda i, j: (i, 0)),
                  pl.BlockSpec((1, K), lambda i, j: (0, 0)),
                  pl.BlockSpec((1, K), lambda i, j: (0, 0)),
                  pl.BlockSpec((K, tn), lambda i, j: (0, j)),
                  pl.BlockSpec((1, tn), lambda i, j: (0, j))],
        out_specs=pl.BlockSpec((tm, tn), lambda i, j: (i, j)),
        compiler_params=_cparams(("parallel", "parallel")),
    )(xp, gamma.reshape(1, K), beta.reshape(1, K), wp, bp)
    if Mp != M or Np != N:
        out = out[:M, :N]
    return out


# ----------------------------------------------------------------------------
# LayerNorm (M-tiled, last-dim reduction)
# ----------------------------------------------------------------------------
def _ln_kernel(x_ref, g_ref, b_ref, o_ref, *, eps):
    x = x_ref[...]
    mu = jnp.mean(x, axis=-1, keepdims=True)
    xc = x - mu
    var = jnp.mean(xc * xc, axis=-1, keepdims=True)
    o_ref[...] = (xc * jax.lax.rsqrt(var + eps)) * g_ref[...] + b_ref[...]


def layernorm(x, gamma, beta, eps):
    """LayerNorm over the last dim.  x: (M, C) f32."""
    M, C = x.shape
    tm = _pick_tile(M, _LN_TM)
    Mp = _round_up(M, tm)
    xp = _pad_rows(x, Mp)
    out = pl.pallas_call(
        functools.partial(_ln_kernel, eps=eps),
        out_shape=jax.ShapeDtypeStruct((Mp, C), jnp.float32),
        grid=(Mp // tm,),
        in_specs=[pl.BlockSpec((tm, C), lambda i: (i, 0)),
                  pl.BlockSpec((1, C), lambda i: (0, 0)),
                  pl.BlockSpec((1, C), lambda i: (0, 0))],
        out_specs=pl.BlockSpec((tm, C), lambda i: (i, 0)),
        compiler_params=_cparams(("parallel",)),
    )(xp, gamma.reshape(1, C), beta.reshape(1, C))
    return out[:M] if Mp != M else out


# ----------------------------------------------------------------------------
# Fused [residual-add] + LayerNorm + MLP + residual
#   matches the PyTorch blocks exactly:  xn = norm2(x[+attn]);  out = xn + mlp(xn)
# ----------------------------------------------------------------------------
def _erf_approx(x):
    # Abramowitz & Stegun 7.1.26, |err| < 1.5e-7 (matches exact-erf GELU to ~f32).
    a1, a2, a3, a4, a5 = 0.254829592, -0.284496736, 1.421413741, -1.453152027, 1.061405429
    p = 0.3275911
    sign = jnp.where(x >= 0.0, 1.0, -1.0)
    ax = jnp.abs(x)
    t = 1.0 / (1.0 + p * ax)
    poly = ((((a5 * t + a4) * t + a3) * t + a2) * t + a1) * t
    return sign * (1.0 - poly * jnp.exp(-ax * ax))


def _gelu(x):
    return 0.5 * x * (1.0 + _erf_approx(x * 0.7071067811865476))


def _ln_mlp_body(x, g, b, w1, b1, w2, b2, eps):
    mu = jnp.mean(x, axis=-1, keepdims=True)
    xc = x - mu
    var = jnp.mean(xc * xc, axis=-1, keepdims=True)
    xn = (xc * jax.lax.rsqrt(var + eps)) * g + b
    h = jnp.dot(xn.astype(jnp.bfloat16), w1,
                preferred_element_type=jnp.float32) + b1
    h = _gelu(h)
    return xn + jnp.dot(h.astype(jnp.bfloat16), w2,
                        preferred_element_type=jnp.float32) + b2


def _ln_mlp_kernel(x_ref, g_ref, b_ref, w1_ref, b1_ref, w2_ref, b2_ref, o_ref, *, eps):
    o_ref[...] = _ln_mlp_body(x_ref[...], g_ref[...], b_ref[...], w1_ref[...],
                              b1_ref[...], w2_ref[...], b2_ref[...], eps)


def _res_ln_mlp_kernel(x_ref, y_ref, g_ref, b_ref, w1_ref, b1_ref, w2_ref, b2_ref,
                       o_ref, *, eps):
    x = x_ref[...] + y_ref[...].astype(jnp.float32)
    o_ref[...] = _ln_mlp_body(x, g_ref[...], b_ref[...], w1_ref[...],
                              b1_ref[...], w2_ref[...], b2_ref[...], eps)


def ln_mlp(x, p, eps, residual=None):
    """x: (M, C).  xn = LN(x [+ residual]); returns xn + lin2(gelu(lin1(xn))).

    bf16-resident MLP weights (halves the VMEM footprint & DMA vs f32); the
    token dim is tiled and pipelined.
    # TODO(synk): for very large embed dims (e.g. ViT-H 1280/5120) also tile the
    # hidden dim in-kernel so the resident weights stay under the v7x VMEM budget.
    """
    M, C = x.shape
    Hd = p["mlp_w1"].shape[1]
    tm = _pick_tile(M, _TM)
    Mp = _round_up(M, tm)

    row_spec = pl.BlockSpec((tm, C), lambda i: (i, 0))

    def full_spec(r, c):
        return pl.BlockSpec((r, c), lambda i: (0, 0))

    in_specs = [row_spec]
    args = [_pad_rows(x, Mp)]
    if residual is not None:
        in_specs.append(row_spec)
        args.append(_pad_rows(residual, Mp))
        kernel = _res_ln_mlp_kernel
    else:
        kernel = _ln_mlp_kernel

    in_specs += [full_spec(1, C), full_spec(1, C), full_spec(C, Hd),
                 full_spec(1, Hd), full_spec(Hd, C), full_spec(1, C)]
    args += [p["norm2_g"].reshape(1, C), p["norm2_b"].reshape(1, C),
             p["mlp_w1"].astype(jnp.bfloat16), p["mlp_b1"].reshape(1, Hd),
             p["mlp_w2"].astype(jnp.bfloat16), p["mlp_b2"].reshape(1, C)]

    out = pl.pallas_call(
        functools.partial(kernel, eps=eps),
        out_shape=jax.ShapeDtypeStruct((Mp, C), jnp.float32),
        grid=(Mp // tm,),
        in_specs=in_specs,
        out_specs=row_spec,
        compiler_params=_cparams(("parallel",)),
    )(*args)
    return out[:M] if Mp != M else out


# ----------------------------------------------------------------------------
# Flash attention (online softmax), bf16 in / bf16 out, f32 accumulation
# ----------------------------------------------------------------------------
def _flash_kernel(q_ref, k_ref, v_ref, o_ref, m_sc, l_sc, acc_sc, *,
                  scale, s_real, tkv, mask_kv):
    kv = pl.program_id(2)

    @pl.when(kv == 0)
    def _():
        m_sc[...] = jnp.full_like(m_sc, -jnp.inf)
        l_sc[...] = jnp.zeros_like(l_sc)
        acc_sc[...] = jnp.zeros_like(acc_sc)

    q = q_ref[0]                                   # (tq, hd)  bf16
    k = k_ref[0]                                   # (tkv, hd) bf16
    v = v_ref[0]                                   # (tkv, hd) bf16
    # contract the last axes of q and k directly (no materialized K transpose)
    s = lax.dot_general(q, k, (((1,), (1,)), ((), ())),
                        preferred_element_type=jnp.float32) * scale   # (tq, tkv)
    if mask_kv:
        kv_pos = kv * tkv + lax.broadcasted_iota(jnp.int32, s.shape, 1)
        s = jnp.where(kv_pos < s_real, s, -jnp.inf)

    m_prev = m_sc[...]
    m_new = jnp.maximum(m_prev, jnp.max(s, axis=-1, keepdims=True))
    alpha = jnp.exp(m_prev - m_new)
    p = jnp.exp(s - m_new)
    l_sc[...] = alpha * l_sc[...] + jnp.sum(p, axis=-1, keepdims=True)
    acc_sc[...] = alpha * acc_sc[...] + jnp.dot(p.astype(v.dtype), v,
                                                preferred_element_type=jnp.float32)
    m_sc[...] = m_new

    @pl.when(kv == pl.num_programs(2) - 1)
    def _():
        o_ref[0] = (acc_sc[...] * pl.reciprocal(l_sc[...], approx=True)
                    ).astype(o_ref.dtype)


def attention(q, k, v):
    """q, k, v: (B*H, S, hd) bfloat16 -> (B*H, S, hd) bfloat16."""
    BH, S, hd = q.shape
    scale = 1.0 / math.sqrt(hd)
    t = S if S <= _ATT_T else _ATT_T
    Sp = _round_up(S, t)
    mask_kv = Sp != S
    if mask_kv:
        pad = ((0, 0), (0, Sp - S), (0, 0))
        q, k, v = (jnp.pad(a, pad) for a in (q, k, v))

    q_spec = pl.BlockSpec((1, t, hd), lambda b, qi, ki: (b, qi, 0))
    kv_spec = pl.BlockSpec((1, t, hd), lambda b, qi, ki: (b, ki, 0))

    out = pl.pallas_call(
        functools.partial(_flash_kernel, scale=scale, s_real=S, tkv=t,
                          mask_kv=mask_kv),
        out_shape=jax.ShapeDtypeStruct((BH, Sp, hd), jnp.bfloat16),
        grid=(BH, Sp // t, Sp // t),
        in_specs=[q_spec, kv_spec, kv_spec],
        out_specs=q_spec,
        scratch_shapes=[pltpu.VMEM((t, 1), jnp.float32),
                        pltpu.VMEM((t, 1), jnp.float32),
                        pltpu.VMEM((t, hd), jnp.float32)],
        compiler_params=_cparams(("parallel", "parallel", "arbitrary")),
    )(q, k, v)
    return out[:, :S, :] if mask_kv else out


# ----------------------------------------------------------------------------
# 3x3x3 'same' conv (no bias) — one padded depth-plane per grid step,
# all 9 (kh,kw) taps accumulated in-kernel as flat 2D matmuls.
# ----------------------------------------------------------------------------
def _conv3_kernel(x_ref, w_ref, o_ref, *, H, W):
    kd = pl.program_id(2)

    @pl.when(kd == 0)
    def _():
        o_ref[...] = jnp.zeros_like(o_ref)

    L = H * (W + 2)
    for kh in range(3):
        for kw in range(3):
            off = kh * (W + 2) + kw            # static offset
            xs = x_ref[off:off + L, :].astype(jnp.bfloat16)
            o_ref[...] += jnp.dot(xs, w_ref[kh, kw],
                                  preferred_element_type=jnp.float32)


def conv3x3x3(x, w):
    """x: (B, D, H, W, C) channel-last f32; w: (Cout, C, 3, 3, 3) -> (B, D, H, W, Cout).

    Each grid step (b, d, kd) loads the whole padded plane (d+kd) flattened to a
    2D (P, C) slab; shifting by (kh, kw) is a static row offset in that slab, so
    every tap is one 2D matmul.  The two padded columns per row land in output
    positions that are sliced away afterwards.
    """
    B, D, H, W, C = x.shape
    Cout = w.shape[0]
    L = H * (W + 2)
    plane = (H + 2) * (W + 2)
    P = plane + 8                                             # room for tap overrun
    xp = jnp.pad(x, ((0, 0), (1, 1), (1, 1), (1, 1), (0, 0)))  # (B, D+2, H+2, W+2, C)
    xp = xp.reshape(B, D + 2, plane, C)
    xp = jnp.pad(xp, ((0, 0), (0, 0), (0, P - plane), (0, 0)))
    wt = jnp.transpose(w, (2, 3, 4, 1, 0)).astype(jnp.bfloat16)  # (3,3,3,C,Cout)

    out = pl.pallas_call(
        functools.partial(_conv3_kernel, H=H, W=W),
        out_shape=jax.ShapeDtypeStruct((B, D, L, Cout), jnp.float32),
        grid=(B, D, 3),
        in_specs=[pl.BlockSpec((None, None, P, C),
                               lambda b, d, kd: (b, d + kd, 0, 0)),
                  pl.BlockSpec((None, 3, 3, C, Cout),
                               lambda b, d, kd: (kd, 0, 0, 0, 0))],
        out_specs=pl.BlockSpec((None, None, L, Cout),
                               lambda b, d, kd: (b, d, 0, 0)),
        compiler_params=_cparams(("parallel", "parallel", "arbitrary")),
    )(xp, wt)
    out = out.reshape(B, D, H, W + 2, Cout)[:, :, :, :W, :]
    return out


# ----------------------------------------------------------------------------
# Model pieces (glue in plain JAX, compute in the Pallas kernels above)
# ----------------------------------------------------------------------------
def patch_embed(x, w, b, patch, embed_dim):
    """Conv3d with kernel==stride == non-overlapping patches -> tiled matmul."""
    B, Cin, D, H, W = x.shape
    nD, nH, nW = D // patch, H // patch, W // patch
    xp = x.reshape(B, Cin, nD, patch, nH, patch, nW, patch)
    xp = xp.transpose(0, 2, 4, 6, 1, 3, 5, 7)                 # (B,nD,nH,nW,Cin,p,p,p)
    xp = xp.reshape(B * nD * nH * nW, Cin * patch ** 3)
    wmat = w.reshape(embed_dim, Cin * patch ** 3).T            # (K, embed_dim)
    out = matmul(xp, wmat, b)
    return out.reshape(B, nD, nH, nW, embed_dim)


def dilated_attention(x, p, heads, dilation):
    # Matches the PyTorch reference exactly: norm1 -> stride-slice -> zero-pad
    # back to the full D*H*W grid -> qkv over all (incl. padded) tokens ->
    # unmasked flash attention (reference runs it in half; we use bf16).
    B, D, H, W, C = x.shape
    seq = D * H * W
    hd = C // heads
    if dilation == 1:
        # dilation is a no-op -> fuse norm1 into the qkv matmul prologue.
        qkv = ln_matmul(x.reshape(B * seq, C), p["norm1_g"], p["norm1_b"],
                        p["qkv_w"], p["qkv_b"], eps=1e-5, out_dtype=jnp.bfloat16)
    else:
        xn = layernorm(x.reshape(-1, C), p["norm1_g"], p["norm1_b"], 1e-5
                       ).reshape(x.shape)
        xd = xn[:, ::dilation, ::dilation, ::dilation, :]
        pd, ph, pw = D - xd.shape[1], H - xd.shape[2], W - xd.shape[3]
        if pd or ph or pw:
            xd = jnp.pad(xd, ((0, 0), (0, pd), (0, ph), (0, pw), (0, 0)))
        qkv = matmul(xd.reshape(B * seq, C), p["qkv_w"], p["qkv_b"],
                     out_dtype=jnp.bfloat16)
    qkv = qkv.reshape(B, seq, 3, heads, hd)
    q = qkv[:, :, 0].transpose(0, 2, 1, 3).reshape(B * heads, seq, hd)
    k = qkv[:, :, 1].transpose(0, 2, 1, 3).reshape(B * heads, seq, hd)
    v = qkv[:, :, 2].transpose(0, 2, 1, 3).reshape(B * heads, seq, hd)
    o = attention(q, k, v)                                     # bf16
    o = o.reshape(B, heads, seq, hd).transpose(0, 2, 1, 3)     # (B,seq,heads,hd)
    return o.reshape(B, D, H, W, C)                            # bf16


def block_woatt(x, p):
    B, D, H, W, C = x.shape
    out = ln_mlp(x.reshape(-1, C), p, eps=1e-5)
    return out.reshape(x.shape), None


def block3d(x, p, heads, dilation):
    B, D, H, W, C = x.shape
    x1 = dilated_attention(x, p, heads, dilation)              # bf16 attn output
    # fused: (shortcut + attn) -> norm2 -> mlp -> +residual  (one kernel)
    out = ln_mlp(x.reshape(-1, C), p, eps=1e-5, residual=x1.reshape(-1, C))
    # reference returns x1 = attn.float()
    return out.reshape(x.shape), x1.astype(jnp.float32)


def neck(x, params, out_chans):
    B, D, H, W, C = x.shape
    # 1x1x1 conv (no bias)
    w1 = params["neck_w1"].reshape(out_chans, C).T
    h = matmul(x.reshape(-1, C), w1)
    # LayerNorm3d (over channels, eps=1e-6) — channel-last here => last-dim LN
    h = layernorm(h, params["neck_ln1_g"], params["neck_ln1_b"], 1e-6)
    h = h.reshape(B, D, H, W, out_chans)
    # 3x3x3 conv (no bias)
    h = conv3x3x3(h, params["neck_w2"])
    h = layernorm(h.reshape(-1, out_chans), params["neck_ln2_g"],
                  params["neck_ln2_b"], 1e-6)
    h = h.reshape(B, D, H, W, out_chans)
    return h.transpose(0, 4, 1, 2, 3)          # back to NCDHW like the PyTorch neck


def image_encoder_forward(x, params, cfg):
    listx = []
    h = patch_embed(x, params["patch_w"], params["patch_b"], cfg["patch"],
                    cfg["embed_dim"])
    h = h + params["pos_embed"]
    listx.append(h)
    i = 0
    for bp in params["blocks"]:
        i += 1
        if "qkv_w" in bp:
            h, x1 = block3d(h, bp, cfg["num_heads"], cfg["dilation"])
        else:
            h, x1 = block_woatt(h, bp)
        if i % cfg["layeroutput"] == 0:
            listx.append(x1)       # may be None for Block3D_woatt, as in PyTorch
    out = neck(h, params, cfg["out_chans"])
    listx.append(out)
    return listx


# ----------------------------------------------------------------------------
# Deterministic parameter init (synthetic — not a checkpoint load)
# ----------------------------------------------------------------------------
def init_params(key, cfg):
    def nrm(k, shape):
        return 0.02 * jax.random.normal(k, shape, jnp.float32)

    keys = iter(jax.random.split(key, 64))
    dim, patch, in_chans = cfg["embed_dim"], cfg["patch"], cfg["in_chans"]
    n = cfg["img"] // patch
    mlp_dim = int(dim * cfg["mlp_ratio"])
    oc = cfg["out_chans"]

    p = {
        "patch_w": nrm(next(keys), (dim, in_chans, patch, patch, patch)),
        "patch_b": jnp.zeros((dim,), jnp.float32),
        "pos_embed": nrm(next(keys), (1, n, n, n, dim)),
        "neck_w1": nrm(next(keys), (oc, dim, 1, 1, 1)),
        "neck_ln1_g": jnp.ones((oc,), jnp.float32),
        "neck_ln1_b": jnp.zeros((oc,), jnp.float32),
        "neck_w2": nrm(next(keys), (oc, oc, 3, 3, 3)),
        "neck_ln2_g": jnp.ones((oc,), jnp.float32),
        "neck_ln2_b": jnp.zeros((oc,), jnp.float32),
    }
    blocks = []
    for i in range(cfg["depth"]):
        b = {
            "norm2_g": jnp.ones((dim,), jnp.float32),
            "norm2_b": jnp.zeros((dim,), jnp.float32),
            "mlp_w1": nrm(next(keys), (dim, mlp_dim)),
            "mlp_b1": jnp.zeros((mlp_dim,), jnp.float32),
            "mlp_w2": nrm(next(keys), (mlp_dim, dim)),
            "mlp_b2": jnp.zeros((dim,), jnp.float32),
        }
        if i >= 2:   # first two blocks are Block3D_woatt, rest Block3D (attention)
            b["norm1_g"] = jnp.ones((dim,), jnp.float32)
            b["norm1_b"] = jnp.zeros((dim,), jnp.float32)
            b["qkv_w"] = nrm(next(keys), (dim, 3 * dim))
            b["qkv_b"] = jnp.zeros((3 * dim,), jnp.float32)
        blocks.append(b)
    p["blocks"] = blocks
    return p


# ----------------------------------------------------------------------------
if __name__ == "__main__":
    cfg = dict(
        img=16, patch=8, in_chans=1, embed_dim=32, depth=4, num_heads=4,
        mlp_ratio=4.0, out_chans=16, layeroutput=2, dilation=1,
    )
    key = jax.random.PRNGKey(0)
    k_params, k_x = jax.random.split(key)
    params = init_params(k_params, cfg)
    # PyTorch NCDHW input: (B, in_chans, D, H, W)
    x = jax.random.normal(
        k_x, (2, cfg["in_chans"], cfg["img"], cfg["img"], cfg["img"]), jnp.float32)

    fwd = jax.jit(functools.partial(image_encoder_forward, cfg=cfg))
    t0 = time.time()
    listx = fwd(x, params)
    for arr in listx:
        if arr is not None:
            jax.block_until_ready(arr)
    _elapsed = time.time() - t0   # timing kept outside jit (reference returns it)
    print("KERNEL_OK")
</pallas_src>

<mosaic_0001>
module attributes {stable_mosaic.version = 11 : i64} {
  func.func @_matmul_bias_kernel(%arg0: i32, %arg1: i32, %arg2: i32, %arg3: memref<16x512xbf16, #tpu.memory_space<vmem>>, %arg4: memref<512x32xbf16, #tpu.memory_space<vmem>>, %arg5: memref<1x32xf32, #tpu.memory_space<vmem>>, %arg6: memref<16x32xf32, #tpu.memory_space<vmem>>, %arg7: memref<16x32xf32, #tpu.memory_space<vmem>>) attributes {dimension_semantics = [#tpu.dimension_semantics<parallel>, #tpu.dimension_semantics<parallel>, #tpu.dimension_semantics<arbitrary>], iteration_bounds = array<i64: 1, 1, 1>, scalar_prefetch = 0 : i64, scratch_operands = 1 : i64, tpu.core_type = #tpu.core_type<tc>, window_params = [{transform_indices = @transform_0, window_bounds = array<i64: 16, 512>}, {transform_indices = @transform_1, window_bounds = array<i64: 512, 32>}, {transform_indices = @transform_2, window_bounds = array<i64: 1, 32>}, {transform_indices = @transform_3, window_bounds = array<i64: 16, 32>}]} {
    %c0_i32 = arith.constant 0 : i32
    %0 = arith.cmpi eq, %arg2, %c0_i32 : i32
    %1 = arith.extui %0 : i1 to i32
    %c0_i32_0 = arith.constant 0 : i32
    %2 = arith.cmpi ne, %1, %c0_i32_0 : i32
    scf.if %2 {
      %cst_10 = arith.constant 0.000000e+00 : f32
      %12 = vector.broadcast %cst_10 : f32 to vector<16x32xf32>
      %c0_11 = arith.constant 0 : index
      %c0_12 = arith.constant 0 : index
      %13 = vector.load %arg7[%c0_11, %c0_12] : memref<16x32xf32, #tpu.memory_space<vmem>>, vector<16x32xf32>
      tpu.vector_store %arg7[%c0_11, %c0_12], %12 {strides = array<i32>} : memref<16x32xf32, #tpu.memory_space<vmem>>, vector<16x32xf32>,
    } else {
    }
    %c0 = arith.constant 0 : index
    %c0_1 = arith.constant 0 : index
    %3 = vector.load %arg7[%c0, %c0_1] : memref<16x32xf32, #tpu.memory_space<vmem>>, vector<16x32xf32>
    %c0_2 = arith.constant 0 : index
    %c0_3 = arith.constant 0 : index
    %4 = vector.load %arg3[%c0_2, %c0_3] : memref<16x512xbf16, #tpu.memory_space<vmem>>, vector<16x512xbf16>
    %c0_4 = arith.constant 0 : index
    %c0_5 = arith.constant 0 : index
    %5 = vector.load %arg4[%c0_4, %c0_5] : memref<512x32xbf16, #tpu.memory_space<vmem>>, vector<512x32xbf16>
    %cst = arith.constant dense<0.000000e+00> : vector<16x32xf32>
    %6 = tpu.matmul %4, %5, %cst {dimension_numbers = #tpu.dot_dimension_numbers<[1], [0], [0], [1], [0, 0, 1, 1], [], []>} : vector<16x512xbf16>, vector<512x32xbf16>, vector<16x32xf32> -> vector<16x32xf32>
    %7 = arith.addf %3, %6 : vector<16x32xf32>
    %c0_6 = arith.constant 0 : index
    %c0_7 = arith.constant 0 : index
    %8 = vector.load %arg7[%c0_6, %c0_7] : memref<16x32xf32, #tpu.memory_space<vmem>>, vector<16x32xf32>
    tpu.vector_store %arg7[%c0_6, %c0_7], %7 {strides = array<i32>} : memref<16x32xf32, #tpu.memory_space<vmem>>, vector<16x32xf32>,
    %c0_i32_8 = arith.constant 0 : i32
    %9 = arith.cmpi eq, %arg2, %c0_i32_8 : i32
    %10 = arith.extui %9 : i1 to i32
    %c0_i32_9 = arith.constant 0 : i32
    %11 = arith.cmpi ne, %10, %c0_i32_9 : i32
    scf.if %11 {
      %c0_10 = arith.constant 0 : index
      %c0_11 = arith.constant 0 : index
      %12 = vector.load %arg7[%c0_10, %c0_11] : memref<16x32xf32, #tpu.memory_space<vmem>>, vector<16x32xf32>
      %c0_12 = arith.constant 0 : index
      %c0_13 = arith.constant 0 : index
      %13 = vector.load %arg5[%c0_12, %c0_13] : memref<1x32xf32, #tpu.memory_space<vmem>>, vector<1x32xf32>
      %14 = vector.broadcast %13 : vector<1x32xf32> to vector<16x32xf32>
      %15 = arith.addf %12, %14 : vector<16x32xf32>
      %c0_14 = arith.constant 0 : index
      %c0_15 = arith.constant 0 : index
      %16 = vector.load %arg6[%c0_14, %c0_15] : memref<16x32xf32, #tpu.memory_space<vmem>>, vector<16x32xf32>
      tpu.vector_store %arg6[%c0_14, %c0_15], %15 {strides = array<i32>} : memref<16x32xf32, #tpu.memory_space<vmem>>, vector<16x32xf32>,
    } else {
    }
    return
  }
  func.func @transform_0(%arg0: i32, %arg1: i32, %arg2: i32) -> (i32, i32) {
    %c0_i32 = arith.constant 0 : i32
    return %arg0, %arg2 : i32, i32
  }
  func.func @transform_1(%arg0: i32, %arg1: i32, %arg2: i32) -> (i32, i32) {
    %c0_i32 = arith.constant 0 : i32
    return %arg2, %arg1 : i32, i32
  }
  func.func @transform_2(%arg0: i32, %arg1: i32, %arg2: i32) -> (i32, i32) {
    %c0_i32 = arith.constant 0 : i32
    %c0_i32_0 = arith.constant 0 : i32
    return %c0_i32, %arg1 : i32, i32
  }
  func.func @transform_3(%arg0: i32, %arg1: i32, %arg2: i32) -> (i32, i32) {
    %c0_i32 = arith.constant 0 : i32
    return %arg0, %arg1 : i32, i32
  }
}

module attributes {stable_mosaic.version = 11 : i64} {
  func.func @_ln_mlp_kernel(%arg0: i32, %arg1: memref<16x32xf32, #tpu.memory_space<vmem>>, %arg2: memref<1x32xf32, #tpu.memory_space<vmem>>, %arg3: memref<1x32xf32, #tpu.memory_space<vmem>>, %arg4: memref<32x128xbf16, #tpu.memory_space<vmem>>, %arg5: memref<1x128xf32, #tpu.memory_space<vmem>>, %arg6: memref<128x32xbf16, #tpu.memory_space<vmem>>, %arg7: memref<1x32xf32, #tpu.memory_space<vmem>>, %arg8: memref<16x32xf32, #tpu.memory_space<vmem>>) attributes {dimension_semantics = [#tpu.dimension_semantics<parallel>], iteration_bounds = array<i64: 1>, scalar_prefetch = 0 : i64, scratch_operands = 0 : i64, tpu.core_type = #tpu.core_type<tc>, window_params = [{transform_indices = @transform_0, window_bounds = array<i64: 16, 32>}, {pipeline_mode = #tpu.pipeline_mode<synchronous>, transform_indices = @transform_1, window_bounds = array<i64: 1, 32>}, {pipeline_mode = #tpu.pipeline_mode<synchronous>, transform_indices = @transform_2, window_bounds = array<i64: 1, 32>}, {pipeline_mode = #tpu.pipeline_mode<synchronous>, transform_indices = @transform_3, window_bounds = array<i64: 32, 128>}, {pipeline_mode = #tpu.pipeline_mode<synchronous>, transform_indices = @transform_4, window_bounds = array<i64: 1, 128>}, {pipeline_mode = #tpu.pipeline_mode<synchronous>, transform_indices = @transform_5, window_bounds = array<i64: 128, 32>}, {pipeline_mode = #tpu.pipeline_mode<synchronous>, transform_indices = @transform_6, window_bounds = array<i64: 1, 32>}, {transform_indices = @transform_7, window_bounds = array<i64: 16, 32>}]} {
    %c0 = arith.constant 0 : index
    %c0_0 = arith.constant 0 : index
    %0 = vector.load %arg1[%c0, %c0_0] : memref<16x32xf32, #tpu.memory_space<vmem>>, vector<16x32xf32>
    %c0_1 = arith.constant 0 : index
    %c0_2 = arith.constant 0 : index
    %1 = vector.load %arg2[%c0_1, %c0_2] : memref<1x32xf32, #tpu.memory_space<vmem>>, vector<1x32xf32>
    %c0_3 = arith.constant 0 : index
    %c0_4 = arith.constant 0 : index
    %2 = vector.load %arg3[%c0_3, %c0_4] : memref<1x32xf32, #tpu.memory_space<vmem>>, vector<1x32xf32>
    %c0_5 = arith.constant 0 : index
    %c0_6 = arith.constant 0 : index
    %3 = vector.load %arg4[%c0_5, %c0_6] : memref<32x128xbf16, #tpu.memory_space<vmem>>, vector<32x128xbf16>
    %c0_7 = arith.constant 0 : index
    %c0_8 = arith.constant 0 : index
    %4 = vector.load %arg5[%c0_7, %c0_8] : memref<1x128xf32, #tpu.memory_space<vmem>>, vector<1x128xf32>
    %c0_9 = arith.constant 0 : index
    %c0_10 = arith.constant 0 : index
    %5 = vector.load %arg6[%c0_9, %c0_10] : memref<128x32xbf16, #tpu.memory_space<vmem>>, vector<128x32xbf16>
    %c0_11 = arith.constant 0 : index
    %c0_12 = arith.constant 0 : index
    %6 = vector.load %arg7[%c0_11, %c0_12] : memref<1x32xf32, #tpu.memory_space<vmem>>, vector<1x32xf32>
    %cst = arith.constant dense<0.000000e+00> : vector<16xf32>
    %7 = vector.multi_reduction <add>, %0, %cst [1] : vector<16x32xf32> to vector<16xf32>
    %8 = vector.shape_cast %7 : vector<16xf32> to vector<16x1xf32>
    %cst_13 = arith.constant 3.200000e+01 : f32
    %9 = vector.broadcast %cst_13 : f32 to vector<16x1xf32>
    %10 = arith.divf %8, %9 : vector<16x1xf32>
    %11 = vector.broadcast %10 : vector<16x1xf32> to vector<16x32xf32>
    %12 = arith.subf %0, %11 : vector<16x32xf32>
    %13 = arith.mulf %12, %12 : vector<16x32xf32>
    %cst_14 = arith.constant dense<0.000000e+00> : vector<16xf32>
    %14 = vector.multi_reduction <add>, %13, %cst_14 [1] : vector<16x32xf32> to vector<16xf32>
    %15 = vector.shape_cast %14 : vector<16xf32> to vector<16x1xf32>
    %cst_15 = arith.constant 3.200000e+01 : f32
    %16 = vector.broadcast %cst_15 : f32 to vector<16x1xf32>
    %17 = arith.divf %15, %16 : vector<16x1xf32>
    %cst_16 = arith.constant 9.99999974E-6 : f32
    %18 = vector.broadcast %cst_16 : f32 to vector<16x1xf32>
    %19 = arith.addf %17, %18 : vector<16x1xf32>
    %20 = math.rsqrt %19 : vector<16x1xf32>
    %21 = vector.broadcast %20 : vector<16x1xf32> to vector<16x32xf32>
    %22 = arith.mulf %12, %21 : vector<16x32xf32>
    %23 = vector.broadcast %1 : vector<1x32xf32> to vector<16x32xf32>
    %24 = arith.mulf %22, %23 : vector<16x32xf32>
    %25 = vector.broadcast %2 : vector<1x32xf32> to vector<16x32xf32>
    %26 = arith.addf %24, %25 : vector<16x32xf32>
    %27 = arith.truncf %26 : vector<16x32xf32> to vector<16x32xbf16>
    %cst_17 = arith.constant dense<0.000000e+00> : vector<16x128xf32>
    %28 = tpu.matmul %27, %3, %cst_17 {dimension_numbers = #tpu.dot_dimension_numbers<[1], [0], [0], [1], [0, 0, 1, 1], [], []>} : vector<16x32xbf16>, vector<32x128xbf16>, vector<16x128xf32> -> vector<16x128xf32>
    %29 = vector.broadcast %4 : vector<1x128xf32> to vector<16x128xf32>
    %30 = arith.addf %28, %29 : vector<16x128xf32>
    %cst_18 = arith.constant 5.000000e-01 : f32
    %31 = vector.broadcast %cst_18 : f32 to vector<16x128xf32>
    %32 = arith.mulf %31, %30 : vector<16x128xf32>
    %cst_19 = arith.constant 0.707106769 : f32
    %33 = vector.broadcast %cst_19 : f32 to vector<16x128xf32>
    %34 = arith.mulf %30, %33 : vector<16x128xf32>
    %cst_20 = arith.constant 0.000000e+00 : f32
    %35 = vector.broadcast %cst_20 : f32 to vector<16x128xf32>
    %36 = arith.cmpf oge, %34, %35 : vector<16x128xf32>
    %cst_21 = arith.constant 1.000000e+00 : f32
    %cst_22 = arith.constant -1.000000e+00 : f32
    %37 = vector.broadcast %cst_21 : f32 to vector<16x128xf32>
    %38 = vector.broadcast %cst_22 : f32 to vector<16x128xf32>
    %39 = arith.select %36, %37, %38 : vector<16x128xi1>, vector<16x128xf32>
    %40 = math.absf %34 : vector<16x128xf32>
    %cst_23 = arith.constant 0.327591091 : f32
    %41 = vector.broadcast %cst_23 : f32 to vector<16x128xf32>
    %42 = arith.mulf %41, %40 : vector<16x128xf32>
    %cst_24 = arith.constant 1.000000e+00 : f32
    %43 = vector.broadcast %cst_24 : f32 to vector<16x128xf32>
    %44 = arith.addf %43, %42 : vector<16x128xf32>
    %cst_25 = arith.constant 1.000000e+00 : f32
    %45 = vector.broadcast %cst_25 : f32 to vector<16x128xf32>
    %46 = arith.divf %45, %44 : vector<16x128xf32>
    %cst_26 = arith.constant 1.06140542 : f32
    %47 = vector.broadcast %cst_26 : f32 to vector<16x128xf32>
    %48 = arith.mulf %47, %46 : vector<16x128xf32>
    %cst_27 = arith.constant -1.45315206 : f32
    %49 = vector.broadcast %cst_27 : f32 to vector<16x128xf32>
    %50 = arith.addf %48, %49 : vector<16x128xf32>
    %51 = arith.mulf %50, %46 : vector<16x128xf32>
    %cst_28 = arith.constant 1.42141378 : f32
    %52 = vector.broadcast %cst_28 : f32 to vector<16x128xf32>
    %53 = arith.addf %51, %52 : vector<16x128xf32>
    %54 = arith.mulf %53, %46 : vector<16x128xf32>
    %cst_29 = arith.constant -0.284496725 : f32
    %55 = vector.broadcast %cst_29 : f32 to vector<16x128xf32>
    %56 = arith.addf %54, %55 : vector<16x128xf32>
    %57 = arith.mulf %56, %46 : vector<16x128xf32>
    %cst_30 = arith.constant 0.254829586 : f32
    %58 = vector.broadcast %cst_30 : f32 to vector<16x128xf32>
    %59 = arith.addf %57, %58 : vector<16x128xf32>
    %60 = arith.mulf %59, %46 : vector<16x128xf32>
    %cst_31 = arith.constant 0.000000e+00 : f32
    %61 = vector.broadcast %cst_31 : f32 to vector<16x128xf32>
    %62 = arith.subf %61, %40 : vector<16x128xf32>
    %63 = arith.mulf %62, %40 : vector<16x128xf32>
    %64 = math.exp %63 : vector<16x128xf32>
    %65 = arith.mulf %60, %64 : vector<16x128xf32>
    %cst_32 = arith.constant 1.000000e+00 : f32
    %66 = vector.broadcast %cst_32 : f32 to vector<16x128xf32>
    %67 = arith.subf %66, %65 : vector<16x128xf32>
    %68 = arith.mulf %39, %67 : vector<16x128xf32>
    %cst_33 = arith.constant 1.000000e+00 : f32
    %69 = vector.broadcast %cst_33 : f32 to vector<16x128xf32>
    %70 = arith.addf %69, %68 : vector<16x128xf32>
    %71 = arith.mulf %32, %70 : vector<16x128xf32>
    %72 = arith.truncf %71 : vector<16x128xf32> to vector<16x128xbf16>
    %cst_34 = arith.constant dense<0.000000e+00> : vector<16x32xf32>
    %73 = tpu.matmul %72, %5, %cst_34 {dimension_numbers = #tpu.dot_dimension_numbers<[1], [0], [0], [1], [0, 0, 1, 1], [], []>} : vector<16x128xbf16>, vector<128x32xbf16>, vector<16x32xf32> -> vector<16x32xf32>
    %74 = arith.addf %26, %73 : vector<16x32xf32>
    %75 = vector.broadcast %6 : vector<1x32xf32> to vector<16x32xf32>
    %76 = arith.addf %74, %75 : vector<16x32xf32>
    %c0_35 = arith.constant 0 : index
    %c0_36 = arith.constant 0 : index
    %77 = vector.load %arg8[%c0_35, %c0_36] : memref<16x32xf32, #tpu.memory_space<vmem>>, vector<16x32xf32>
    tpu.vector_store %arg8[%c0_35, %c0_36], %76 {strides = array<i32>} : memref<16x32xf32, #tpu.memory_space<vmem>>, vector<16x32xf32>,
    return
  }
  func.func @transform_0(%arg0: i32) -> (i32, i32) {
    %c0_i32 = arith.constant 0 : i32
    %c0_i32_0 = arith.constant 0 : i32
    return %arg0, %c0_i32 : i32, i32
  }
  func.func @transform_1(%arg0: i32) -> (i32, i32) {
    %c0_i32 = arith.constant 0 : i32
    %c0_i32_0 = arith.constant 0 : i32
    %c0_i32_1 = arith.constant 0 : i32
    return %c0_i32, %c0_i32_0 : i32, i32
  }
  func.func @transform_2(%arg0: i32) -> (i32, i32) {
    %c0_i32 = arith.constant 0 : i32
    %c0_i32_0 = arith.constant 0 : i32
    %c0_i32_1 = arith.constant 0 : i32
    return %c0_i32, %c0_i32_0 : i32, i32
  }
  func.func @transform_3(%arg0: i32) -> (i32, i32) {
    %c0_i32 = arith.constant 0 : i32
    %c0_i32_0 = arith.constant 0 : i32
    %c0_i32_1 = arith.constant 0 : i32
    return %c0_i32, %c0_i32_0 : i32, i32
  }
  func.func @transform_4(%arg0: i32) -> (i32, i32) {
    %c0_i32 = arith.constant 0 : i32
    %c0_i32_0 = arith.constant 0 : i32
    %c0_i32_1 = arith.constant 0 : i32
    return %c0_i32, %c0_i32_0 : i32, i32
  }
  func.func @transform_5(%arg0: i32) -> (i32, i32) {
    %c0_i32 = arith.constant 0 : i32
    %c0_i32_0 = arith.constant 0 : i32
    %c0_i32_1 = arith.constant 0 : i32
    return %c0_i32, %c0_i32_0 : i32, i32
  }
  func.func @transform_6(%arg0: i32) -> (i32, i32) {
    %c0_i32 = arith.constant 0 : i32
    %c0_i32_0 = arith.constant 0 : i32
    %c0_i32_1 = arith.constant 0 : i32
    return %c0_i32, %c0_i32_0 : i32, i32
  }
  func.func @transform_7(%arg0: i32) -> (i32, i32) {
    %c0_i32 = arith.constant 0 : i32
    %c0_i32_0 = arith.constant 0 : i32
    return %arg0, %c0_i32 : i32, i32
  }
}

module attributes {stable_mosaic.version = 11 : i64} {
  func.func @_ln_matmul_kernel(%arg0: i32, %arg1: i32, %arg2: memref<16x32xf32, #tpu.memory_space<vmem>>, %arg3: memref<1x32xf32, #tpu.memory_space<vmem>>, %arg4: memref<1x32xf32, #tpu.memory_space<vmem>>, %arg5: memref<32x96xbf16, #tpu.memory_space<vmem>>, %arg6: memref<1x96xf32, #tpu.memory_space<vmem>>, %arg7: memref<16x96xbf16, #tpu.memory_space<vmem>>) attributes {dimension_semantics = [#tpu.dimension_semantics<parallel>, #tpu.dimension_semantics<parallel>], iteration_bounds = array<i64: 1, 1>, scalar_prefetch = 0 : i64, scratch_operands = 0 : i64, tpu.core_type = #tpu.core_type<tc>, window_params = [{transform_indices = @transform_0, window_bounds = array<i64: 16, 32>}, {pipeline_mode = #tpu.pipeline_mode<synchronous>, transform_indices = @transform_1, window_bounds = array<i64: 1, 32>}, {pipeline_mode = #tpu.pipeline_mode<synchronous>, transform_indices = @transform_2, window_bounds = array<i64: 1, 32>}, {transform_indices = @transform_3, window_bounds = array<i64: 32, 96>}, {transform_indices = @transform_4, window_bounds = array<i64: 1, 96>}, {transform_indices = @transform_5, window_bounds = array<i64: 16, 96>}]} {
    %c0 = arith.constant 0 : index
    %c0_0 = arith.constant 0 : index
    %0 = vector.load %arg2[%c0, %c0_0] : memref<16x32xf32, #tpu.memory_space<vmem>>, vector<16x32xf32>
    %cst = arith.constant dense<0.000000e+00> : vector<16xf32>
    %1 = vector.multi_reduction <add>, %0, %cst [1] : vector<16x32xf32> to vector<16xf32>
    %2 = vector.shape_cast %1 : vector<16xf32> to vector<16x1xf32>
    %cst_1 = arith.constant 3.200000e+01 : f32
    %3 = vector.broadcast %cst_1 : f32 to vector<16x1xf32>
    %4 = arith.divf %2, %3 : vector<16x1xf32>
    %5 = vector.broadcast %4 : vector<16x1xf32> to vector<16x32xf32>
    %6 = arith.subf %0, %5 : vector<16x32xf32>
    %7 = arith.mulf %6, %6 : vector<16x32xf32>
    %cst_2 = arith.constant dense<0.000000e+00> : vector<16xf32>
    %8 = vector.multi_reduction <add>, %7, %cst_2 [1] : vector<16x32xf32> to vector<16xf32>
    %9 = vector.shape_cast %8 : vector<16xf32> to vector<16x1xf32>
    %cst_3 = arith.constant 3.200000e+01 : f32
    %10 = vector.broadcast %cst_3 : f32 to vector<16x1xf32>
    %11 = arith.divf %9, %10 : vector<16x1xf32>
    %cst_4 = arith.constant 9.99999974E-6 : f32
    %12 = vector.broadcast %cst_4 : f32 to vector<16x1xf32>
    %13 = arith.addf %11, %12 : vector<16x1xf32>
    %14 = math.rsqrt %13 : vector<16x1xf32>
    %15 = vector.broadcast %14 : vector<16x1xf32> to vector<16x32xf32>
    %16 = arith.mulf %6, %15 : vector<16x32xf32>
    %c0_5 = arith.constant 0 : index
    %c0_6 = arith.constant 0 : index
    %17 = vector.load %arg3[%c0_5, %c0_6] : memref<1x32xf32, #tpu.memory_space<vmem>>, vector<1x32xf32>
    %18 = vector.broadcast %17 : vector<1x32xf32> to vector<16x32xf32>
    %19 = arith.mulf %16, %18 : vector<16x32xf32>
    %c0_7 = arith.constant 0 : index
    %c0_8 = arith.constant 0 : index
    %20 = vector.load %arg4[%c0_7, %c0_8] : memref<1x32xf32, #tpu.memory_space<vmem>>, vector<1x32xf32>
    %21 = vector.broadcast %20 : vector<1x32xf32> to vector<16x32xf32>
    %22 = arith.addf %19, %21 : vector<16x32xf32>
    %23 = arith.truncf %22 : vector<16x32xf32> to vector<16x32xbf16>
    %c0_9 = arith.constant 0 : index
    %c0_10 = arith.constant 0 : index
    %24 = vector.load %arg5[%c0_9, %c0_10] : memref<32x96xbf16, #tpu.memory_space<vmem>>, vector<32x96xbf16>
    %cst_11 = arith.constant dense<0.000000e+00> : vector<16x96xf32>
    %25 = tpu.matmul %23, %24, %cst_11 {dimension_numbers = #tpu.dot_dimension_numbers<[1], [0], [0], [1], [0, 0, 1, 1], [], []>} : vector<16x32xbf16>, vector<32x96xbf16>, vector<16x96xf32> -> vector<16x96xf32>
    %c0_12 = arith.constant 0 : index
    %c0_13 = arith.constant 0 : index
    %26 = vector.load %arg6[%c0_12, %c0_13] : memref<1x96xf32, #tpu.memory_space<vmem>>, vector<1x96xf32>
    %27 = vector.broadcast %26 : vector<1x96xf32> to vector<16x96xf32>
    %28 = arith.addf %25, %27 : vector<16x96xf32>
    %29 = arith.truncf %28 : vector<16x96xf32> to vector<16x96xbf16>
    %c0_14 = arith.constant 0 : index
    %c0_15 = arith.constant 0 : index
    %30 = vector.load %arg7[%c0_14, %c0_15] : memref<16x96xbf16, #tpu.memory_space<vmem>>, vector<16x96xbf16>
    tpu.vector_store %arg7[%c0_14, %c0_15], %29 {strides = array<i32>} : memref<16x96xbf16, #tpu.memory_space<vmem>>, vector<16x96xbf16>,
    return
  }
  func.func @transform_0(%arg0: i32, %arg1: i32) -> (i32, i32) {
    %c0_i32 = arith.constant 0 : i32
    %c0_i32_0 = arith.constant 0 : i32
    return %arg0, %c0_i32 : i32, i32
  }
  func.func @transform_1(%arg0: i32, %arg1: i32) -> (i32, i32) {
    %c0_i32 = arith.constant 0 : i32
    %c0_i32_0 = arith.constant 0 : i32
    %c0_i32_1 = arith.constant 0 : i32
    return %c0_i32, %c0_i32_0 : i32, i32
  }
  func.func @transform_2(%arg0: i32, %arg1: i32) -> (i32, i32) {
    %c0_i32 = arith.constant 0 : i32
    %c0_i32_0 = arith.constant 0 : i32
    %c0_i32_1 = arith.constant 0 : i32
    return %c0_i32, %c0_i32_0 : i32, i32
  }
  func.func @transform_3(%arg0: i32, %arg1: i32) -> (i32, i32) {
    %c0_i32 = arith.constant 0 : i32
    %c0_i32_0 = arith.constant 0 : i32
    return %c0_i32, %arg1 : i32, i32
  }
  func.func @transform_4(%arg0: i32, %arg1: i32) -> (i32, i32) {
    %c0_i32 = arith.constant 0 : i32
    %c0_i32_0 = arith.constant 0 : i32
    return %c0_i32, %arg1 : i32, i32
  }
  func.func @transform_5(%arg0: i32, %arg1: i32) -> (i32, i32) {
    %c0_i32 = arith.constant 0 : i32
    return %arg0, %arg1 : i32, i32
  }
}

module attributes {stable_mosaic.version = 11 : i64} {
  func.func @_flash_kernel(%arg0: i32, %arg1: i32, %arg2: i32, %arg3: memref<1x8x8xbf16, #tpu.memory_space<vmem>>, %arg4: memref<1x8x8xbf16, #tpu.memory_space<vmem>>, %arg5: memref<1x8x8xbf16, #tpu.memory_space<vmem>>, %arg6: memref<1x8x8xbf16, #tpu.memory_space<vmem>>, %arg7: memref<8x1xf32, #tpu.memory_space<vmem>>, %arg8: memref<8x1xf32, #tpu.memory_space<vmem>>, %arg9: memref<8x8xf32, #tpu.memory_space<vmem>>) attributes {dimension_semantics = [#tpu.dimension_semantics<parallel>, #tpu.dimension_semantics<parallel>, #tpu.dimension_semantics<arbitrary>], iteration_bounds = array<i64: 8, 1, 1>, scalar_prefetch = 0 : i64, scratch_operands = 3 : i64, tpu.core_type = #tpu.core_type<tc>, window_params = [{transform_indices = @transform_0, window_bounds = array<i64: 1, 8, 8>}, {transform_indices = @transform_1, window_bounds = array<i64: 1, 8, 8>}, {transform_indices = @transform_2, window_bounds = array<i64: 1, 8, 8>}, {transform_indices = @transform_3, window_bounds = array<i64: 1, 8, 8>}]} {
    %c0_i32 = arith.constant 0 : i32
    %0 = arith.cmpi eq, %arg2, %c0_i32 : i32
    %1 = arith.extui %0 : i1 to i32
    %c0_i32_0 = arith.constant 0 : i32
    %2 = arith.cmpi ne, %1, %c0_i32_0 : i32
    scf.if %2 {
      %cst_27 = arith.constant 0xFF800000 : f32
      %38 = vector.broadcast %cst_27 : f32 to vector<8x1xf32>
      %c0_28 = arith.constant 0 : index
      %c0_29 = arith.constant 0 : index
      %39 = vector.load %arg7[%c0_28, %c0_29] : memref<8x1xf32, #tpu.memory_space<vmem>>, vector<8x1xf32>
      tpu.vector_store %arg7[%c0_28, %c0_29], %38 {strides = array<i32>} : memref<8x1xf32, #tpu.memory_space<vmem>>, vector<8x1xf32>,
      %cst_30 = arith.constant 0.000000e+00 : f32
      %40 = vector.broadcast %cst_30 : f32 to vector<8x1xf32>
      %c0_31 = arith.constant 0 : index
      %c0_32 = arith.constant 0 : index
      %41 = vector.load %arg8[%c0_31, %c0_32] : memref<8x1xf32, #tpu.memory_space<vmem>>, vector<8x1xf32>
      tpu.vector_store %arg8[%c0_31, %c0_32], %40 {strides = array<i32>} : memref<8x1xf32, #tpu.memory_space<vmem>>, vector<8x1xf32>,
      %cst_33 = arith.constant 0.000000e+00 : f32
      %42 = vector.broadcast %cst_33 : f32 to vector<8x8xf32>
      %c0_34 = arith.constant 0 : index
      %c0_35 = arith.constant 0 : index
      %43 = vector.load %arg9[%c0_34, %c0_35] : memref<8x8xf32, #tpu.memory_space<vmem>>, vector<8x8xf32>
      tpu.vector_store %arg9[%c0_34, %c0_35], %42 {strides = array<i32>} : memref<8x8xf32, #tpu.memory_space<vmem>>, vector<8x8xf32>,
    } else {
    }
    %c0 = arith.constant 0 : index
    %c0_1 = arith.constant 0 : index
    %c0_2 = arith.constant 0 : index
    %3 = vector.load %arg3[%c0, %c0_1, %c0_2] : memref<1x8x8xbf16, #tpu.memory_space<vmem>>, vector<1x8x8xbf16>
    %4 = vector.shape_cast %3 : vector<1x8x8xbf16> to vector<8x8xbf16>
    %c0_3 = arith.constant 0 : index
    %c0_4 = arith.constant 0 : index
    %c0_5 = arith.constant 0 : index
    %5 = vector.load %arg4[%c0_3, %c0_4, %c0_5] : memref<1x8x8xbf16, #tpu.memory_space<vmem>>, vector<1x8x8xbf16>
    %6 = vector.shape_cast %5 : vector<1x8x8xbf16> to vector<8x8xbf16>
    %c0_6 = arith.constant 0 : index
    %c0_7 = arith.constant 0 : index
    %c0_8 = arith.constant 0 : index
    %7 = vector.load %arg5[%c0_6, %c0_7, %c0_8] : memref<1x8x8xbf16, #tpu.memory_space<vmem>>, vector<1x8x8xbf16>
    %8 = vector.shape_cast %7 : vector<1x8x8xbf16> to vector<8x8xbf16>
    %cst = arith.constant dense<0.000000e+00> : vector<8x8xf32>
    %9 = tpu.matmul %4, %6, %cst {dimension_numbers = #tpu.dot_dimension_numbers<[1], [1], [0], [0], [0, 0, 1, 0], [], []>} : vector<8x8xbf16>, vector<8x8xbf16>, vector<8x8xf32> -> vector<8x8xf32>
    %cst_9 = arith.constant 0.353553385 : f32
    %10 = vector.broadcast %cst_9 : f32 to vector<8x8xf32>
    %11 = arith.mulf %9, %10 : vector<8x8xf32>
    %c0_10 = arith.constant 0 : index
    %c0_11 = arith.constant 0 : index
    %12 = vector.load %arg7[%c0_10, %c0_11] : memref<8x1xf32, #tpu.memory_space<vmem>>, vector<8x1xf32>
    %cst_12 = arith.constant dense<0xFF800000> : vector<8xf32>
    %13 = vector.multi_reduction <maximumf>, %11, %cst_12 [1] : vector<8x8xf32> to vector<8xf32>
    %14 = vector.shape_cast %13 : vector<8xf32> to vector<8x1xf32>
    %15 = arith.maximumf %12, %14 : vector<8x1xf32>
    %16 = arith.subf %12, %15 : vector<8x1xf32>
    %17 = math.exp %16 : vector<8x1xf32>
    %18 = vector.broadcast %15 : vector<8x1xf32> to vector<8x8xf32>
    %19 = arith.subf %11, %18 : vector<8x8xf32>
    %20 = math.exp %19 : vector<8x8xf32>
    %c0_13 = arith.constant 0 : index
    %c0_14 = arith.constant 0 : index
    %21 = vector.load %arg8[%c0_13, %c0_14] : memref<8x1xf32, #tpu.memory_space<vmem>>, vector<8x1xf32>
    %22 = arith.mulf %17, %21 : vector<8x1xf32>
    %cst_15 = arith.constant dense<0.000000e+00> : vector<8xf32>
    %23 = vector.multi_reduction <add>, %20, %cst_15 [1] : vector<8x8xf32> to vector<8xf32>
    %24 = vector.shape_cast %23 : vector<8xf32> to vector<8x1xf32>
    %25 = arith.addf %22, %24 : vector<8x1xf32>
    %c0_16 = arith.constant 0 : index
    %c0_17 = arith.constant 0 : index
    %26 = vector.load %arg8[%c0_16, %c0_17] : memref<8x1xf32, #tpu.memory_space<vmem>>, vector<8x1xf32>
    tpu.vector_store %arg8[%c0_16, %c0_17], %25 {strides = array<i32>} : memref<8x1xf32, #tpu.memory_space<vmem>>, vector<8x1xf32>,
    %c0_18 = arith.constant 0 : index
    %c0_19 = arith.constant 0 : index
    %27 = vector.load %arg9[%c0_18, %c0_19] : memref<8x8xf32, #tpu.memory_space<vmem>>, vector<8x8xf32>
    %28 = vector.broadcast %17 : vector<8x1xf32> to vector<8x8xf32>
    %29 = arith.mulf %28, %27 : vector<8x8xf32>
    %30 = arith.truncf %20 : vector<8x8xf32> to vector<8x8xbf16>
    %cst_20 = arith.constant dense<0.000000e+00> : vector<8x8xf32>
    %31 = tpu.matmul %30, %8, %cst_20 {dimension_numbers = #tpu.dot_dimension_numbers<[1], [0], [0], [1], [0, 0, 1, 1], [], []>} : vector<8x8xbf16>, vector<8x8xbf16>, vector<8x8xf32> -> vector<8x8xf32>
    %32 = arith.addf %29, %31 : vector<8x8xf32>
    %c0_21 = arith.constant 0 : index
    %c0_22 = arith.constant 0 : index
    %33 = vector.load %arg9[%c0_21, %c0_22] : memref<8x8xf32, #tpu.memory_space<vmem>>, vector<8x8xf32>
    tpu.vector_store %arg9[%c0_21, %c0_22], %32 {strides = array<i32>} : memref<8x8xf32, #tpu.memory_space<vmem>>, vector<8x8xf32>,
    %c0_23 = arith.constant 0 : index
    %c0_24 = arith.constant 0 : index
    %34 = vector.load %arg7[%c0_23, %c0_24] : memref<8x1xf32, #tpu.memory_space<vmem>>, vector<8x1xf32>
    tpu.vector_store %arg7[%c0_23, %c0_24], %15 {strides = array<i32>} : memref<8x1xf32, #tpu.memory_space<vmem>>, vector<8x1xf32>,
    %c0_i32_25 = arith.constant 0 : i32
    %35 = arith.cmpi eq, %arg2, %c0_i32_25 : i32
    %36 = arith.extui %35 : i1 to i32
    %c0_i32_26 = arith.constant 0 : i32
    %37 = arith.cmpi ne, %36, %c0_i32_26 : i32
    scf.if %37 {
      %c0_27 = arith.constant 0 : index
      %c0_28 = arith.constant 0 : index
      %38 = vector.load %arg9[%c0_27, %c0_28] : memref<8x8xf32, #tpu.memory_space<vmem>>, vector<8x8xf32>
      %c0_29 = arith.constant 0 : index
      %c0_30 = arith.constant 0 : index
      %39 = vector.load %arg8[%c0_29, %c0_30] : memref<8x1xf32, #tpu.memory_space<vmem>>, vector<8x1xf32>
      %40 = tpu.reciprocal %39 {approx = true} : vector<8x1xf32> -> vector<8x1xf32>
      %41 = vector.broadcast %40 : vector<8x1xf32> to vector<8x8xf32>
      %42 = arith.mulf %38, %41 : vector<8x8xf32>
      %43 = arith.truncf %42 : vector<8x8xf32> to vector<8x8xbf16>
      %c0_31 = arith.constant 0 : index
      %c0_32 = arith.constant 0 : index
      %c0_33 = arith.constant 0 : index
      %44 = vector.load %arg6[%c0_31, %c0_32, %c0_33] : memref<1x8x8xbf16, #tpu.memory_space<vmem>>, vector<1x8x8xbf16>
      %45 = vector.shape_cast %44 : vector<1x8x8xbf16> to vector<8x8xbf16>
      %46 = vector.shape_cast %43 : vector<8x8xbf16> to vector<1x8x8xbf16>
      tpu.vector_store %arg6[%c0_31, %c0_32, %c0_33], %46 {strides = array<i32>} : memref<1x8x8xbf16, #tpu.memory_space<vmem>>, vector<1x8x8xbf16>,
    } else {
    }
    return
  }
  func.func @transform_0(%arg0: i32, %arg1: i32, %arg2: i32) -> (i32, i32, i32) {
    %c0_i32 = arith.constant 0 : i32
    %c0_i32_0 = arith.constant 0 : i32
    return %arg0, %arg1, %c0_i32 : i32, i32, i32
  }
  func.func @transform_1(%arg0: i32, %arg1: i32, %arg2: i32) -> (i32, i32, i32) {
    %c0_i32 = arith.constant 0 : i32
    %c0_i32_0 = arith.constant 0 : i32
    return %arg0, %arg2, %c0_i32 : i32, i32, i32
  }
  func.func @transform_2(%arg0: i32, %arg1: i32, %arg2: i32) -> (i32, i32, i32) {
    %c0_i32 = arith.constant 0 : i32
    %c0_i32_0 = arith.constant 0 : i32
    return %arg0, %arg2, %c0_i32 : i32, i32, i32
  }
  func.func @transform_3(%arg0: i32, %arg1: i32, %arg2: i32) -> (i32, i32, i32) {
    %c0_i32 = arith.constant 0 : i32
    %c0_i32_0 = arith.constant 0 : i32
    return %arg0, %arg1, %c0_i32 : i32, i32, i32
  }
}

module attributes {stable_mosaic.version = 11 : i64} {
  func.func @_res_ln_mlp_kernel(%arg0: i32, %arg1: memref<16x32xf32, #tpu.memory_space<vmem>>, %arg2: memref<16x32xbf16, #tpu.memory_space<vmem>>, %arg3: memref<1x32xf32, #tpu.memory_space<vmem>>, %arg4: memref<1x32xf32, #tpu.memory_space<vmem>>, %arg5: memref<32x128xbf16, #tpu.memory_space<vmem>>, %arg6: memref<1x128xf32, #tpu.memory_space<vmem>>, %arg7: memref<128x32xbf16, #tpu.memory_space<vmem>>, %arg8: memref<1x32xf32, #tpu.memory_space<vmem>>, %arg9: memref<16x32xf32, #tpu.memory_space<vmem>>) attributes {dimension_semantics = [#tpu.dimension_semantics<parallel>], iteration_bounds = array<i64: 1>, scalar_prefetch = 0 : i64, scratch_operands = 0 : i64, tpu.core_type = #tpu.core_type<tc>, window_params = [{transform_indices = @transform_0, window_bounds = array<i64: 16, 32>}, {transform_indices = @transform_1, window_bounds = array<i64: 16, 32>}, {pipeline_mode = #tpu.pipeline_mode<synchronous>, transform_indices = @transform_2, window_bounds = array<i64: 1, 32>}, {pipeline_mode = #tpu.pipeline_mode<synchronous>, transform_indices = @transform_3, window_bounds = array<i64: 1, 32>}, {pipeline_mode = #tpu.pipeline_mode<synchronous>, transform_indices = @transform_4, window_bounds = array<i64: 32, 128>}, {pipeline_mode = #tpu.pipeline_mode<synchronous>, transform_indices = @transform_5, window_bounds = array<i64: 1, 128>}, {pipeline_mode = #tpu.pipeline_mode<synchronous>, transform_indices = @transform_6, window_bounds = array<i64: 128, 32>}, {pipeline_mode = #tpu.pipeline_mode<synchronous>, transform_indices = @transform_7, window_bounds = array<i64: 1, 32>}, {transform_indices = @transform_8, window_bounds = array<i64: 16, 32>}]} {
    %c0 = arith.constant 0 : index
    %c0_0 = arith.constant 0 : index
    %0 = vector.load %arg1[%c0, %c0_0] : memref<16x32xf32, #tpu.memory_space<vmem>>, vector<16x32xf32>
    %c0_1 = arith.constant 0 : index
    %c0_2 = arith.constant 0 : index
    %1 = vector.load %arg2[%c0_1, %c0_2] : memref<16x32xbf16, #tpu.memory_space<vmem>>, vector<16x32xbf16>
    %2 = arith.extf %1 : vector<16x32xbf16> to vector<16x32xf32>
    %3 = arith.addf %0, %2 : vector<16x32xf32>
    %c0_3 = arith.constant 0 : index
    %c0_4 = arith.constant 0 : index
    %4 = vector.load %arg3[%c0_3, %c0_4] : memref<1x32xf32, #tpu.memory_space<vmem>>, vector<1x32xf32>
    %c0_5 = arith.constant 0 : index
    %c0_6 = arith.constant 0 : index
    %5 = vector.load %arg4[%c0_5, %c0_6] : memref<1x32xf32, #tpu.memory_space<vmem>>, vector<1x32xf32>
    %c0_7 = arith.constant 0 : index
    %c0_8 = arith.constant 0 : index
    %6 = vector.load %arg5[%c0_7, %c0_8] : memref<32x128xbf16, #tpu.memory_space<vmem>>, vector<32x128xbf16>
    %c0_9 = arith.constant 0 : index
    %c0_10 = arith.constant 0 : index
    %7 = vector.load %arg6[%c0_9, %c0_10] : memref<1x128xf32, #tpu.memory_space<vmem>>, vector<1x128xf32>
    %c0_11 = arith.constant 0 : index
    %c0_12 = arith.constant 0 : index
    %8 = vector.load %arg7[%c0_11, %c0_12] : memref<128x32xbf16, #tpu.memory_space<vmem>>, vector<128x32xbf16>
    %c0_13 = arith.constant 0 : index
    %c0_14 = arith.constant 0 : index
    %9 = vector.load %arg8[%c0_13, %c0_14] : memref<1x32xf32, #tpu.memory_space<vmem>>, vector<1x32xf32>
    %cst = arith.constant dense<0.000000e+00> : vector<16xf32>
    %10 = vector.multi_reduction <add>, %3, %cst [1] : vector<16x32xf32> to vector<16xf32>
    %11 = vector.shape_cast %10 : vector<16xf32> to vector<16x1xf32>
    %cst_15 = arith.constant 3.200000e+01 : f32
    %12 = vector.broadcast %cst_15 : f32 to vector<16x1xf32>
    %13 = arith.divf %11, %12 : vector<16x1xf32>
    %14 = vector.broadcast %13 : vector<16x1xf32> to vector<16x32xf32>
    %15 = arith.subf %3, %14 : vector<16x32xf32>
    %16 = arith.mulf %15, %15 : vector<16x32xf32>
    %cst_16 = arith.constant dense<0.000000e+00> : vector<16xf32>
    %17 = vector.multi_reduction <add>, %16, %cst_16 [1] : vector<16x32xf32> to vector<16xf32>
    %18 = vector.shape_cast %17 : vector<16xf32> to vector<16x1xf32>
    %cst_17 = arith.constant 3.200000e+01 : f32
    %19 = vector.broadcast %cst_17 : f32 to vector<16x1xf32>
    %20 = arith.divf %18, %19 : vector<16x1xf32>
    %cst_18 = arith.constant 9.99999974E-6 : f32
    %21 = vector.broadcast %cst_18 : f32 to vector<16x1xf32>
    %22 = arith.addf %20, %21 : vector<16x1xf32>
    %23 = math.rsqrt %22 : vector<16x1xf32>
    %24 = vector.broadcast %23 : vector<16x1xf32> to vector<16x32xf32>
    %25 = arith.mulf %15, %24 : vector<16x32xf32>
    %26 = vector.broadcast %4 : vector<1x32xf32> to vector<16x32xf32>
    %27 = arith.mulf %25, %26 : vector<16x32xf32>
    %28 = vector.broadcast %5 : vector<1x32xf32> to vector<16x32xf32>
    %29 = arith.addf %27, %28 : vector<16x32xf32>
    %30 = arith.truncf %29 : vector<16x32xf32> to vector<16x32xbf16>
    %cst_19 = arith.constant dense<0.000000e+00> : vector<16x128xf32>
    %31 = tpu.matmul %30, %6, %cst_19 {dimension_numbers = #tpu.dot_dimension_numbers<[1], [0], [0], [1], [0, 0, 1, 1], [], []>} : vector<16x32xbf16>, vector<32x128xbf16>, vector<16x128xf32> -> vector<16x128xf32>
    %32 = vector.broadcast %7 : vector<1x128xf32> to vector<16x128xf32>
    %33 = arith.addf %31, %32 : vector<16x128xf32>
    %cst_20 = arith.constant 5.000000e-01 : f32
    %34 = vector.broadcast %cst_20 : f32 to vector<16x128xf32>
    %35 = arith.mulf %34, %33 : vector<16x128xf32>
    %cst_21 = arith.constant 0.707106769 : f32
    %36 = vector.broadcast %cst_21 : f32 to vector<16x128xf32>
    %37 = arith.mulf %33, %36 : vector<16x128xf32>
    %cst_22 = arith.constant 0.000000e+00 : f32
    %38 = vector.broadcast %cst_22 : f32 to vector<16x128xf32>
    %39 = arith.cmpf oge, %37, %38 : vector<16x128xf32>
    %cst_23 = arith.constant 1.000000e+00 : f32
    %cst_24 = arith.constant -1.000000e+00 : f32
    %40 = vector.broadcast %cst_23 : f32 to vector<16x128xf32>
    %41 = vector.broadcast %cst_24 : f32 to vector<16x128xf32>
    %42 = arith.select %39, %40, %41 : vector<16x128xi1>, vector<16x128xf32>
    %43 = math.absf %37 : vector<16x128xf32>
    %cst_25 = arith.constant 0.327591091 : f32
    %44 = vector.broadcast %cst_25 : f32 to vector<16x128xf32>
    %45 = arith.mulf %44, %43 : vector<16x128xf32>
    %cst_26 = arith.constant 1.000000e+00 : f32
    %46 = vector.broadcast %cst_26 : f32 to vector<16x128xf32>
    %47 = arith.addf %46, %45 : vector<16x128xf32>
    %cst_27 = arith.constant 1.000000e+00 : f32
    %48 = vector.broadcast %cst_27 : f32 to vector<16x128xf32>
    %49 = arith.divf %48, %47 : vector<16x128xf32>
    %cst_28 = arith.constant 1.06140542 : f32
    %50 = vector.broadcast %cst_28 : f32 to vector<16x128xf32>
    %51 = arith.mulf %50, %49 : vector<16x128xf32>
    %cst_29 = arith.constant -1.45315206 : f32
    %52 = vector.broadcast %cst_29 : f32 to vector<16x128xf32>
    %53 = arith.addf %51, %52 : vector<16x128xf32>
    %54 = arith.mulf %53, %49 : vector<16x128xf32>
    %cst_30 = arith.constant 1.42141378 : f32
    %55 = vector.broadcast %cst_30 : f32 to vector<16x128xf32>
    %56 = arith.addf %54, %55 : vector<16x128xf32>
    %57 = arith.mulf %56, %49 : vector<16x128xf32>
    %cst_31 = arith.constant -0.284496725 : f32
    %58 = vector.broadcast %cst_31 : f32 to vector<16x128xf32>
    %59 = arith.addf %57, %58 : vector<16x128xf32>
    %60 = arith.mulf %59, %49 : vector<16x128xf32>
    %cst_32 = arith.constant 0.254829586 : f32
    %61 = vector.broadcast %cst_32 : f32 to vector<16x128xf32>
    %62 = arith.addf %60, %61 : vector<16x128xf32>
    %63 = arith.mulf %62, %49 : vector<16x128xf32>
    %cst_33 = arith.constant 0.000000e+00 : f32
    %64 = vector.broadcast %cst_33 : f32 to vector<16x128xf32>
    %65 = arith.subf %64, %43 : vector<16x128xf32>
    %66 = arith.mulf %65, %43 : vector<16x128xf32>
    %67 = math.exp %66 : vector<16x128xf32>
    %68 = arith.mulf %63, %67 : vector<16x128xf32>
    %cst_34 = arith.constant 1.000000e+00 : f32
    %69 = vector.broadcast %cst_34 : f32 to vector<16x128xf32>
    %70 = arith.subf %69, %68 : vector<16x128xf32>
    %71 = arith.mulf %42, %70 : vector<16x128xf32>
    %cst_35 = arith.constant 1.000000e+00 : f32
    %72 = vector.broadcast %cst_35 : f32 to vector<16x128xf32>
    %73 = arith.addf %72, %71 : vector<16x128xf32>
    %74 = arith.mulf %35, %73 : vector<16x128xf32>
    %75 = arith.truncf %74 : vector<16x128xf32> to vector<16x128xbf16>
    %cst_36 = arith.constant dense<0.000000e+00> : vector<16x32xf32>
    %76 = tpu.matmul %75, %8, %cst_36 {dimension_numbers = #tpu.dot_dimension_numbers<[1], [0], [0], [1], [0, 0, 1, 1], [], []>} : vector<16x128xbf16>, vector<128x32xbf16>, vector<16x32xf32> -> vector<16x32xf32>
    %77 = arith.addf %29, %76 : vector<16x32xf32>
    %78 = vector.broadcast %9 : vector<1x32xf32> to vector<16x32xf32>
    %79 = arith.addf %77, %78 : vector<16x32xf32>
    %c0_37 = arith.constant 0 : index
    %c0_38 = arith.constant 0 : index
    %80 = vector.load %arg9[%c0_37, %c0_38] : memref<16x32xf32, #tpu.memory_space<vmem>>, vector<16x32xf32>
    tpu.vector_store %arg9[%c0_37, %c0_38], %79 {strides = array<i32>} : memref<16x32xf32, #tpu.memory_space<vmem>>, vector<16x32xf32>,
    return
  }
  func.func @transform_0(%arg0: i32) -> (i32, i32) {
    %c0_i32 = arith.constant 0 : i32
    %c0_i32_0 = arith.constant 0 : i32
    return %arg0, %c0_i32 : i32, i32
  }
  func.func @transform_1(%arg0: i32) -> (i32, i32) {
    %c0_i32 = arith.constant 0 : i32
    %c0_i32_0 = arith.constant 0 : i32
    return %arg0, %c0_i32 : i32, i32
  }
  func.func @transform_2(%arg0: i32) -> (i32, i32) {
    %c0_i32 = arith.constant 0 : i32
    %c0_i32_0 = arith.constant 0 : i32
    %c0_i32_1 = arith.constant 0 : i32
    return %c0_i32, %c0_i32_0 : i32, i32
  }
  func.func @transform_3(%arg0: i32) -> (i32, i32) {
    %c0_i32 = arith.constant 0 : i32
    %c0_i32_0 = arith.constant 0 : i32
    %c0_i32_1 = arith.constant 0 : i32
    return %c0_i32, %c0_i32_0 : i32, i32
  }
  func.func @transform_4(%arg0: i32) -> (i32, i32) {
    %c0_i32 = arith.constant 0 : i32
    %c0_i32_0 = arith.constant 0 : i32
    %c0_i32_1 = arith.constant 0 : i32
    return %c0_i32, %c0_i32_0 : i32, i32
  }
  func.func @transform_5(%arg0: i32) -> (i32, i32) {
    %c0_i32 = arith.constant 0 : i32
    %c0_i32_0 = arith.constant 0 : i32
    %c0_i32_1 = arith.constant 0 : i32
    return %c0_i32, %c0_i32_0 : i32, i32
  }
  func.func @transform_6(%arg0: i32) -> (i32, i32) {
    %c0_i32 = arith.constant 0 : i32
    %c0_i32_0 = arith.constant 0 : i32
    %c0_i32_1 = arith.constant 0 : i32
    return %c0_i32, %c0_i32_0 : i32, i32
  }
  func.func @transform_7(%arg0: i32) -> (i32, i32) {
    %c0_i32 = arith.constant 0 : i32
    %c0_i32_0 = arith.constant 0 : i32
    %c0_i32_1 = arith.constant 0 : i32
    return %c0_i32, %c0_i32_0 : i32, i32
  }
  func.func @transform_8(%arg0: i32) -> (i32, i32) {
    %c0_i32 = arith.constant 0 : i32
    %c0_i32_0 = arith.constant 0 : i32
    return %arg0, %c0_i32 : i32, i32
  }
}

module attributes {stable_mosaic.version = 11 : i64} {
  func.func @_matmul_kernel(%arg0: i32, %arg1: i32, %arg2: i32, %arg3: memref<16x32xbf16, #tpu.memory_space<vmem>>, %arg4: memref<32x16xbf16, #tpu.memory_space<vmem>>, %arg5: memref<16x16xf32, #tpu.memory_space<vmem>>, %arg6: memref<16x16xf32, #tpu.memory_space<vmem>>) attributes {dimension_semantics = [#tpu.dimension_semantics<parallel>, #tpu.dimension_semantics<parallel>, #tpu.dimension_semantics<arbitrary>], iteration_bounds = array<i64: 1, 1, 1>, scalar_prefetch = 0 : i64, scratch_operands = 1 : i64, tpu.core_type = #tpu.core_type<tc>, window_params = [{transform_indices = @transform_0, window_bounds = array<i64: 16, 32>}, {transform_indices = @transform_1, window_bounds = array<i64: 32, 16>}, {transform_indices = @transform_2, window_bounds = array<i64: 16, 16>}]} {
    %c0_i32 = arith.constant 0 : i32
    %0 = arith.cmpi eq, %arg2, %c0_i32 : i32
    %1 = arith.extui %0 : i1 to i32
    %c0_i32_0 = arith.constant 0 : i32
    %2 = arith.cmpi ne, %1, %c0_i32_0 : i32
    scf.if %2 {
      %cst_10 = arith.constant 0.000000e+00 : f32
      %12 = vector.broadcast %cst_10 : f32 to vector<16x16xf32>
      %c0_11 = arith.constant 0 : index
      %c0_12 = arith.constant 0 : index
      %13 = vector.load %arg6[%c0_11, %c0_12] : memref<16x16xf32, #tpu.memory_space<vmem>>, vector<16x16xf32>
      tpu.vector_store %arg6[%c0_11, %c0_12], %12 {strides = array<i32>} : memref<16x16xf32, #tpu.memory_space<vmem>>, vector<16x16xf32>,
    } else {
    }
    %c0 = arith.constant 0 : index
    %c0_1 = arith.constant 0 : index
    %3 = vector.load %arg6[%c0, %c0_1] : memref<16x16xf32, #tpu.memory_space<vmem>>, vector<16x16xf32>
    %c0_2 = arith.constant 0 : index
    %c0_3 = arith.constant 0 : index
    %4 = vector.load %arg3[%c0_2, %c0_3] : memref<16x32xbf16, #tpu.memory_space<vmem>>, vector<16x32xbf16>
    %c0_4 = arith.constant 0 : index
    %c0_5 = arith.constant 0 : index
    %5 = vector.load %arg4[%c0_4, %c0_5] : memref<32x16xbf16, #tpu.memory_space<vmem>>, vector<32x16xbf16>
    %cst = arith.constant dense<0.000000e+00> : vector<16x16xf32>
    %6 = tpu.matmul %4, %5, %cst {dimension_numbers = #tpu.dot_dimension_numbers<[1], [0], [0], [1], [0, 0, 1, 1], [], []>} : vector<16x32xbf16>, vector<32x16xbf16>, vector<16x16xf32> -> vector<16x16xf32>
    %7 = arith.addf %3, %6 : vector<16x16xf32>
    %c0_6 = arith.constant 0 : index
    %c0_7 = arith.constant 0 : index
    %8 = vector.load %arg6[%c0_6, %c0_7] : memref<16x16xf32, #tpu.memory_space<vmem>>, vector<16x16xf32>
    tpu.vector_store %arg6[%c0_6, %c0_7], %7 {strides = array<i32>} : memref<16x16xf32, #tpu.memory_space<vmem>>, vector<16x16xf32>,
    %c0_i32_8 = arith.constant 0 : i32
    %9 = arith.cmpi eq, %arg2, %c0_i32_8 : i32
    %10 = arith.extui %9 : i1 to i32
    %c0_i32_9 = arith.constant 0 : i32
    %11 = arith.cmpi ne, %10, %c0_i32_9 : i32
    scf.if %11 {
      %c0_10 = arith.constant 0 : index
      %c0_11 = arith.constant 0 : index
      %12 = vector.load %arg6[%c0_10, %c0_11] : memref<16x16xf32, #tpu.memory_space<vmem>>, vector<16x16xf32>
      %c0_12 = arith.constant 0 : index
      %c0_13 = arith.constant 0 : index
      %13 = vector.load %arg5[%c0_12, %c0_13] : memref<16x16xf32, #tpu.memory_space<vmem>>, vector<16x16xf32>
      tpu.vector_store %arg5[%c0_12, %c0_13], %12 {strides = array<i32>} : memref<16x16xf32, #tpu.memory_space<vmem>>, vector<16x16xf32>,
    } else {
    }
    return
  }
  func.func @transform_0(%arg0: i32, %arg1: i32, %arg2: i32) -> (i32, i32) {
    %c0_i32 = arith.constant 0 : i32
    return %arg0, %arg2 : i32, i32
  }
  func.func @transform_1(%arg0: i32, %arg1: i32, %arg2: i32) -> (i32, i32) {
    %c0_i32 = arith.constant 0 : i32
    return %arg2, %arg1 : i32, i32
  }
  func.func @transform_2(%arg0: i32, %arg1: i32, %arg2: i32) -> (i32, i32) {
    %c0_i32 = arith.constant 0 : i32
    return %arg0, %arg1 : i32, i32
  }
}

module attributes {stable_mosaic.version = 11 : i64} {
  func.func @_ln_kernel(%arg0: i32, %arg1: memref<16x16xf32, #tpu.memory_space<vmem>>, %arg2: memref<1x16xf32, #tpu.memory_space<vmem>>, %arg3: memref<1x16xf32, #tpu.memory_space<vmem>>, %arg4: memref<16x16xf32, #tpu.memory_space<vmem>>) attributes {dimension_semantics = [#tpu.dimension_semantics<parallel>], iteration_bounds = array<i64: 1>, scalar_prefetch = 0 : i64, scratch_operands = 0 : i64, tpu.core_type = #tpu.core_type<tc>, window_params = [{transform_indices = @transform_0, window_bounds = array<i64: 16, 16>}, {pipeline_mode = #tpu.pipeline_mode<synchronous>, transform_indices = @transform_1, window_bounds = array<i64: 1, 16>}, {pipeline_mode = #tpu.pipeline_mode<synchronous>, transform_indices = @transform_2, window_bounds = array<i64: 1, 16>}, {transform_indices = @transform_3, window_bounds = array<i64: 16, 16>}]} {
    %c0 = arith.constant 0 : index
    %c0_0 = arith.constant 0 : index
    %0 = vector.load %arg1[%c0, %c0_0] : memref<16x16xf32, #tpu.memory_space<vmem>>, vector<16x16xf32>
    %cst = arith.constant dense<0.000000e+00> : vector<16xf32>
    %1 = vector.multi_reduction <add>, %0, %cst [1] : vector<16x16xf32> to vector<16xf32>
    %2 = vector.shape_cast %1 : vector<16xf32> to vector<16x1xf32>
    %cst_1 = arith.constant 1.600000e+01 : f32
    %3 = vector.broadcast %cst_1 : f32 to vector<16x1xf32>
    %4 = arith.divf %2, %3 : vector<16x1xf32>
    %5 = vector.broadcast %4 : vector<16x1xf32> to vector<16x16xf32>
    %6 = arith.subf %0, %5 : vector<16x16xf32>
    %7 = arith.mulf %6, %6 : vector<16x16xf32>
    %cst_2 = arith.constant dense<0.000000e+00> : vector<16xf32>
    %8 = vector.multi_reduction <add>, %7, %cst_2 [1] : vector<16x16xf32> to vector<16xf32>
    %9 = vector.shape_cast %8 : vector<16xf32> to vector<16x1xf32>
    %cst_3 = arith.constant 1.600000e+01 : f32
    %10 = vector.broadcast %cst_3 : f32 to vector<16x1xf32>
    %11 = arith.divf %9, %10 : vector<16x1xf32>
    %cst_4 = arith.constant 9.99999997E-7 : f32
    %12 = vector.broadcast %cst_4 : f32 to vector<16x1xf32>
    %13 = arith.addf %11, %12 : vector<16x1xf32>
    %14 = math.rsqrt %13 : vector<16x1xf32>
    %15 = vector.broadcast %14 : vector<16x1xf32> to vector<16x16xf32>
    %16 = arith.mulf %6, %15 : vector<16x16xf32>
    %c0_5 = arith.constant 0 : index
    %c0_6 = arith.constant 0 : index
    %17 = vector.load %arg2[%c0_5, %c0_6] : memref<1x16xf32, #tpu.memory_space<vmem>>, vector<1x16xf32>
    %18 = vector.broadcast %17 : vector<1x16xf32> to vector<16x16xf32>
    %19 = arith.mulf %16, %18 : vector<16x16xf32>
    %c0_7 = arith.constant 0 : index
    %c0_8 = arith.constant 0 : index
    %20 = vector.load %arg3[%c0_7, %c0_8] : memref<1x16xf32, #tpu.memory_space<vmem>>, vector<1x16xf32>
    %21 = vector.broadcast %20 : vector<1x16xf32> to vector<16x16xf32>
    %22 = arith.addf %19, %21 : vector<16x16xf32>
    %c0_9 = arith.constant 0 : index
    %c0_10 = arith.constant 0 : index
    %23 = vector.load %arg4[%c0_9, %c0_10] : memref<16x16xf32, #tpu.memory_space<vmem>>, vector<16x16xf32>
    tpu.vector_store %arg4[%c0_9, %c0_10], %22 {strides = array<i32>} : memref<16x16xf32, #tpu.memory_space<vmem>>, vector<16x16xf32>,
    return
  }
  func.func @transform_0(%arg0: i32) -> (i32, i32) {
    %c0_i32 = arith.constant 0 : i32
    %c0_i32_0 = arith.constant 0 : i32
    return %arg0, %c0_i32 : i32, i32
  }
  func.func @transform_1(%arg0: i32) -> (i32, i32) {
    %c0_i32 = arith.constant 0 : i32
    %c0_i32_0 = arith.constant 0 : i32
    %c0_i32_1 = arith.constant 0 : i32
    return %c0_i32, %c0_i32_0 : i32, i32
  }
  func.func @transform_2(%arg0: i32) -> (i32, i32) {
    %c0_i32 = arith.constant 0 : i32
    %c0_i32_0 = arith.constant 0 : i32
    %c0_i32_1 = arith.constant 0 : i32
    return %c0_i32, %c0_i32_0 : i32, i32
  }
  func.func @transform_3(%arg0: i32) -> (i32, i32) {
    %c0_i32 = arith.constant 0 : i32
    %c0_i32_0 = arith.constant 0 : i32
    return %arg0, %c0_i32 : i32, i32
  }
}

module attributes {stable_mosaic.version = 11 : i64} {
  func.func @_conv3_kernel(%arg0: i32, %arg1: i32, %arg2: i32, %arg3: memref<1x1x24x16xf32, #tpu.memory_space<vmem>>, %arg4: memref<1x3x3x16x16xbf16, #tpu.memory_space<vmem>>, %arg5: memref<1x1x8x16xf32, #tpu.memory_space<vmem>>) attributes {dimension_semantics = [#tpu.dimension_semantics<parallel>, #tpu.dimension_semantics<parallel>, #tpu.dimension_semantics<arbitrary>], iteration_bounds = array<i64: 2, 2, 3>, scalar_prefetch = 0 : i64, scratch_operands = 0 : i64, tpu.core_type = #tpu.core_type<tc>, window_params = [{transform_indices = @transform_0, window_bounds = array<i64: 1, 1, 24, 16>}, {transform_indices = @transform_1, window_bounds = array<i64: 1, 3, 3, 16, 16>}, {transform_indices = @transform_2, window_bounds = array<i64: 1, 1, 8, 16>}]} {
    %c0_i32 = arith.constant 0 : i32
    %0 = arith.cmpi eq, %arg2, %c0_i32 : i32
    %1 = arith.extui %0 : i1 to i32
    %c0_i32_0 = arith.constant 0 : i32
    %2 = arith.cmpi ne, %1, %c0_i32_0 : i32
    scf.if %2 {
      %cst_153 = arith.constant 0.000000e+00 : f32
      %111 = vector.broadcast %cst_153 : f32 to vector<8x16xf32>
      %c0_154 = arith.constant 0 : index
      %c0_155 = arith.constant 0 : index
      %c0_156 = arith.constant 0 : index
      %c0_157 = arith.constant 0 : index
      %112 = vector.load %arg5[%c0_154, %c0_155, %c0_156, %c0_157] : memref<1x1x8x16xf32, #tpu.memory_space<vmem>>, vector<1x1x8x16xf32>
      %113 = vector.shape_cast %112 : vector<1x1x8x16xf32> to vector<8x16xf32>
      %114 = vector.shape_cast %111 : vector<8x16xf32> to vector<1x1x8x16xf32>
      tpu.vector_store %arg5[%c0_154, %c0_155, %c0_156, %c0_157], %114 {strides = array<i32>} : memref<1x1x8x16xf32, #tpu.memory_space<vmem>>, vector<1x1x8x16xf32>,
    } else {
    }
    %c0 = arith.constant 0 : index
    %c0_1 = arith.constant 0 : index
    %c0_2 = arith.constant 0 : index
    %c0_3 = arith.constant 0 : index
    %3 = vector.load %arg3[%c0, %c0_1, %c0_2, %c0_3] : memref<1x1x24x16xf32, #tpu.memory_space<vmem>>, vector<1x1x8x16xf32>
    %4 = vector.shape_cast %3 : vector<1x1x8x16xf32> to vector<8x16xf32>
    %5 = arith.truncf %4 : vector<8x16xf32> to vector<8x16xbf16>
    %c0_4 = arith.constant 0 : index
    %c0_5 = arith.constant 0 : index
    %c0_6 = arith.constant 0 : index
    %c0_7 = arith.constant 0 : index
    %6 = vector.load %arg5[%c0_4, %c0_5, %c0_6, %c0_7] : memref<1x1x8x16xf32, #tpu.memory_space<vmem>>, vector<1x1x8x16xf32>
    %7 = vector.shape_cast %6 : vector<1x1x8x16xf32> to vector<8x16xf32>
    %c0_8 = arith.constant 0 : index
    %c0_9 = arith.constant 0 : index
    %c0_10 = arith.constant 0 : index
    %c0_11 = arith.constant 0 : index
    %c0_12 = arith.constant 0 : index
    %8 = vector.load %arg4[%c0_8, %c0_9, %c0_10, %c0_11, %c0_12] : memref<1x3x3x16x16xbf16, #tpu.memory_space<vmem>>, vector<1x1x1x16x16xbf16>
    %9 = vector.shape_cast %8 : vector<1x1x1x16x16xbf16> to vector<16x16xbf16>
    %cst = arith.constant dense<0.000000e+00> : vector<8x16xf32>
    %10 = tpu.matmul %5, %9, %cst {dimension_numbers = #tpu.dot_dimension_numbers<[1], [0], [0], [1], [0, 0, 1, 1], [], []>} : vector<8x16xbf16>, vector<16x16xbf16>, vector<8x16xf32> -> vector<8x16xf32>
    %11 = arith.addf %7, %10 : vector<8x16xf32>
    %c0_13 = arith.constant 0 : index
    %c0_14 = arith.constant 0 : index
    %c0_15 = arith.constant 0 : index
    %c0_16 = arith.constant 0 : index
    %12 = vector.load %arg5[%c0_13, %c0_14, %c0_15, %c0_16] : memref<1x1x8x16xf32, #tpu.memory_space<vmem>>, vector<1x1x8x16xf32>
    %13 = vector.shape_cast %12 : vector<1x1x8x16xf32> to vector<8x16xf32>
    %14 = vector.shape_cast %11 : vector<8x16xf32> to vector<1x1x8x16xf32>
    tpu.vector_store %arg5[%c0_13, %c0_14, %c0_15, %c0_16], %14 {strides = array<i32>} : memref<1x1x8x16xf32, #tpu.memory_space<vmem>>, vector<1x1x8x16xf32>,
    %c0_17 = arith.constant 0 : index
    %c0_18 = arith.constant 0 : index
    %c1 = arith.constant 1 : index
    %c0_19 = arith.constant 0 : index
    %15 = vector.load %arg3[%c0_17, %c0_18, %c1, %c0_19] : memref<1x1x24x16xf32, #tpu.memory_space<vmem>>, vector<1x1x8x16xf32>
    %16 = vector.shape_cast %15 : vector<1x1x8x16xf32> to vector<8x16xf32>
    %17 = arith.truncf %16 : vector<8x16xf32> to vector<8x16xbf16>
    %c0_20 = arith.constant 0 : index
    %c0_21 = arith.constant 0 : index
    %c0_22 = arith.constant 0 : index
    %c0_23 = arith.constant 0 : index
    %18 = vector.load %arg5[%c0_20, %c0_21, %c0_22, %c0_23] : memref<1x1x8x16xf32, #tpu.memory_space<vmem>>, vector<1x1x8x16xf32>
    %19 = vector.shape_cast %18 : vector<1x1x8x16xf32> to vector<8x16xf32>
    %c0_24 = arith.constant 0 : index
    %c0_25 = arith.constant 0 : index
    %c1_26 = arith.constant 1 : index
    %c0_27 = arith.constant 0 : index
    %c0_28 = arith.constant 0 : index
    %20 = vector.load %arg4[%c0_24, %c0_25, %c1_26, %c0_27, %c0_28] : memref<1x3x3x16x16xbf16, #tpu.memory_space<vmem>>, vector<1x1x1x16x16xbf16>
    %21 = vector.shape_cast %20 : vector<1x1x1x16x16xbf16> to vector<16x16xbf16>
    %cst_29 = arith.constant dense<0.000000e+00> : vector<8x16xf32>
    %22 = tpu.matmul %17, %21, %cst_29 {dimension_numbers = #tpu.dot_dimension_numbers<[1], [0], [0], [1], [0, 0, 1, 1], [], []>} : vector<8x16xbf16>, vector<16x16xbf16>, vector<8x16xf32> -> vector<8x16xf32>
    %23 = arith.addf %19, %22 : vector<8x16xf32>
    %c0_30 = arith.constant 0 : index
    %c0_31 = arith.constant 0 : index
    %c0_32 = arith.constant 0 : index
    %c0_33 = arith.constant 0 : index
    %24 = vector.load %arg5[%c0_30, %c0_31, %c0_32, %c0_33] : memref<1x1x8x16xf32, #tpu.memory_space<vmem>>, vector<1x1x8x16xf32>
    %25 = vector.shape_cast %24 : vector<1x1x8x16xf32> to vector<8x16xf32>
    %26 = vector.shape_cast %23 : vector<8x16xf32> to vector<1x1x8x16xf32>
    tpu.vector_store %arg5[%c0_30, %c0_31, %c0_32, %c0_33], %26 {strides = array<i32>} : memref<1x1x8x16xf32, #tpu.memory_space<vmem>>, vector<1x1x8x16xf32>,
    %c0_34 = arith.constant 0 : index
    %c0_35 = arith.constant 0 : index
    %c2 = arith.constant 2 : index
    %c0_36 = arith.constant 0 : index
    %27 = vector.load %arg3[%c0_34, %c0_35, %c2, %c0_36] : memref<1x1x24x16xf32, #tpu.memory_space<vmem>>, vector<1x1x8x16xf32>
    %28 = vector.shape_cast %27 : vector<1x1x8x16xf32> to vector<8x16xf32>
    %29 = arith.truncf %28 : vector<8x16xf32> to vector<8x16xbf16>
    %c0_37 = arith.constant 0 : index
    %c0_38 = arith.constant 0 : index
    %c0_39 = arith.constant 0 : index
    %c0_40 = arith.constant 0 : index
    %30 = vector.load %arg5[%c0_37, %c0_38, %c0_39, %c0_40] : memref<1x1x8x16xf32, #tpu.memory_space<vmem>>, vector<1x1x8x16xf32>
    %31 = vector.shape_cast %30 : vector<1x1x8x16xf32> to vector<8x16xf32>
    %c0_41 = arith.constant 0 : index
    %c0_42 = arith.constant 0 : index
    %c2_43 = arith.constant 2 : index
    %c0_44 = arith.constant 0 : index
    %c0_45 = arith.constant 0 : index
    %32 = vector.load %arg4[%c0_41, %c0_42, %c2_43, %c0_44, %c0_45] : memref<1x3x3x16x16xbf16, #tpu.memory_space<vmem>>, vector<1x1x1x16x16xbf16>
    %33 = vector.shape_cast %32 : vector<1x1x1x16x16xbf16> to vector<16x16xbf16>
    %cst_46 = arith.constant dense<0.000000e+00> : vector<8x16xf32>
    %34 = tpu.matmul %29, %33, %cst_46 {dimension_numbers = #tpu.dot_dimension_numbers<[1], [0], [0], [1], [0, 0, 1, 1], [], []>} : vector<8x16xbf16>, vector<16x16xbf16>, vector<8x16xf32> -> vector<8x16xf32>
    %35 = arith.addf %31, %34 : vector<8x16xf32>
    %c0_47 = arith.constant 0 : index
    %c0_48 = arith.constant 0 : index
    %c0_49 = arith.constant 0 : index
    %c0_50 = arith.constant 0 : index
    %36 = vector.load %arg5[%c0_47, %c0_48, %c0_49, %c0_50] : memref<1x1x8x16xf32, #tpu.memory_space<vmem>>, vector<1x1x8x16xf32>
    %37 = vector.shape_cast %36 : vector<1x1x8x16xf32> to vector<8x16xf32>
    %38 = vector.shape_cast %35 : vector<8x16xf32> to vector<1x1x8x16xf32>
    tpu.vector_store %arg5[%c0_47, %c0_48, %c0_49, %c0_50], %38 {strides = array<i32>} : memref<1x1x8x16xf32, #tpu.memory_space<vmem>>, vector<1x1x8x16xf32>,
    %c0_51 = arith.constant 0 : index
    %c0_52 = arith.constant 0 : index
    %c4 = arith.constant 4 : index
    %c0_53 = arith.constant 0 : index
    %39 = vector.load %arg3[%c0_51, %c0_52, %c4, %c0_53] : memref<1x1x24x16xf32, #tpu.memory_space<vmem>>, vector<1x1x8x16xf32>
    %40 = vector.shape_cast %39 : vector<1x1x8x16xf32> to vector<8x16xf32>
    %41 = arith.truncf %40 : vector<8x16xf32> to vector<8x16xbf16>
    %c0_54 = arith.constant 0 : index
    %c0_55 = arith.constant 0 : index
    %c0_56 = arith.constant 0 : index
    %c0_57 = arith.constant 0 : index
    %42 = vector.load %arg5[%c0_54, %c0_55, %c0_56, %c0_57] : memref<1x1x8x16xf32, #tpu.memory_space<vmem>>, vector<1x1x8x16xf32>
    %43 = vector.shape_cast %42 : vector<1x1x8x16xf32> to vector<8x16xf32>
    %c0_58 = arith.constant 0 : index
    %c1_59 = arith.constant 1 : index
    %c0_60 = arith.constant 0 : index
    %c0_61 = arith.constant 0 : index
    %c0_62 = arith.constant 0 : index
    %44 = vector.load %arg4[%c0_58, %c1_59, %c0_60, %c0_61, %c0_62] : memref<1x3x3x16x16xbf16, #tpu.memory_space<vmem>>, vector<1x1x1x16x16xbf16>
    %45 = vector.shape_cast %44 : vector<1x1x1x16x16xbf16> to vector<16x16xbf16>
    %cst_63 = arith.constant dense<0.000000e+00> : vector<8x16xf32>
    %46 = tpu.matmul %41, %45, %cst_63 {dimension_numbers = #tpu.dot_dimension_numbers<[1], [0], [0], [1], [0, 0, 1, 1], [], []>} : vector<8x16xbf16>, vector<16x16xbf16>, vector<8x16xf32> -> vector<8x16xf32>
    %47 = arith.addf %43, %46 : vector<8x16xf32>
    %c0_64 = arith.constant 0 : index
    %c0_65 = arith.constant 0 : index
    %c0_66 = arith.constant 0 : index
    %c0_67 = arith.constant 0 : index
    %48 = vector.load %arg5[%c0_64, %c0_65, %c0_66, %c0_67] : memref<1x1x8x16xf32, #tpu.memory_space<vmem>>, vector<1x1x8x16xf32>
    %49 = vector.shape_cast %48 : vector<1x1x8x16xf32> to vector<8x16xf32>
    %50 = vector.shape_cast %47 : vector<8x16xf32> to vector<1x1x8x16xf32>
    tpu.vector_store %arg5[%c0_64, %c0_65, %c0_66, %c0_67], %50 {strides = array<i32>} : memref<1x1x8x16xf32, #tpu.memory_space<vmem>>, vector<1x1x8x16xf32>,
    %c0_68 = arith.constant 0 : index
    %c0_69 = arith.constant 0 : index
    %c5 = arith.constant 5 : index
    %c0_70 = arith.constant 0 : index
    %51 = vector.load %arg3[%c0_68, %c0_69, %c5, %c0_70] : memref<1x1x24x16xf32, #tpu.memory_space<vmem>>, vector<1x1x8x16xf32>
    %52 = vector.shape_cast %51 : vector<1x1x8x16xf32> to vector<8x16xf32>
    %53 = arith.truncf %52 : vector<8x16xf32> to vector<8x16xbf16>
    %c0_71 = arith.constant 0 : index
    %c0_72 = arith.constant 0 : index
    %c0_73 = arith.constant 0 : index
    %c0_74 = arith.constant 0 : index
    %54 = vector.load %arg5[%c0_71, %c0_72, %c0_73, %c0_74] : memref<1x1x8x16xf32, #tpu.memory_space<vmem>>, vector<1x1x8x16xf32>
    %55 = vector.shape_cast %54 : vector<1x1x8x16xf32> to vector<8x16xf32>
    %c0_75 = arith.constant 0 : index
    %c1_76 = arith.constant 1 : index
    %c1_77 = arith.constant 1 : index
    %c0_78 = arith.constant 0 : index
    %c0_79 = arith.constant 0 : index
    %56 = vector.load %arg4[%c0_75, %c1_76, %c1_77, %c0_78, %c0_79] : memref<1x3x3x16x16xbf16, #tpu.memory_space<vmem>>, vector<1x1x1x16x16xbf16>
    %57 = vector.shape_cast %56 : vector<1x1x1x16x16xbf16> to vector<16x16xbf16>
    %cst_80 = arith.constant dense<0.000000e+00> : vector<8x16xf32>
    %58 = tpu.matmul %53, %57, %cst_80 {dimension_numbers = #tpu.dot_dimension_numbers<[1], [0], [0], [1], [0, 0, 1, 1], [], []>} : vector<8x16xbf16>, vector<16x16xbf16>, vector<8x16xf32> -> vector<8x16xf32>
    %59 = arith.addf %55, %58 : vector<8x16xf32>
    %c0_81 = arith.constant 0 : index
    %c0_82 = arith.constant 0 : index
    %c0_83 = arith.constant 0 : index
    %c0_84 = arith.constant 0 : index
    %60 = vector.load %arg5[%c0_81, %c0_82, %c0_83, %c0_84] : memref<1x1x8x16xf32, #tpu.memory_space<vmem>>, vector<1x1x8x16xf32>
    %61 = vector.shape_cast %60 : vector<1x1x8x16xf32> to vector<8x16xf32>
    %62 = vector.shape_cast %59 : vector<8x16xf32> to vector<1x1x8x16xf32>
    tpu.vector_store %arg5[%c0_81, %c0_82, %c0_83, %c0_84], %62 {strides = array<i32>} : memref<1x1x8x16xf32, #tpu.memory_space<vmem>>, vector<1x1x8x16xf32>,
    %c0_85 = arith.constant 0 : index
    %c0_86 = arith.constant 0 : index
    %c6 = arith.constant 6 : index
    %c0_87 = arith.constant 0 : index
    %63 = vector.load %arg3[%c0_85, %c0_86, %c6, %c0_87] : memref<1x1x24x16xf32, #tpu.memory_space<vmem>>, vector<1x1x8x16xf32>
    %64 = vector.shape_cast %63 : vector<1x1x8x16xf32> to vector<8x16xf32>
    %65 = arith.truncf %64 : vector<8x16xf32> to vector<8x16xbf16>
    %c0_88 = arith.constant 0 : index
    %c0_89 = arith.constant 0 : index
    %c0_90 = arith.constant 0 : index
    %c0_91 = arith.constant 0 : index
    %66 = vector.load %arg5[%c0_88, %c0_89, %c0_90, %c0_91] : memref<1x1x8x16xf32, #tpu.memory_space<vmem>>, vector<1x1x8x16xf32>
    %67 = vector.shape_cast %66 : vector<1x1x8x16xf32> to vector<8x16xf32>
    %c0_92 = arith.constant 0 : index
    %c1_93 = arith.constant 1 : index
    %c2_94 = arith.constant 2 : index
    %c0_95 = arith.constant 0 : index
    %c0_96 = arith.constant 0 : index
    %68 = vector.load %arg4[%c0_92, %c1_93, %c2_94, %c0_95, %c0_96] : memref<1x3x3x16x16xbf16, #tpu.memory_space<vmem>>, vector<1x1x1x16x16xbf16>
    %69 = vector.shape_cast %68 : vector<1x1x1x16x16xbf16> to vector<16x16xbf16>
    %cst_97 = arith.constant dense<0.000000e+00> : vector<8x16xf32>
    %70 = tpu.matmul %65, %69, %cst_97 {dimension_numbers = #tpu.dot_dimension_numbers<[1], [0], [0], [1], [0, 0, 1, 1], [], []>} : vector<8x16xbf16>, vector<16x16xbf16>, vector<8x16xf32> -> vector<8x16xf32>
    %71 = arith.addf %67, %70 : vector<8x16xf32>
    %c0_98 = arith.constant 0 : index
    %c0_99 = arith.constant 0 : index
    %c0_100 = arith.constant 0 : index
    %c0_101 = arith.constant 0 : index
    %72 = vector.load %arg5[%c0_98, %c0_99, %c0_100, %c0_101] : memref<1x1x8x16xf32, #tpu.memory_space<vmem>>, vector<1x1x8x16xf32>
    %73 = vector.shape_cast %72 : vector<1x1x8x16xf32> to vector<8x16xf32>
    %74 = vector.shape_cast %71 : vector<8x16xf32> to vector<1x1x8x16xf32>
    tpu.vector_store %arg5[%c0_98, %c0_99, %c0_100, %c0_101], %74 {strides = array<i32>} : memref<1x1x8x16xf32, #tpu.memory_space<vmem>>, vector<1x1x8x16xf32>,
    %c0_102 = arith.constant 0 : index
    %c0_103 = arith.constant 0 : index
    %c8 = arith.constant 8 : index
    %c0_104 = arith.constant 0 : index
    %75 = vector.load %arg3[%c0_102, %c0_103, %c8, %c0_104] : memref<1x1x24x16xf32, #tpu.memory_space<vmem>>, vector<1x1x8x16xf32>
    %76 = vector.shape_cast %75 : vector<1x1x8x16xf32> to vector<8x16xf32>
    %77 = arith.truncf %76 : vector<8x16xf32> to vector<8x16xbf16>
    %c0_105 = arith.constant 0 : index
    %c0_106 = arith.constant 0 : index
    %c0_107 = arith.constant 0 : index
    %c0_108 = arith.constant 0 : index
    %78 = vector.load %arg5[%c0_105, %c0_106, %c0_107, %c0_108] : memref<1x1x8x16xf32, #tpu.memory_space<vmem>>, vector<1x1x8x16xf32>
    %79 = vector.shape_cast %78 : vector<1x1x8x16xf32> to vector<8x16xf32>
    %c0_109 = arith.constant 0 : index
    %c2_110 = arith.constant 2 : index
    %c0_111 = arith.constant 0 : index
    %c0_112 = arith.constant 0 : index
    %c0_113 = arith.constant 0 : index
    %80 = vector.load %arg4[%c0_109, %c2_110, %c0_111, %c0_112, %c0_113] : memref<1x3x3x16x16xbf16, #tpu.memory_space<vmem>>, vector<1x1x1x16x16xbf16>
    %81 = vector.shape_cast %80 : vector<1x1x1x16x16xbf16> to vector<16x16xbf16>
    %cst_114 = arith.constant dense<0.000000e+00> : vector<8x16xf32>
    %82 = tpu.matmul %77, %81, %cst_114 {dimension_numbers = #tpu.dot_dimension_numbers<[1], [0], [0], [1], [0, 0, 1, 1], [], []>} : vector<8x16xbf16>, vector<16x16xbf16>, vector<8x16xf32> -> vector<8x16xf32>
    %83 = arith.addf %79, %82 : vector<8x16xf32>
    %c0_115 = arith.constant 0 : index
    %c0_116 = arith.constant 0 : index
    %c0_117 = arith.constant 0 : index
    %c0_118 = arith.constant 0 : index
    %84 = vector.load %arg5[%c0_115, %c0_116, %c0_117, %c0_118] : memref<1x1x8x16xf32, #tpu.memory_space<vmem>>, vector<1x1x8x16xf32>
    %85 = vector.shape_cast %84 : vector<1x1x8x16xf32> to vector<8x16xf32>
    %86 = vector.shape_cast %83 : vector<8x16xf32> to vector<1x1x8x16xf32>
    tpu.vector_store %arg5[%c0_115, %c0_116, %c0_117, %c0_118], %86 {strides = array<i32>} : memref<1x1x8x16xf32, #tpu.memory_space<vmem>>, vector<1x1x8x16xf32>,
    %c0_119 = arith.constant 0 : index
    %c0_120 = arith.constant 0 : index
    %c9 = arith.constant 9 : index
    %c0_121 = arith.constant 0 : index
    %87 = vector.load %arg3[%c0_119, %c0_120, %c9, %c0_121] : memref<1x1x24x16xf32, #tpu.memory_space<vmem>>, vector<1x1x8x16xf32>
    %88 = vector.shape_cast %87 : vector<1x1x8x16xf32> to vector<8x16xf32>
    %89 = arith.truncf %88 : vector<8x16xf32> to vector<8x16xbf16>
    %c0_122 = arith.constant 0 : index
    %c0_123 = arith.constant 0 : index
    %c0_124 = arith.constant 0 : index
    %c0_125 = arith.constant 0 : index
    %90 = vector.load %arg5[%c0_122, %c0_123, %c0_124, %c0_125] : memref<1x1x8x16xf32, #tpu.memory_space<vmem>>, vector<1x1x8x16xf32>
    %91 = vector.shape_cast %90 : vector<1x1x8x16xf32> to vector<8x16xf32>
    %c0_126 = arith.constant 0 : index
    %c2_127 = arith.constant 2 : index
    %c1_128 = arith.constant 1 : index
    %c0_129 = arith.constant 0 : index
    %c0_130 = arith.constant 0 : index
    %92 = vector.load %arg4[%c0_126, %c2_127, %c1_128, %c0_129, %c0_130] : memref<1x3x3x16x16xbf16, #tpu.memory_space<vmem>>, vector<1x1x1x16x16xbf16>
    %93 = vector.shape_cast %92 : vector<1x1x1x16x16xbf16> to vector<16x16xbf16>
    %cst_131 = arith.constant dense<0.000000e+00> : vector<8x16xf32>
    %94 = tpu.matmul %89, %93, %cst_131 {dimension_numbers = #tpu.dot_dimension_numbers<[1], [0], [0], [1], [0, 0, 1, 1], [], []>} : vector<8x16xbf16>, vector<16x16xbf16>, vector<8x16xf32> -> vector<8x16xf32>
    %95 = arith.addf %91, %94 : vector<8x16xf32>
    %c0_132 = arith.constant 0 : index
    %c0_133 = arith.constant 0 : index
    %c0_134 = arith.constant 0 : index
    %c0_135 = arith.constant 0 : index
    %96 = vector.load %arg5[%c0_132, %c0_133, %c0_134, %c0_135] : memref<1x1x8x16xf32, #tpu.memory_space<vmem>>, vector<1x1x8x16xf32>
    %97 = vector.shape_cast %96 : vector<1x1x8x16xf32> to vector<8x16xf32>
    %98 = vector.shape_cast %95 : vector<8x16xf32> to vector<1x1x8x16xf32>
    tpu.vector_store %arg5[%c0_132, %c0_133, %c0_134, %c0_135], %98 {strides = array<i32>} : memref<1x1x8x16xf32, #tpu.memory_space<vmem>>, vector<1x1x8x16xf32>,
    %c0_136 = arith.constant 0 : index
    %c0_137 = arith.constant 0 : index
    %c10 = arith.constant 10 : index
    %c0_138 = arith.constant 0 : index
    %99 = vector.load %arg3[%c0_136, %c0_137, %c10, %c0_138] : memref<1x1x24x16xf32, #tpu.memory_space<vmem>>, vector<1x1x8x16xf32>
    %100 = vector.shape_cast %99 : vector<1x1x8x16xf32> to vector<8x16xf32>
    %101 = arith.truncf %100 : vector<8x16xf32> to vector<8x16xbf16>
    %c0_139 = arith.constant 0 : index
    %c0_140 = arith.constant 0 : index
    %c0_141 = arith.constant 0 : index
    %c0_142 = arith.constant 0 : index
    %102 = vector.load %arg5[%c0_139, %c0_140, %c0_141, %c0_142] : memref<1x1x8x16xf32, #tpu.memory_space<vmem>>, vector<1x1x8x16xf32>
    %103 = vector.shape_cast %102 : vector<1x1x8x16xf32> to vector<8x16xf32>
    %c0_143 = arith.constant 0 : index
    %c2_144 = arith.constant 2 : index
    %c2_145 = arith.constant 2 : index
    %c0_146 = arith.constant 0 : index
    %c0_147 = arith.constant 0 : index
    %104 = vector.load %arg4[%c0_143, %c2_144, %c2_145, %c0_146, %c0_147] : memref<1x3x3x16x16xbf16, #tpu.memory_space<vmem>>, vector<1x1x1x16x16xbf16>
    %105 = vector.shape_cast %104 : vector<1x1x1x16x16xbf16> to vector<16x16xbf16>
    %cst_148 = arith.constant dense<0.000000e+00> : vector<8x16xf32>
    %106 = tpu.matmul %101, %105, %cst_148 {dimension_numbers = #tpu.dot_dimension_numbers<[1], [0], [0], [1], [0, 0, 1, 1], [], []>} : vector<8x16xbf16>, vector<16x16xbf16>, vector<8x16xf32> -> vector<8x16xf32>
    %107 = arith.addf %103, %106 : vector<8x16xf32>
    %c0_149 = arith.constant 0 : index
    %c0_150 = arith.constant 0 : index
    %c0_151 = arith.constant 0 : index
    %c0_152 = arith.constant 0 : index
    %108 = vector.load %arg5[%c0_149, %c0_150, %c0_151, %c0_152] : memref<1x1x8x16xf32, #tpu.memory_space<vmem>>, vector<1x1x8x16xf32>
    %109 = vector.shape_cast %108 : vector<1x1x8x16xf32> to vector<8x16xf32>
    %110 = vector.shape_cast %107 : vector<8x16xf32> to vector<1x1x8x16xf32>
    tpu.vector_store %arg5[%c0_149, %c0_150, %c0_151, %c0_152], %110 {strides = array<i32>} : memref<1x1x8x16xf32, #tpu.memory_space<vmem>>, vector<1x1x8x16xf32>,
    return
  }
  func.func @transform_0(%arg0: i32, %arg1: i32, %arg2: i32) -> (i32, i32, i32, i32) {
    %0 = arith.addi %arg1, %arg2 : i32
    %c0_i32 = arith.constant 0 : i32
    %c0_i32_0 = arith.constant 0 : i32
    %c0_i32_1 = arith.constant 0 : i32
    return %arg0, %0, %c0_i32, %c0_i32_0 : i32, i32, i32, i32
  }
  func.func @transform_1(%arg0: i32, %arg1: i32, %arg2: i32) -> (i32, i32, i32, i32, i32) {
    %c0_i32 = arith.constant 0 : i32
    %c0_i32_0 = arith.constant 0 : i32
    %c0_i32_1 = arith.constant 0 : i32
    %c0_i32_2 = arith.constant 0 : i32
    %c0_i32_3 = arith.constant 0 : i32
    return %arg2, %c0_i32, %c0_i32_0, %c0_i32_1, %c0_i32_2 : i32, i32, i32, i32, i32
  }
  func.func @transform_2(%arg0: i32, %arg1: i32, %arg2: i32) -> (i32, i32, i32, i32) {
    %c0_i32 = arith.constant 0 : i32
    %c0_i32_0 = arith.constant 0 : i32
    %c0_i32_1 = arith.constant 0 : i32
    return %arg0, %arg1, %c0_i32, %c0_i32_0 : i32, i32, i32, i32
  }
}

module attributes {stable_mosaic.version = 11 : i64} {
  func.func @_ln_kernel(%arg0: i32, %arg1: memref<16x16xf32, #tpu.memory_space<vmem>>, %arg2: memref<1x16xf32, #tpu.memory_space<vmem>>, %arg3: memref<1x16xf32, #tpu.memory_space<vmem>>, %arg4: memref<16x16xf32, #tpu.memory_space<vmem>>) attributes {dimension_semantics = [#tpu.dimension_semantics<parallel>], iteration_bounds = array<i64: 1>, scalar_prefetch = 0 : i64, scratch_operands = 0 : i64, tpu.core_type = #tpu.core_type<tc>, window_params = [{transform_indices = @transform_0, window_bounds = array<i64: 16, 16>}, {pipeline_mode = #tpu.pipeline_mode<synchronous>, transform_indices = @transform_1, window_bounds = array<i64: 1, 16>}, {pipeline_mode = #tpu.pipeline_mode<synchronous>, transform_indices = @transform_2, window_bounds = array<i64: 1, 16>}, {transform_indices = @transform_3, window_bounds = array<i64: 16, 16>}]} {
    %c0 = arith.constant 0 : index
    %c0_0 = arith.constant 0 : index
    %0 = vector.load %arg1[%c0, %c0_0] : memref<16x16xf32, #tpu.memory_space<vmem>>, vector<16x16xf32>
    %cst = arith.constant dense<0.000000e+00> : vector<16xf32>
    %1 = vector.multi_reduction <add>, %0, %cst [1] : vector<16x16xf32> to vector<16xf32>
    %2 = vector.shape_cast %1 : vector<16xf32> to vector<16x1xf32>
    %cst_1 = arith.constant 1.600000e+01 : f32
    %3 = vector.broadcast %cst_1 : f32 to vector<16x1xf32>
    %4 = arith.divf %2, %3 : vector<16x1xf32>
    %5 = vector.broadcast %4 : vector<16x1xf32> to vector<16x16xf32>
    %6 = arith.subf %0, %5 : vector<16x16xf32>
    %7 = arith.mulf %6, %6 : vector<16x16xf32>
    %cst_2 = arith.constant dense<0.000000e+00> : vector<16xf32>
    %8 = vector.multi_reduction <add>, %7, %cst_2 [1] : vector<16x16xf32> to vector<16xf32>
    %9 = vector.shape_cast %8 : vector<16xf32> to vector<16x1xf32>
    %cst_3 = arith.constant 1.600000e+01 : f32
    %10 = vector.broadcast %cst_3 : f32 to vector<16x1xf32>
    %11 = arith.divf %9, %10 : vector<16x1xf32>
    %cst_4 = arith.constant 9.99999997E-7 : f32
    %12 = vector.broadcast %cst_4 : f32 to vector<16x1xf32>
    %13 = arith.addf %11, %12 : vector<16x1xf32>
    %14 = math.rsqrt %13 : vector<16x1xf32>
    %15 = vector.broadcast %14 : vector<16x1xf32> to vector<16x16xf32>
    %16 = arith.mulf %6, %15 : vector<16x16xf32>
    %c0_5 = arith.constant 0 : index
    %c0_6 = arith.constant 0 : index
    %17 = vector.load %arg2[%c0_5, %c0_6] : memref<1x16xf32, #tpu.memory_space<vmem>>, vector<1x16xf32>
    %18 = vector.broadcast %17 : vector<1x16xf32> to vector<16x16xf32>
    %19 = arith.mulf %16, %18 : vector<16x16xf32>
    %c0_7 = arith.constant 0 : index
    %c0_8 = arith.constant 0 : index
    %20 = vector.load %arg3[%c0_7, %c0_8] : memref<1x16xf32, #tpu.memory_space<vmem>>, vector<1x16xf32>
    %21 = vector.broadcast %20 : vector<1x16xf32> to vector<16x16xf32>
    %22 = arith.addf %19, %21 : vector<16x16xf32>
    %c0_9 = arith.constant 0 : index
    %c0_10 = arith.constant 0 : index
    %23 = vector.load %arg4[%c0_9, %c0_10] : memref<16x16xf32, #tpu.memory_space<vmem>>, vector<16x16xf32>
    tpu.vector_store %arg4[%c0_9, %c0_10], %22 {strides = array<i32>} : memref<16x16xf32, #tpu.memory_space<vmem>>, vector<16x16xf32>,
    return
  }
  func.func @transform_0(%arg0: i32) -> (i32, i32) {
    %c0_i32 = arith.constant 0 : i32
    %c0_i32_0 = arith.constant 0 : i32
    return %arg0, %c0_i32 : i32, i32
  }
  func.func @transform_1(%arg0: i32) -> (i32, i32) {
    %c0_i32 = arith.constant 0 : i32
    %c0_i32_0 = arith.constant 0 : i32
    %c0_i32_1 = arith.constant 0 : i32
    return %c0_i32, %c0_i32_0 : i32, i32
  }
  func.func @transform_2(%arg0: i32) -> (i32, i32) {
    %c0_i32 = arith.constant 0 : i32
    %c0_i32_0 = arith.constant 0 : i32
    %c0_i32_1 = arith.constant 0 : i32
    return %c0_i32, %c0_i32_0 : i32, i32
  }
  func.func @transform_3(%arg0: i32) -> (i32, i32) {
    %c0_i32 = arith.constant 0 : i32
    %c0_i32_0 = arith.constant 0 : i32
    return %arg0, %c0_i32 : i32, i32
  }
}

</mosaic_0001>

<llo_original>
// kernel: image_encoder_forward.13
$region0: #{image_encoder_forward.13}
  #allocation0 [shape = 'u32[]', space=smem, size = 0x4, offset = 0x4, fixed_abs, tag = 'smem constant byte address 0x4 - core index']
  #allocation1 [shape = 'u32[144,128]{1,0:T(1,128)}', space=vmem, size = 0x12000, scoped, tag = 'internal scratch']
  #allocation2 [shape = 'f32[16,32]{1,0:T(8,128)}', space=vmem, size = 0x2000, scoped, tag = 'scratch operand']
  %s0 = inlined_call_operand.vmem [shape: bf16[16,512], index: 0, kind: input, shape index: {}]
  %s1 = inlined_call_operand.vmem [shape: bf16[512,32], index: 1, kind: input, shape index: {}]
  %s2 = inlined_call_operand.vmem [shape: f32[1,32], index: 2, kind: input, shape index: {}]
  %s3 = inlined_call_operand.vmem [shape: f32[16,32], index: 3, kind: output, shape index: {}]
  %s4 = sld [smem:[#allocation0]]
  $region30: #{image_encoder_forward.13} parent=0
    _
  %s6 = ssub.s32 1, %s4
  %s7 = scalar_select 0, %s6, %s4
  // Predicated region
  $region2: #{image_encoder_forward.13} parent=0 // pred_check
    _
  $region3: #{image_encoder_forward.13} parent=0 // pred_check_branch
    %9 = sbr.rel (0) target = $region5
  $region4: #{image_encoder_forward.13} parent=0 // pred_region
    _
  $region5: #{image_encoder_forward.13} parent=0 // pred_fallthru
    _
  // Predicated region
  $region6: #{image_encoder_forward.13} parent=0 // pred_check
    _
  $region7: #{image_encoder_forward.13} parent=0 // pred_check_branch
    %11 = sbr.rel (0) target = $region9
  $region8: #{image_encoder_forward.13} parent=0 // pred_region
    _
  $region9: #{image_encoder_forward.13} parent=0 // pred_fallthru
    _
  // Predicated region
  $region10: #{image_encoder_forward.13} parent=0 // pred_check
    _
  $region11: #{image_encoder_forward.13} parent=0 // pred_check_branch
    %13 = sbr.rel (0) target = $region13
  $region12: #{image_encoder_forward.13} parent=0 // pred_region
    _
  $region13: #{image_encoder_forward.13} parent=0 // pred_fallthru
    _
  %p15 = scmp.eq.s32.totalorder 0, 0
  // Predicated region
  $region14: #{image_encoder_forward.13} parent=0 // pred_check
    %p16 = pneg %p15
  $region15: #{image_encoder_forward.13} parent=0 // pred_check_branch
    %18 = sbr.rel (%p16) target = $region17
  $region16: #{image_encoder_forward.13} parent=0 // pred_region
    %vm19 = vcmask 261120
    %20 = vst.msk [vmem:[#allocation2] sm:$0xff] %vm19, 0.0
    %21 = vst.msk [vmem:[#allocation2 + $0x8] sm:$0xff] %vm19, 0.0
  $region17: #{image_encoder_forward.13} parent=0 // pred_fallthru
    _
  %v22 = vld [vmem:[#allocation2] sm:$0xff]
  %v23 = vld [vmem:[#allocation2 + $0x8] sm:$0xff]
  %v24 = vld [vmem:[%s0] sm:$0xff]
  %v25 = vld [vmem:[%s0 + $0x8] sm:$0xff]
  %v26 = vld [vmem:[%s0 + $0x10] sm:$0xff]
  %v27 = vld [vmem:[%s0 + $0x18] sm:$0xff]
  %v28 = vld [vmem:[%s1] sm:$0xf]
  %v29 = vld [vmem:[%s1 + $0x4] sm:$0xf]
  %v30 = vld [vmem:[%s1 + $0x8] sm:$0xf]
  %v31 = vld [vmem:[%s1 + $0xc] sm:$0xf]
  %v32 = vld [vmem:[%s1 + $0x10] sm:$0xf]
  %v33 = vld [vmem:[%s1 + $0x14] sm:$0xf]
  %v34 = vld [vmem:[%s1 + $0x18] sm:$0xf]
  %v35 = vld [vmem:[%s1 + $0x1c] sm:$0xf]
  %v36 = vld [vmem:[%s1 + $0x20] sm:$0xf]
  %v37 = vld [vmem:[%s1 + $0x24] sm:$0xf]
  %v38 = vld [vmem:[%s1 + $0x28] sm:$0xf]
  %v39 = vld [vmem:[%s1 + $0x2c] sm:$0xf]
  %v40 = vld [vmem:[%s1 + $0x30] sm:$0xf]
  %v41 = vld [vmem:[%s1 + $0x34] sm:$0xf]
  %v42 = vld [vmem:[%s1 + $0x38] sm:$0xf]
  %v43 = vld [vmem:[%s1 + $0x3c] sm:$0xf]
  %v44 = vld [vmem:[%s1 + $0x40] sm:$0xf]
  %v45 = vld [vmem:[%s1 + $0x44] sm:$0xf]
  %v46 = vld [vmem:[%s1 + $0x48] sm:$0xf]
  %v47 = vld [vmem:[%s1 + $0x4c] sm:$0xf]
  %v48 = vld [vmem:[%s1 + $0x50] sm:$0xf]
  %v49 = vld [vmem:[%s1 + $0x54] sm:$0xf]
  %v50 = vld [vmem:[%s1 + $0x58] sm:$0xf]
  %v51 = vld [vmem:[%s1 + $0x5c] sm:$0xf]
  %v52 = vld [vmem:[%s1 + $0x60] sm:$0xf]
  %v53 = vld [vmem:[%s1 + $0x64] sm:$0xf]
  %v54 = vld [vmem:[%s1 + $0x68] sm:$0xf]
  %v55 = vld [vmem:[%s1 + $0x6c] sm:$0xf]
  %v56 = vld [vmem:[%s1 + $0x70] sm:$0xf]
  %v57 = vld [vmem:[%s1 + $0x74] sm:$0xf]
  %v58 = vld [vmem:[%s1 + $0x78] sm:$0xf]
  %v59 = vld [vmem:[%s1 + $0x7c] sm:$0xf]
  %v60 = vld [vmem:[%s1 + $0x80] sm:$0xf]
  %v61 = vld [vmem:[%s1 + $0x84] sm:$0xf]
  %v62 = vld [vmem:[%s1 + $0x88] sm:$0xf]
  %v63 = vld [vmem:[%s1 + $0x8c] sm:$0xf]
  %v64 = vld [vmem:[%s1 + $0x90] sm:$0xf]
  %v65 = vld [vmem:[%s1 + $0x94] sm:$0xf]
  %v66 = vld [vmem:[%s1 + $0x98] sm:$0xf]
  %v67 = vld [vmem:[%s1 + $0x9c] sm:$0xf]
  %v68 = vld [vmem:[%s1 + $0xa0] sm:$0xf]
  %v69 = vld [vmem:[%s1 + $0xa4] sm:$0xf]
  %v70 = vld [vmem:[%s1 + $0xa8] sm:$0xf]
  %v71 = vld [vmem:[%s1 + $0xac] sm:$0xf]
  %v72 = vld [vmem:[%s1 + $0xb0] sm:$0xf]
  %v73 = vld [vmem:[%s1 + $0xb4] sm:$0xf]
  %v74 = vld [vmem:[%s1 + $0xb8] sm:$0xf]
  %v75 = vld [vmem:[%s1 + $0xbc] sm:$0xf]
  %v76 = vld [vmem:[%s1 + $0xc0] sm:$0xf]
  %v77 = vld [vmem:[%s1 + $0xc4] sm:$0xf]
  %v78 = vld [vmem:[%s1 + $0xc8] sm:$0xf]
  %v79 = vld [vmem:[%s1 + $0xcc] sm:$0xf]
  %v80 = vld [vmem:[%s1 + $0xd0] sm:$0xf]
  %v81 = vld [vmem:[%s1 + $0xd4] sm:$0xf]
  %v82 = vld [vmem:[%s1 + $0xd8] sm:$0xf]
  %v83 = vld [vmem:[%s1 + $0xdc] sm:$0xf]
  %v84 = vld [vmem:[%s1 + $0xe0] sm:$0xf]
  %v85 = vld [vmem:[%s1 + $0xe4] sm:$0xf]
  %v86 = vld [vmem:[%s1 + $0xe8] sm:$0xf]
  %v87 = vld [vmem:[%s1 + $0xec] sm:$0xf]
  %v88 = vld [vmem:[%s1 + $0xf0] sm:$0xf]
  %v89 = vld [vmem:[%s1 + $0xf4] sm:$0xf]
  %v90 = vld [vmem:[%s1 + $0xf8] sm:$0xf]
  %v91 = vld [vmem:[%s1 + $0xfc] sm:$0xf]
  %v96 = vunpack.c.l.b16 %v24
  %v97 = vunpack.c.h.b16 %v24
  %v98 = vunpack.c.l.b16 %v25
  %v99 = vunpack.c.h.b16 %v25
  %v100 = vunpack.c.l.b16 %v26
  %v101 = vunpack.c.h.b16 %v26
  %v102 = vunpack.c.l.b16 %v27
  %v103 = vunpack.c.h.b16 %v27
  %v104 = vpack.c.b16 %v100, %v96
  %v105 = vpack.c.b16 %v101, %v97
  %v106 = vpack.c.b16 %v102, %v98
  %v107 = vpack.c.b16 %v103, %v99
  %v176 = vunpack.c.l.b16 %v28
  %v177 = vunpack.c.l.b16 %v29
  %v178 = vunpack.c.l.b16 %v30
  %v179 = vunpack.c.l.b16 %v31
  %v180 = vunpack.c.l.b16 %v32
  %v181 = vunpack.c.l.b16 %v33
  %v182 = vunpack.c.l.b16 %v34
  %v183 = vunpack.c.l.b16 %v35
  %v184 = vunpack.c.l.b16 %v36
  %v185 = vunpack.c.l.b16 %v37
  %v186 = vunpack.c.l.b16 %v38
  %v187 = vunpack.c.l.b16 %v39
  %v188 = vunpack.c.l.b16 %v40
  %v189 = vunpack.c.l.b16 %v41
  %v190 = vunpack.c.l.b16 %v42
  %v191 = vunpack.c.l.b16 %v43
  %v192 = vunpack.c.l.b16 %v44
  %v193 = vunpack.c.l.b16 %v45
  %v194 = vunpack.c.l.b16 %v46
  %v195 = vunpack.c.l.b16 %v47
  %v196 = vunpack.c.l.b16 %v48
  %v197 = vunpack.c.l.b16 %v49
  %v198 = vunpack.c.l.b16 %v50
  %v199 = vunpack.c.l.b16 %v51
  %v200 = vunpack.c.l.b16 %v52
  %v201 = vunpack.c.l.b16 %v53
  %v202 = vunpack.c.l.b16 %v54
  %v203 = vunpack.c.l.b16 %v55
  %v204 = vunpack.c.l.b16 %v56
  %v205 = vunpack.c.l.b16 %v57
  %v206 = vunpack.c.l.b16 %v58
  %v207 = vunpack.c.l.b16 %v59
  %v208 = vunpack.c.l.b16 %v60
  %v209 = vunpack.c.l.b16 %v61
  %v210 = vunpack.c.l.b16 %v62
  %v211 = vunpack.c.l.b16 %v63
  %v212 = vunpack.c.l.b16 %v64
  %v213 = vunpack.c.l.b16 %v65
  %v214 = vunpack.c.l.b16 %v66
  %v215 = vunpack.c.l.b16 %v67
  %v216 = vunpack.c.l.b16 %v68
  %v217 = vunpack.c.l.b16 %v69
  %v218 = vunpack.c.l.b16 %v70
  %v219 = vunpack.c.l.b16 %v71
  %v220 = vunpack.c.l.b16 %v72
  %v221 = vunpack.c.l.b16 %v73
  %v222 = vunpack.c.l.b16 %v74
  %v223 = vunpack.c.l.b16 %v75
  %v224 = vunpack.c.l.b16 %v76
  %v225 = vunpack.c.l.b16 %v77
  %v226 = vunpack.c.l.b16 %v78
  %v227 = vunpack.c.l.b16 %v79
  %v228 = vunpack.c.l.b16 %v80
  %v229 = vunpack.c.l.b16 %v81
  %v230 = vunpack.c.l.b16 %v82
  %v231 = vunpack.c.l.b16 %v83
  %v232 = vunpack.c.l.b16 %v84
  %v233 = vunpack.c.l.b16 %v85
  %v234 = vunpack.c.l.b16 %v86
  %v235 = vunpack.c.l.b16 %v87
  %v236 = vunpack.c.l.b16 %v88
  %v237 = vunpack.c.l.b16 %v89
  %v238 = vunpack.c.l.b16 %v90
  %v239 = vunpack.c.l.b16 %v91
  %v240 = vpack.c.b16 %v177, %v176
  %v241 = vpack.c.b16 %v179, %v178
  %v242 = vpack.c.b16 %v181, %v180
  %v243 = vpack.c.b16 %v183, %v182
  %v244 = vpack.c.b16 %v185, %v184
  %v245 = vpack.c.b16 %v187, %v186
  %v246 = vpack.c.b16 %v189, %v188
  %v247 = vpack.c.b16 %v191, %v190
  %v248 = vpack.c.b16 %v193, %v192
  %v249 = vpack.c.b16 %v195, %v194
  %v250 = vpack.c.b16 %v197, %v196
  %v251 = vpack.c.b16 %v199, %v198
  %v252 = vpack.c.b16 %v201, %v200
  %v253 = vpack.c.b16 %v203, %v202
  %v254 = vpack.c.b16 %v205, %v204
  %v255 = vpack.c.b16 %v207, %v206
  %v256 = vpack.c.b16 %v209, %v208
  %v257 = vpack.c.b16 %v211, %v210
  %v258 = vpack.c.b16 %v213, %v212
  %v259 = vpack.c.b16 %v215, %v214
  %v260 = vpack.c.b16 %v217, %v216
  %v261 = vpack.c.b16 %v219, %v218
  %v262 = vpack.c.b16 %v221, %v220
  %v263 = vpack.c.b16 %v223, %v222
  %v264 = vpack.c.b16 %v225, %v224
  %v265 = vpack.c.b16 %v227, %v226
  %v266 = vpack.c.b16 %v229, %v228
  %v267 = vpack.c.b16 %v231, %v230
  %v268 = vpack.c.b16 %v233, %v232
  %v269 = vpack.c.b16 %v235, %v234
  %v270 = vpack.c.b16 %v237, %v236
  %v271 = vpack.c.b16 %v239, %v238
  %304 = vmatprep.subr.bf16.mxu0 0
  %305 = vmatpush1.bf16.msra.mxu0 %v240
  %306 = vmatprep.subr.bf16.mxu0 0
  %307 = vmatpush1.bf16.msra.mxu0 %v241
  %308 = vmatprep.subr.bf16.mxu0 0
  %309 = vmatpush1.bf16.msra.mxu0 %v242
  %310 = vmatprep.subr.bf16.mxu0 0
  %311 = vmatpush1.bf16.msra.mxu0 %v243
  %312 = vmatprep.subr.bf16.mxu0 0
  %313 = vmatpush1.bf16.msra.mxu0 %v244
  %314 = vmatprep.subr.bf16.mxu0 0
  %315 = vmatpush1.bf16.msra.mxu0 %v245
  %316 = vmatprep.subr.bf16.mxu0 0
  %317 = vmatpush1.bf16.msra.mxu0 %v246
  %318 = vmatprep.subr.bf16.mxu0 0
  %319 = vmatpush1.bf16.msra.mxu0 %v247
  %320 = vmatprep.subr.bf16.mxu0 0
  %321 = vmatpush1.bf16.msra.mxu0 %v248
  %322 = vmatprep.subr.bf16.mxu0 0
  %323 = vmatpush1.bf16.msra.mxu0 %v249
  %324 = vmatprep.subr.bf16.mxu0 0
  %325 = vmatpush1.bf16.msra.mxu0 %v250
  %326 = vmatprep.subr.bf16.mxu0 0
  %327 = vmatpush1.bf16.msra.mxu0 %v251
  %328 = vmatprep.subr.bf16.mxu0 0
  %329 = vmatpush1.bf16.msra.mxu0 %v252
  %330 = vmatprep.subr.bf16.mxu0 0
  %331 = vmatpush1.bf16.msra.mxu0 %v253
  %332 = vmatprep.subr.bf16.mxu0 0
  %333 = vmatpush1.bf16.msra.mxu0 %v254
  %334 = vmatprep.subr.bf16.mxu0 0
  %335 = vmatpush1.bf16.msra.mxu0 %v255
  %336 = vmatprep.mubr.bf16.mxu0 %v105
  %337 = vmatmul.mubr.bf16.gmra.mrb[0].mxu0 %v104
  %v338 = vpop.f32.mrb[0].mxu0
  %v339 = vadd.f32 0.0, %v338
  %v340 = vpop.f32.mrb[0].mxu0
  %v341 = vpop.f32.mrb[0].mxu0
  %v342 = vadd.f32 0.0, %v341
  %v343 = vpop.f32.mrb[0].mxu0
  %344 = vdwg.mxu0
  %345 = vmatprep.subr.bf16.mxu0 0
  %346 = vmatpush1.bf16.msra.mxu0 %v256
  %347 = vmatprep.subr.bf16.mxu0 0
  %348 = vmatpush1.bf16.msra.mxu0 %v257
  %349 = vmatprep.subr.bf16.mxu0 0
  %350 = vmatpush1.bf16.msra.mxu0 %v258
  %351 = vmatprep.subr.bf16.mxu0 0
  %352 = vmatpush1.bf16.msra.mxu0 %v259
  %353 = vmatprep.subr.bf16.mxu0 0
  %354 = vmatpush1.bf16.msra.mxu0 %v260
  %355 = vmatprep.subr.bf16.mxu0 0
  %356 = vmatpush1.bf16.msra.mxu0 %v261
  %357 = vmatprep.subr.bf16.mxu0 0
  %358 = vmatpush1.bf16.msra.mxu0 %v262
  %359 = vmatprep.subr.bf16.mxu0 0
  %360 = vmatpush1.bf16.msra.mxu0 %v263
  %361 = vmatprep.subr.bf16.mxu0 0
  %362 = vmatpush1.bf16.msra.mxu0 %v264
  %363 = vmatprep.subr.bf16.mxu0 0
  %364 = vmatpush1.bf16.msra.mxu0 %v265
  %365 = vmatprep.subr.bf16.mxu0 0
  %366 = vmatpush1.bf16.msra.mxu0 %v266
  %367 = vmatprep.subr.bf16.mxu0 0
  %368 = vmatpush1.bf16.msra.mxu0 %v267
  %369 = vmatprep.subr.bf16.mxu0 0
  %370 = vmatpush1.bf16.msra.mxu0 %v268
  %371 = vmatprep.subr.bf16.mxu0 0
  %372 = vmatpush1.bf16.msra.mxu0 %v269
  %373 = vmatprep.subr.bf16.mxu0 0
  %374 = vmatpush1.bf16.msra.mxu0 %v270
  %375 = vmatprep.subr.bf16.mxu0 0
  %376 = vmatpush1.bf16.msra.mxu0 %v271
  %377 = vmatprep.mubr.bf16.mxu0 %v107
  %378 = vmatmul.mubr.bf16.gmra.mrb[0].mxu0 %v106
  %v379 = vpop.f32.mrb[0].mxu0
  %v380 = vadd.f32 %v339, %v379
  %v381 = vpop.f32.mrb[0].mxu0
  %v382 = vpop.f32.mrb[0].mxu0
  %v383 = vadd.f32 %v342, %v382
  %v384 = vpop.f32.mrb[0].mxu0
  %385 = vdwg.mxu0
  %v386 = vadd.f32 %v22, %v380
  %v387 = vadd.f32 %v23, %v383
  %vm388 = vcmask 261120
  %389 = vst.msk [vmem:[#allocation2] sm:$0xff] %vm388, %v386
  %390 = vst.msk [vmem:[#allocation2 + $0x8] sm:$0xff] %vm388, %v387
  // Predicated region
  $region18: #{image_encoder_forward.13} parent=0 // pred_check
    %p391 = pneg %p15
  $region19: #{image_encoder_forward.13} parent=0 // pred_check_branch
    %393 = sbr.rel (%p391) target = $region21
  $region20: #{image_encoder_forward.13} parent=0 // pred_region
    %v394 = vld [vmem:[#allocation2] sm:$0xff]
    %v395 = vld [vmem:[#allocation2 + $0x8] sm:$0xff]
    %v396 = vld [vmem:[%s2] sm:$0x1]
    %v398 = vlaneseq
    %v399 = vshrl.u32 %v398, 7
    %v400 = vsub.s32 0, %v399
    %v401 = vrot.slane %v396, %v400
    %v403 = vadd.f32 %v394, %v401
    %v404 = vadd.f32 %v395, %v401
    %405 = vst.msk [vmem:[%s3] sm:$0xff] %vm388, %v403
    %406 = vst.msk [vmem:[%s3 + $0x8] sm:$0xff] %vm388, %v404
  $region21: #{image_encoder_forward.13} parent=0 // pred_fallthru
    _
  // Predicated region
  $region22: #{image_encoder_forward.13} parent=0 // pred_check
    _
  $region23: #{image_encoder_forward.13} parent=0 // pred_check_branch
    %408 = sbr.rel (0) target = $region25
  $region24: #{image_encoder_forward.13} parent=0 // pred_region
    _
  $region25: #{image_encoder_forward.13} parent=0 // pred_fallthru
    _
  // Predicated region
  $region26: #{image_encoder_forward.13} parent=0 // pred_check
    _
  $region27: #{image_encoder_forward.13} parent=0 // pred_check_branch
    %410 = sbr.rel (0) target = $region29
  $region28: #{image_encoder_forward.13} parent=0 // pred_region
    _
  $region29: #{image_encoder_forward.13} parent=0 // pred_fallthru
    _

// kernel: image_encoder_forward.14
$region0: #{image_encoder_forward.14}
  #allocation0 [shape = 'u32[]', space=smem, size = 0x4, offset = 0x4, fixed_abs, tag = 'smem constant byte address 0x4 - core index']
  #allocation1 [shape = 'u32[144,128]{1,0:T(1,128)}', space=vmem, size = 0x12000, scoped, tag = 'internal scratch']
  %s0 = inlined_call_operand.vmem [shape: f32[16,32], index: 0, kind: input, shape index: {}]
  %s1 = inlined_call_operand.vmem [shape: f32[1,32], index: 1, kind: input, shape index: {}]
  %s2 = inlined_call_operand.vmem [shape: f32[1,32], index: 2, kind: input, shape index: {}]
  %s3 = inlined_call_operand.vmem [shape: bf16[32,128], index: 3, kind: input, shape index: {}]
  %s4 = inlined_call_operand.vmem [shape: f32[1,128], index: 4, kind: input, shape index: {}]
  %s5 = inlined_call_operand.vmem [shape: bf16[128,32], index: 5, kind: input, shape index: {}]
  %s6 = inlined_call_operand.vmem [shape: f32[1,32], index: 6, kind: input, shape index: {}]
  %s7 = inlined_call_operand.vmem [shape: f32[16,32], index: 7, kind: output, shape index: {}]
  %s8 = sld [smem:[#allocation0]]
  $region38: #{image_encoder_forward.14} parent=0
    _
  %s10 = ssub.s32 1, %s8
  %s11 = scalar_select 0, %s10, %s8
  // Predicated region
  $region2: #{image_encoder_forward.14} parent=0 // pred_check
    _
  $region3: #{image_encoder_forward.14} parent=0 // pred_check_branch
    %13 = sbr.rel (0) target = $region5
  $region4: #{image_encoder_forward.14} parent=0 // pred_region
    _
  $region5: #{image_encoder_forward.14} parent=0 // pred_fallthru
    _
  // Predicated region
  $region6: #{image_encoder_forward.14} parent=0 // pred_check
    _
  $region7: #{image_encoder_forward.14} parent=0 // pred_check_branch
    %15 = sbr.rel (0) target = $region9
  $region8: #{image_encoder_forward.14} parent=0 // pred_region
    _
  $region9: #{image_encoder_forward.14} parent=0 // pred_fallthru
    _
  // Predicated region
  $region10: #{image_encoder_forward.14} parent=0 // pred_check
    _
  $region11: #{image_encoder_forward.14} parent=0 // pred_check_branch
    %17 = sbr.rel (0) target = $region13
  $region12: #{image_encoder_forward.14} parent=0 // pred_region
    _
  $region13: #{image_encoder_forward.14} parent=0 // pred_fallthru
    _
  // Predicated region
  $region14: #{image_encoder_forward.14} parent=0 // pred_check
    _
  $region15: #{image_encoder_forward.14} parent=0 // pred_check_branch
    %19 = sbr.rel (0) target = $region17
  $region16: #{image_encoder_forward.14} parent=0 // pred_region
    _
  $region17: #{image_encoder_forward.14} parent=0 // pred_fallthru
    _
  // Predicated region
  $region18: #{image_encoder_forward.14} parent=0 // pred_check
    _
  $region19: #{image_encoder_forward.14} parent=0 // pred_check_branch
    %21 = sbr.rel (0) target = $region21
  $region20: #{image_encoder_forward.14} parent=0 // pred_region
    _
  $region21: #{image_encoder_forward.14} parent=0 // pred_fallthru
    _
  // Predicated region
  $region22: #{image_encoder_forward.14} parent=0 // pred_check
    _
  $region23: #{image_encoder_forward.14} parent=0 // pred_check_branch
    %23 = sbr.rel (0) target = $region25
  $region24: #{image_encoder_forward.14} parent=0 // pred_region
    _
  $region25: #{image_encoder_forward.14} parent=0 // pred_fallthru
    _
  // Predicated region
  $region26: #{image_encoder_forward.14} parent=0 // pred_check
    _
  $region27: #{image_encoder_forward.14} parent=0 // pred_check_branch
    %25 = sbr.rel (0) target = $region29
  $region28: #{image_encoder_forward.14} parent=0 // pred_region
    _
  $region29: #{image_encoder_forward.14} parent=0 // pred_fallthru
    _
  %v27 = vld [vmem:[%s0] sm:$0xff]
  %v28 = vld [vmem:[%s0 + $0x8] sm:$0xff]
  %v29 = vld [vmem:[%s1] sm:$0x1]
  %v30 = vld [vmem:[%s2] sm:$0x1]
  %v31 = vld [vmem:[%s3] sm:$0xf]
  %v32 = vld [vmem:[%s3 + $0x4] sm:$0xf]
  %v33 = vld [vmem:[%s3 + $0x8] sm:$0xf]
  %v34 = vld [vmem:[%s3 + $0xc] sm:$0xf]
  %v35 = vld [vmem:[%s4] sm:$0x1]
  %v36 = vld [vmem:[%s5] sm:$0xf]
  %v37 = vld [vmem:[%s5 + $0x4] sm:$0xf]
  %v38 = vld [vmem:[%s5 + $0x8] sm:$0xf]
  %v39 = vld [vmem:[%s5 + $0xc] sm:$0xf]
  %v40 = vld [vmem:[%s5 + $0x10] sm:$0xf]
  %v41 = vld [vmem:[%s5 + $0x14] sm:$0xf]
  %v42 = vld [vmem:[%s5 + $0x18] sm:$0xf]
  %v43 = vld [vmem:[%s5 + $0x1c] sm:$0xf]
  %v44 = vld [vmem:[%s5 + $0x20] sm:$0xf]
  %v45 = vld [vmem:[%s5 + $0x24] sm:$0xf]
  %v46 = vld [vmem:[%s5 + $0x28] sm:$0xf]
  %v47 = vld [vmem:[%s5 + $0x2c] sm:$0xf]
  %v48 = vld [vmem:[%s5 + $0x30] sm:$0xf]
  %v49 = vld [vmem:[%s5 + $0x34] sm:$0xf]
  %v50 = vld [vmem:[%s5 + $0x38] sm:$0xf]
  %v51 = vld [vmem:[%s5 + $0x3c] sm:$0xf]
  %v52 = vld [vmem:[%s6] sm:$0x1]
  %vm53 = vcmask 261120
  %v54 = vsel %vm53, %v27, 0.0
  %55 = vadd.xlane.f32.xlu0 %v54
  %v56 = vpop.xlane.xlu0 %55
  %v57 = vsel %vm53, %v28, 0.0
  %58 = vadd.xlane.f32.xlu0 %v57
  %v59 = vpop.xlane.xlu0 %58
  %v60 = vrcp.pop 32.0
  %v61 = vmul.f32 %v56, %v60
  %v62 = vmul.f32 %v59, %v60
  %v63 = vsub.f32 %v27, %v61
  %v64 = vsub.f32 %v28, %v62
  %v65 = vmul.f32 %v63, %v63
  %v66 = vmul.f32 %v64, %v64
  %v67 = vsel %vm53, %v65, 0.0
  %68 = vadd.xlane.f32.xlu0 %v67
  %v69 = vpop.xlane.xlu0 %68
  %v70 = vsel %vm53, %v66, 0.0
  %71 = vadd.xlane.f32.xlu0 %v70
  %v72 = vpop.xlane.xlu0 %71
  %v73 = vmul.f32 %v69, %v60
  %v74 = vmul.f32 %v72, %v60
  %v75 = vadd.f32 %v73, 1e-05
  %v76 = vadd.f32 %v74, 1e-05
  %v77 = vrsqrt.pop %v75
  %v78 = vrsqrt.pop %v76
  %v79 = vmul.f32 %v63, %v77
  %v80 = vmul.f32 %v64, %v78
  %v82 = vlaneseq
  %v83 = vshrl.u32 %v82, 7
  %v84 = vsub.s32 0, %v83
  %v85 = vrot.slane %v29, %v84
  %v87 = vmul.f32 %v79, %v85
  %v88 = vmul.f32 %v80, %v85
  %v90 = vlaneseq
  %v91 = vshrl.u32 %v90, 7
  %v92 = vsub.s32 0, %v91
  %v93 = vrot.slane %v30, %v92
  %v95 = vadd.f32 %v87, %v93
  %v96 = vadd.f32 %v88, %v93
  %v97 = vpack.c.bf16 %v96, %v95
  %v99 = vlaneseq
  %v100 = vshrl.u32 %v99, 7
  %v101 = vsub.s32 0, %v100
  %v102 = vrot.slane %v35, %v101
  %v108 = vunpack.c.l.b16 %v31
  %v109 = vunpack.c.l.b16 %v32
  %v110 = vunpack.c.l.b16 %v33
  %v111 = vunpack.c.l.b16 %v34
  %v112 = vpack.c.b16 %v109, %v108
  %v113 = vpack.c.b16 %v111, %v110
  %v117 = vsel %vm53, %v97, 0
  %119 = vmatprep.subr.bf16.mxu0 0
  %120 = vmatpush1.bf16.msra.mxu0 %v112
  %121 = vmatprep.subr.bf16.mxu0 0
  %122 = vmatpush1.bf16.msra.mxu0 %v113
  %123 = vmatprep.subr.bf16.mxu0 0
  %124 = vmatpush1.bf16.msra.mxu0 0
  %125 = vmatprep.subr.bf16.mxu0 0
  %126 = vmatpush1.bf16.msra.mxu0 0
  %127 = vmatprep.subr.bf16.mxu0 0
  %128 = vmatpush1.bf16.msra.mxu0 0
  %129 = vmatprep.subr.bf16.mxu0 0
  %130 = vmatpush1.bf16.msra.mxu0 0
  %131 = vmatprep.subr.bf16.mxu0 0
  %132 = vmatpush1.bf16.msra.mxu0 0
  %133 = vmatprep.subr.bf16.mxu0 0
  %134 = vmatpush1.bf16.msra.mxu0 0
  %135 = vmatprep.subr.bf16.mxu0 0
  %136 = vmatpush1.bf16.msra.mxu0 0
  %137 = vmatprep.subr.bf16.mxu0 0
  %138 = vmatpush1.bf16.msra.mxu0 0
  %139 = vmatprep.subr.bf16.mxu0 0
  %140 = vmatpush1.bf16.msra.mxu0 0
  %141 = vmatprep.subr.bf16.mxu0 0
  %142 = vmatpush1.bf16.msra.mxu0 0
  %143 = vmatprep.subr.bf16.mxu0 0
  %144 = vmatpush1.bf16.msra.mxu0 0
  %145 = vmatprep.subr.bf16.mxu0 0
  %146 = vmatpush1.bf16.msra.mxu0 0
  %147 = vmatprep.subr.bf16.mxu0 0
  %148 = vmatpush1.bf16.msra.mxu0 0
  %149 = vmatprep.subr.bf16.mxu0 0
  %150 = vmatpush1.bf16.msra.mxu0 0
  %151 = vmatprep.mubr.bf16.mxu0 0
  %152 = vmatmul.mubr.bf16.gmra.mrb[0].mxu0 %v117
  %v153 = vpop.f32.mrb[0].mxu0
  %v154 = vadd.f32 %v102, %v153
  %v155 = vpop.f32.mrb[0].mxu0
  %v156 = vpop.f32.mrb[0].mxu0
  %v157 = vadd.f32 %v102, %v156
  %v158 = vpop.f32.mrb[0].mxu0
  %159 = vdwg.mxu0
  %v160 = vmul.f32 %v154, 0.5
  %v161 = vmul.f32 %v157, 0.5
  %v162 = vmul.f32 %v154, 0.70710677
  %v163 = vmul.f32 %v157, 0.70710677
  %vm164 = vcmp.ge.f32.partialorder %v162, 0.0
  %vm165 = vcmp.ge.f32.partialorder %v163, 0.0
  %v166 = vsel %vm164, 1.0, -1.0
  %v167 = vsel %vm165, 1.0, -1.0
  %v168 = vand.u32 2147483647, %v162
  %v169 = vand.u32 2147483647, %v163
  %v170 = vmul.f32 %v168, 0.3275911
  %v171 = vmul.f32 %v169, 0.3275911
  %v172 = vadd.f32 %v170, 1.0
  %v173 = vadd.f32 %v171, 1.0
  %v174 = vrcp.pop %v172
  %v175 = vmul.f32 1.0, %v174
  %v176 = vrcp.pop %v173
  %v177 = vmul.f32 1.0, %v176
  %v178 = vmul.f32 %v175, 1.0614054
  %v179 = vmul.f32 %v177, 1.0614054
  %v180 = vadd.f32 %v178, -1.4531521
  %v181 = vadd.f32 %v179, -1.4531521
  %v182 = vmul.f32 %v180, %v175
  %v183 = vmul.f32 %v181, %v177
  %v184 = vadd.f32 %v182, 1.4214138
  %v185 = vadd.f32 %v183, 1.4214138
  %v186 = vmul.f32 %v184, %v175
  %v187 = vmul.f32 %v185, %v177
  %v188 = vadd.f32 %v186, -0.28449672
  %v189 = vadd.f32 %v187, -0.28449672
  %v190 = vmul.f32 %v188, %v175
  %v191 = vmul.f32 %v189, %v177
  %v192 = vadd.f32 %v190, 0.2548296
  %v193 = vadd.f32 %v191, 0.2548296
  %v194 = vmul.f32 %v192, %v175
  %v195 = vmul.f32 %v193, %v177
  %v196 = vsub.f32 0.0, %v168
  %v197 = vsub.f32 0.0, %v169
  %v198 = vmul.f32 %v196, %v168
  %v199 = vmul.f32 %v197, %v169
  %v200 = vmul.f32 %v198, 1.442695
  %v201 = vpow.pop %v200
  %v202 = vmul.f32 %v199, 1.442695
  %v203 = vpow.pop %v202
  %v204 = vmul.f32 %v194, %v201
  %v205 = vmul.f32 %v195, %v203
  %v206 = vsub.f32 1.0, %v204
  %v207 = vsub.f32 1.0, %v205
  %v208 = vmul.f32 %v166, %v206
  %v209 = vmul.f32 %v167, %v207
  %v210 = vadd.f32 %v208, 1.0
  %v211 = vadd.f32 %v209, 1.0
  %v212 = vmul.f32 %v160, %v210
  %v213 = vmul.f32 %v161, %v211
  %v214 = vpack.c.bf16 %v213, %v212
  %v231 = vunpack.c.l.b16 %v36
  %v232 = vunpack.c.l.b16 %v37
  %v233 = vunpack.c.l.b16 %v38
  %v234 = vunpack.c.l.b16 %v39
  %v235 = vunpack.c.l.b16 %v40
  %v236 = vunpack.c.l.b16 %v41
  %v237 = vunpack.c.l.b16 %v42
  %v238 = vunpack.c.l.b16 %v43
  %v239 = vunpack.c.l.b16 %v44
  %v240 = vunpack.c.l.b16 %v45
  %v241 = vunpack.c.l.b16 %v46
  %v242 = vunpack.c.l.b16 %v47
  %v243 = vunpack.c.l.b16 %v48
  %v244 = vunpack.c.l.b16 %v49
  %v245 = vunpack.c.l.b16 %v50
  %v246 = vunpack.c.l.b16 %v51
  %v247 = vpack.c.b16 %v232, %v231
  %v248 = vpack.c.b16 %v234, %v233
  %v249 = vpack.c.b16 %v236, %v235
  %v250 = vpack.c.b16 %v238, %v237
  %v251 = vpack.c.b16 %v240, %v239
  %v252 = vpack.c.b16 %v242, %v241
  %v253 = vpack.c.b16 %v244, %v243
  %v254 = vpack.c.b16 %v246, %v245
  %263 = vmatprep.subr.bf16.mxu0 0
  %264 = vmatpush1.bf16.msra.mxu0 %v247
  %265 = vmatprep.subr.bf16.mxu0 0
  %266 = vmatpush1.bf16.msra.mxu0 %v248
  %267 = vmatprep.subr.bf16.mxu0 0
  %268 = vmatpush1.bf16.msra.mxu0 %v249
  %269 = vmatprep.subr.bf16.mxu0 0
  %270 = vmatpush1.bf16.msra.mxu0 %v250
  %271 = vmatprep.subr.bf16.mxu0 0
  %272 = vmatpush1.bf16.msra.mxu0 %v251
  %273 = vmatprep.subr.bf16.mxu0 0
  %274 = vmatpush1.bf16.msra.mxu0 %v252
  %275 = vmatprep.subr.bf16.mxu0 0
  %276 = vmatpush1.bf16.msra.mxu0 %v253
  %277 = vmatprep.subr.bf16.mxu0 0
  %278 = vmatpush1.bf16.msra.mxu0 %v254
  %279 = vmatprep.subr.bf16.mxu0 0
  %280 = vmatpush1.bf16.msra.mxu0 0
  %281 = vmatprep.subr.bf16.mxu0 0
  %282 = vmatpush1.bf16.msra.mxu0 0
  %283 = vmatprep.subr.bf16.mxu0 0
  %284 = vmatpush1.bf16.msra.mxu0 0
  %285 = vmatprep.subr.bf16.mxu0 0
  %286 = vmatpush1.bf16.msra.mxu0 0
  %287 = vmatprep.subr.bf16.mxu0 0
  %288 = vmatpush1.bf16.msra.mxu0 0
  %289 = vmatprep.subr.bf16.mxu0 0
  %290 = vmatpush1.bf16.msra.mxu0 0
  %291 = vmatprep.subr.bf16.mxu0 0
  %292 = vmatpush1.bf16.msra.mxu0 0
  %293 = vmatprep.subr.bf16.mxu0 0
  %294 = vmatpush1.bf16.msra.mxu0 0
  %295 = vmatprep.mubr.bf16.mxu0 0
  %296 = vmatmul.mubr.bf16.gmra.mrb[0].mxu0 %v214
  %v297 = vpop.f32.mrb[0].mxu0
  %v298 = vadd.f32 0.0, %v297
  %v299 = vpop.f32.mrb[0].mxu0
  %v300 = vpop.f32.mrb[0].mxu0
  %v301 = vadd.f32 0.0, %v300
  %v302 = vpop.f32.mrb[0].mxu0
  %303 = vdwg.mxu0
  %v304 = vadd.f32 %v95, %v298
  %v305 = vadd.f32 %v96, %v301
  %v307 = vlaneseq
  %v308 = vshrl.u32 %v307, 7
  %v309 = vsub.s32 0, %v308
  %v310 = vrot.slane %v52, %v309
  %v312 = vadd.f32 %v304, %v310
  %v313 = vadd.f32 %v305, %v310
  %314 = vst.msk [vmem:[%s7] sm:$0xff] %vm53, %v312
  %315 = vst.msk [vmem:[%s7 + $0x8] sm:$0xff] %vm53, %v313
  // Predicated region
  $region30: #{image_encoder_forward.14} parent=0 // pred_check
    _
  $region31: #{image_encoder_forward.14} parent=0 // pred_check_branch
    %317 = sbr.rel (0) target = $region33
  $region32: #{image_encoder_forward.14} parent=0 // pred_region
    _
  $region33: #{image_encoder_forward.14} parent=0 // pred_fallthru
    _
  // Predicated region
  $region34: #{image_encoder_forward.14} parent=0 // pred_check
    _
  $region35: #{image_encoder_forward.14} parent=0 // pred_check_branch
    %319 = sbr.rel (0) target = $region37
  $region36: #{image_encoder_forward.14} parent=0 // pred_region
    _
  $region37: #{image_encoder_forward.14} parent=0 // pred_fallthru
    _

// kernel: image_encoder_forward.16
$region0: #{image_encoder_forward.16}
  #allocation0 [shape = 'u32[]', space=smem, size = 0x4, offset = 0x4, fixed_abs, tag = 'smem constant byte address 0x4 - core index']
  #allocation1 [shape = 'u32[144,128]{1,0:T(1,128)}', space=vmem, size = 0x12000, scoped, tag = 'internal scratch']
  %s0 = inlined_call_operand.vmem [shape: f32[16,32], index: 0, kind: input, shape index: {}]
  %s1 = inlined_call_operand.vmem [shape: f32[1,32], index: 1, kind: input, shape index: {}]
  %s2 = inlined_call_operand.vmem [shape: f32[1,32], index: 2, kind: input, shape index: {}]
  %s3 = inlined_call_operand.vmem [shape: bf16[32,96], index: 3, kind: input, shape index: {}]
  %s4 = inlined_call_operand.vmem [shape: f32[1,96], index: 4, kind: input, shape index: {}]
  %s5 = inlined_call_operand.vmem [shape: bf16[16,96], index: 5, kind: output, shape index: {}]
  %s6 = sld [smem:[#allocation0]]
  $region30: #{image_encoder_forward.16} parent=0
    _
  %s8 = ssub.s32 1, %s6
  %s9 = scalar_select 0, %s8, %s6
  // Predicated region
  $region2: #{image_encoder_forward.16} parent=0 // pred_check
    _
  $region3: #{image_encoder_forward.16} parent=0 // pred_check_branch
    %11 = sbr.rel (0) target = $region5
  $region4: #{image_encoder_forward.16} parent=0 // pred_region
    _
  $region5: #{image_encoder_forward.16} parent=0 // pred_fallthru
    _
  // Predicated region
  $region6: #{image_encoder_forward.16} parent=0 // pred_check
    _
  $region7: #{image_encoder_forward.16} parent=0 // pred_check_branch
    %13 = sbr.rel (0) target = $region9
  $region8: #{image_encoder_forward.16} parent=0 // pred_region
    _
  $region9: #{image_encoder_forward.16} parent=0 // pred_fallthru
    _
  // Predicated region
  $region10: #{image_encoder_forward.16} parent=0 // pred_check
    _
  $region11: #{image_encoder_forward.16} parent=0 // pred_check_branch
    %15 = sbr.rel (0) target = $region13
  $region12: #{image_encoder_forward.16} parent=0 // pred_region
    _
  $region13: #{image_encoder_forward.16} parent=0 // pred_fallthru
    _
  // Predicated region
  $region14: #{image_encoder_forward.16} parent=0 // pred_check
    _
  $region15: #{image_encoder_forward.16} parent=0 // pred_check_branch
    %17 = sbr.rel (0) target = $region17
  $region16: #{image_encoder_forward.16} parent=0 // pred_region
    _
  $region17: #{image_encoder_forward.16} parent=0 // pred_fallthru
    _
  // Predicated region
  $region18: #{image_encoder_forward.16} parent=0 // pred_check
    _
  $region19: #{image_encoder_forward.16} parent=0 // pred_check_branch
    %19 = sbr.rel (0) target = $region21
  $region20: #{image_encoder_forward.16} parent=0 // pred_region
    _
  $region21: #{image_encoder_forward.16} parent=0 // pred_fallthru
    _
  %v21 = vld [vmem:[%s0] sm:$0xff]
  %v22 = vld [vmem:[%s0 + $0x8] sm:$0xff]
  %vm23 = vcmask 261120
  %v24 = vsel %vm23, %v21, 0.0
  %25 = vadd.xlane.f32.xlu0 %v24
  %v26 = vpop.xlane.xlu0 %25
  %v27 = vsel %vm23, %v22, 0.0
  %28 = vadd.xlane.f32.xlu0 %v27
  %v29 = vpop.xlane.xlu0 %28
  %v30 = vrcp.pop 32.0
  %v31 = vmul.f32 %v26, %v30
  %v32 = vmul.f32 %v29, %v30
  %v33 = vsub.f32 %v21, %v31
  %v34 = vsub.f32 %v22, %v32
  %v35 = vmul.f32 %v33, %v33
  %v36 = vmul.f32 %v34, %v34
  %v37 = vsel %vm23, %v35, 0.0
  %38 = vadd.xlane.f32.xlu0 %v37
  %v39 = vpop.xlane.xlu0 %38
  %v40 = vsel %vm23, %v36, 0.0
  %41 = vadd.xlane.f32.xlu0 %v40
  %v42 = vpop.xlane.xlu0 %41
  %v43 = vmul.f32 %v39, %v30
  %v44 = vmul.f32 %v42, %v30
  %v45 = vadd.f32 %v43, 1e-05
  %v46 = vadd.f32 %v44, 1e-05
  %v47 = vrsqrt.pop %v45
  %v48 = vrsqrt.pop %v46
  %v49 = vmul.f32 %v33, %v47
  %v50 = vmul.f32 %v34, %v48
  %v51 = vld [vmem:[%s1] sm:$0x1]
  %v53 = vlaneseq
  %v54 = vshrl.u32 %v53, 7
  %v55 = vsub.s32 0, %v54
  %v56 = vrot.slane %v51, %v55
  %v58 = vmul.f32 %v49, %v56
  %v59 = vmul.f32 %v50, %v56
  %v60 = vld [vmem:[%s2] sm:$0x1]
  %v62 = vlaneseq
  %v63 = vshrl.u32 %v62, 7
  %v64 = vsub.s32 0, %v63
  %v65 = vrot.slane %v60, %v64
  %v67 = vadd.f32 %v58, %v65
  %v68 = vadd.f32 %v59, %v65
  %v69 = vpack.c.bf16 %v68, %v67
  %v70 = vld [vmem:[%s3] sm:$0xf]
  %v71 = vld [vmem:[%s3 + $0x4] sm:$0xf]
  %v72 = vld [vmem:[%s3 + $0x8] sm:$0xf]
  %v73 = vld [vmem:[%s3 + $0xc] sm:$0xf]
  %v74 = vld [vmem:[%s4] sm:$0x1]
  %v76 = vlaneseq
  %v77 = vshrl.u32 %v76, 7
  %v78 = vsub.s32 0, %v77
  %v79 = vrot.slane %v74, %v78
  %v85 = vunpack.c.l.b16 %v70
  %v86 = vunpack.c.l.b16 %v71
  %v87 = vunpack.c.l.b16 %v72
  %v88 = vunpack.c.l.b16 %v73
  %v89 = vpack.c.b16 %v86, %v85
  %v90 = vpack.c.b16 %v88, %v87
  %v94 = vsel %vm23, %v69, 0
  %96 = vmatprep.subr.bf16.mxu0 0
  %97 = vmatpush1.bf16.msra.mxu0 %v89
  %98 = vmatprep.subr.bf16.mxu0 0
  %99 = vmatpush1.bf16.msra.mxu0 %v90
  %100 = vmatprep.subr.bf16.mxu0 0
  %101 = vmatpush1.bf16.msra.mxu0 0
  %102 = vmatprep.subr.bf16.mxu0 0
  %103 = vmatpush1.bf16.msra.mxu0 0
  %104 = vmatprep.subr.bf16.mxu0 0
  %105 = vmatpush1.bf16.msra.mxu0 0
  %106 = vmatprep.subr.bf16.mxu0 0
  %107 = vmatpush1.bf16.msra.mxu0 0
  %108 = vmatprep.subr.bf16.mxu0 0
  %109 = vmatpush1.bf16.msra.mxu0 0
  %110 = vmatprep.subr.bf16.mxu0 0
  %111 = vmatpush1.bf16.msra.mxu0 0
  %112 = vmatprep.subr.bf16.mxu0 0
  %113 = vmatpush1.bf16.msra.mxu0 0
  %114 = vmatprep.subr.bf16.mxu0 0
  %115 = vmatpush1.bf16.msra.mxu0 0
  %116 = vmatprep.subr.bf16.mxu0 0
  %117 = vmatpush1.bf16.msra.mxu0 0
  %118 = vmatprep.subr.bf16.mxu0 0
  %119 = vmatpush1.bf16.msra.mxu0 0
  %120 = vmatprep.subr.bf16.mxu0 0
  %121 = vmatpush1.bf16.msra.mxu0 0
  %122 = vmatprep.subr.bf16.mxu0 0
  %123 = vmatpush1.bf16.msra.mxu0 0
  %124 = vmatprep.subr.bf16.mxu0 0
  %125 = vmatpush1.bf16.msra.mxu0 0
  %126 = vmatprep.subr.bf16.mxu0 0
  %127 = vmatpush1.bf16.msra.mxu0 0
  %128 = vmatprep.mubr.bf16.mxu0 0
  %129 = vmatmul.mubr.bf16.gmra.mrb[0].mxu0 %v94
  %v130 = vpop.f32.mrb[0].mxu0
  %v131 = vadd.f32 %v79, %v130
  %v132 = vpop.f32.mrb[0].mxu0
  %v133 = vpop.f32.mrb[0].mxu0
  %v134 = vadd.f32 %v79, %v133
  %v135 = vpop.f32.mrb[0].mxu0
  %136 = vdwg.mxu0
  %v137 = vpack.c.bf16 %v134, %v131
  %v139 = vunpack.c.l.b16 %v137
  %v140 = vunpack.c.h.b16 %v137
  %v141 = vpack.c.b16 %v139, %v139
  %v142 = vpack.c.b16 %v140, %v140
  %vm145 = vcmask 781312
  %146 = vst.msk [vmem:[%s5] sm:$0xf] %vm145, %v141
  %147 = vst.msk [vmem:[%s5 + $0x4] sm:$0xf] %vm145, %v142
  // Predicated region
  $region22: #{image_encoder_forward.16} parent=0 // pred_check
    _
  $region23: #{image_encoder_forward.16} parent=0 // pred_check_branch
    %149 = sbr.rel (0) target = $region25
  $region24: #{image_encoder_forward.16} parent=0 // pred_region
    _
  $region25: #{image_encoder_forward.16} parent=0 // pred_fallthru
    _
  // Predicated region
  $region26: #{image_encoder_forward.16} parent=0 // pred_check
    _
  $region27: #{image_encoder_forward.16} parent=0 // pred_check_branch
    %151 = sbr.rel (0) target = $region29
  $region28: #{image_encoder_forward.16} parent=0 // pred_region
    _
  $region29: #{image_encoder_forward.16} parent=0 // pred_fallthru
    _

// kernel: image_encoder_forward.17
$region0: #{image_encoder_forward.17}
  #allocation0 [shape = 'u32[]', space=smem, size = 0x4, offset = 0x4, fixed_abs, tag = 'smem constant byte address 0x4 - core index']
  #allocation1 [shape = 'u32[144,128]{1,0:T(1,128)}', space=vmem, size = 0x12000, scoped, tag = 'internal scratch']
  #allocation2 [shape = 'f32[8,1]{1,0:T(8,128)}', space=vmem, size = 0x1000, scoped, tag = 'scratch operand']
  #allocation3 [shape = 'f32[8,1]{1,0:T(8,128)}', space=vmem, size = 0x1000, scoped, tag = 'scratch operand']
  #allocation4 [shape = 'f32[8,8]{1,0:T(8,128)}', space=vmem, size = 0x1000, scoped, tag = 'scratch operand']
  %s0 = inlined_call_operand.vmem [shape: bf16[8,8,8], index: 0, kind: input, shape index: {}]
  %s1 = inlined_call_operand.vmem [shape: bf16[8,8,8], index: 1, kind: input, shape index: {}]
  %s2 = inlined_call_operand.vmem [shape: bf16[8,8,8], index: 2, kind: input, shape index: {}]
  %s3 = inlined_call_operand.vmem [shape: bf16[8,8,8], index: 3, kind: output, shape index: {}]
  %s4 = sld [smem:[#allocation0]]
  $region53: #{image_encoder_forward.17} parent=0
    _
  %s6 = ssub.s32 1, %s4
  %s7 = scalar_select 0, %s6, %s4
  loop: start=0, step=1, limit=10
  $region2: #{image_encoder_forward.17} parent=0 // loop_pre_header
    _
  $region3: #{image_encoder_forward.17} parent=0 // loop_header
    %s9 = sphi 0, %s13
    %p10 = scmp.ge.s32.totalorder %s9, 10
    %s16 = sphi 0, %s35
    %s17 = sphi 0, %s31
    %s18 = sphi 0, %s27
    %s19 = sphi 0, %s16
    %s20 = sphi 0, %s17
    %s21 = sphi 0, %s18
    %s22 = sphi 0, %s19
    %s23 = sphi 0, %s20
    %s24 = sphi 0, %s21
    %s40 = sphi 0, %s42
    %s43 = sphi 0, %s40
    %s44 = sphi 0, %s43
    %s60 = sphi 0, %s44
    %s68 = sphi 0, %s70
    %s71 = sphi 0, %s68
    %s72 = sphi 0, %s71
    %s88 = sphi 0, %s72
    %s96 = sphi 0, %s98
    %s99 = sphi 0, %s96
    %s100 = sphi 0, %s99
    %s116 = sphi 0, %s100
    %s124 = sphi 0, %s126
    %s127 = sphi 0, %s124
    %s128 = sphi 0, %s127
    %s144 = sphi 0, %s128
  $region4: #{image_encoder_forward.17} parent=0 // loop_header_branch
    %12 = sbr.rel (%p10) target = $region8
  $region5: #{image_encoder_forward.17} parent=0 // loop_body
    %s14 = ssub.s32 %s9, 1
    %s15 = ssub.s32 %s9, 2
    %s25 = sadd.s32 1, %s18
    %p26 = scmp.ge.s32.totalorder %s25, 1
    %s27 = scalar_select %p26, 0, %s25
    %s28 = sadd.s32 1, %s17
    %s29 = scalar_select %p26, %s28, %s17
    %p30 = scmp.ge.s32.totalorder %s29, 1
    %s31 = scalar_select %p30, 0, %s29
    %s32 = sadd.s32 1, %s16
    %s33 = scalar_select %p30, %s32, %s16
    %p34 = scmp.ge.s32.totalorder %s33, 8
    %s35 = scalar_select %p34, 0, %s33
    %s36 = ssub.s32 %s16, %s35
    %s37 = ssub.s32 %s17, %s31
    %s38 = sor.u32 %s36, %s37
    %p39 = scmp.eq.s32.totalorder %s38, 0
    %s41 = sadd.s32 %s40, 1
    %s42 = scalar_select %p39, %s40, %s41
    %p45 = pneg %p39
    %p46 = scmp.eq.s32.totalorder %s9, 7
    %p47 = por %p45, %p46
    %p48 = scmp.ne.s32.totalorder %s40, %s43
    %p49 = scmp.eq.s32.totalorder %s9, 0
    %p50 = por %p48, %p49
    %p51 = scmp.ne.s32.totalorder %s40, %s43
    %p52 = scmp.eq.s32.totalorder %s14, 7
    %p53 = por %p51, %p52
    %p54 = scmp.ne.s32.totalorder %s43, %s44
    %p55 = scmp.eq.s32.totalorder %s14, 0
    %p56 = por %p54, %p55
    %p57 = scmp.ne.s32.totalorder %s43, %s44
    %p58 = scmp.eq.s32.totalorder %s15, 7
    %p59 = por %p57, %p58
    %p61 = scmp.ne.s32.totalorder %s44, %s60
    %p62 = scmp.eq.s32.totalorder %s15, 0
    %p63 = por %p61, %p62
    %s64 = ssub.s32 %s16, %s35
    %s65 = ssub.s32 %s18, %s27
    %s66 = sor.u32 %s64, %s65
    %p67 = scmp.eq.s32.totalorder %s66, 0
    %s69 = sadd.s32 %s68, 1
    %s70 = scalar_select %p67, %s68, %s69
    %p73 = pneg %p67
    %p74 = scmp.eq.s32.totalorder %s9, 7
    %p75 = por %p73, %p74
    %p76 = scmp.ne.s32.totalorder %s68, %s71
    %p77 = scmp.eq.s32.totalorder %s9, 0
    %p78 = por %p76, %p77
    %p79 = scmp.ne.s32.totalorder %s68, %s71
    %p80 = scmp.eq.s32.totalorder %s14, 7
    %p81 = por %p79, %p80
    %p82 = scmp.ne.s32.totalorder %s71, %s72
    %p83 = scmp.eq.s32.totalorder %s14, 0
    %p84 = por %p82, %p83
    %p85 = scmp.ne.s32.totalorder %s71, %s72
    %p86 = scmp.eq.s32.totalorder %s15, 7
    %p87 = por %p85, %p86
    %p89 = scmp.ne.s32.totalorder %s72, %s88
    %p90 = scmp.eq.s32.totalorder %s15, 0
    %p91 = por %p89, %p90
    %s92 = ssub.s32 %s16, %s35
    %s93 = ssub.s32 %s18, %s27
    %s94 = sor.u32 %s92, %s93
    %p95 = scmp.eq.s32.totalorder %s94, 0
    %s97 = sadd.s32 %s96, 1
    %s98 = scalar_select %p95, %s96, %s97
    %p101 = pneg %p95
    %p102 = scmp.eq.s32.totalorder %s9, 7
    %p103 = por %p101, %p102
    %p104 = scmp.ne.s32.totalorder %s96, %s99
    %p105 = scmp.eq.s32.totalorder %s9, 0
    %p106 = por %p104, %p105
    %p107 = scmp.ne.s32.totalorder %s96, %s99
    %p108 = scmp.eq.s32.totalorder %s14, 7
    %p109 = por %p107, %p108
    %p110 = scmp.ne.s32.totalorder %s99, %s100
    %p111 = scmp.eq.s32.totalorder %s14, 0
    %p112 = por %p110, %p111
    %p113 = scmp.ne.s32.totalorder %s99, %s100
    %p114 = scmp.eq.s32.totalorder %s15, 7
    %p115 = por %p113, %p114
    %p117 = scmp.ne.s32.totalorder %s100, %s116
    %p118 = scmp.eq.s32.totalorder %s15, 0
    %p119 = por %p117, %p118
    %s120 = ssub.s32 %s16, %s35
    %s121 = ssub.s32 %s17, %s31
    %s122 = sor.u32 %s120, %s121
    %p123 = scmp.eq.s32.totalorder %s122, 0
    %s125 = sadd.s32 %s124, 1
    %s126 = scalar_select %p123, %s124, %s125
    %p129 = pneg %p123
    %p130 = scmp.eq.s32.totalorder %s9, 7
    %p131 = por %p129, %p130
    %p132 = scmp.ne.s32.totalorder %s124, %s127
    %p133 = scmp.eq.s32.totalorder %s9, 0
    %p134 = por %p132, %p133
    %p135 = scmp.ne.s32.totalorder %s124, %s127
    %p136 = scmp.eq.s32.totalorder %s14, 7
    %p137 = por %p135, %p136
    %p138 = scmp.ne.s32.totalorder %s127, %s128
    %p139 = scmp.eq.s32.totalorder %s14, 0
    %p140 = por %p138, %p139
    %p141 = scmp.ne.s32.totalorder %s127, %s128
    %p142 = scmp.eq.s32.totalorder %s15, 7
    %p143 = por %p141, %p142
    %p145 = scmp.ne.s32.totalorder %s128, %s144
    %p146 = scmp.eq.s32.totalorder %s15, 0
    %p147 = por %p145, %p146
    %p148 = scmp.le.s32.totalorder 1, %s9
    %p149 = scmp.lt.s32.totalorder %s9, 9
    %p150 = pnand %p148, %p149
    %p151 = pneg %p150
    // Predicated region
    $region9: #{image_encoder_forward.17} parent=5 // pred_check
      _
    $region10: #{image_encoder_forward.17} parent=5 // pred_check_branch
      %153 = sbr.rel (%p150) target = $region12
    $region11: #{image_encoder_forward.17} parent=5 // pred_region
      %s154 = ssub.s32 %s9, 1
    $region12: #{image_encoder_forward.17} parent=5 // pred_fallthru
      _
    %p155 = scmp.lt.s32.totalorder %s9, 8
    // Predicated region
    $region13: #{image_encoder_forward.17} parent=5 // pred_check
      %p156 = pneg %p155
    $region14: #{image_encoder_forward.17} parent=5 // pred_check_branch
      %158 = sbr.rel (%p156) target = $region16
    $region15: #{image_encoder_forward.17} parent=5 // pred_region
      // Predicated region
      $region17: #{image_encoder_forward.17} parent=15 // pred_check
        %p159 = pneg %p50
      $region18: #{image_encoder_forward.17} parent=15 // pred_check_branch
        %161 = sbr.rel (%p159) target = $region20
      $region19: #{image_encoder_forward.17} parent=15 // pred_region
        %p162 = scmp.lt.s32.totalorder %s16, 7
        %s163 = scalar_select %p162, %s16, 7
        %p164 = scmp.lt.s32.totalorder %s17, 0
        %s165 = scalar_select %p164, %s17, 0
        %s166 = sadd.s32 %s165, %s163
        %s167 = smul.addr %s166, 4
        %s168 = scalar_lea.vmem %s0, %s167
      $region20: #{image_encoder_forward.17} parent=15 // pred_fallthru
        _
      // Predicated region
      $region21: #{image_encoder_forward.17} parent=15 // pred_check
        %p169 = pneg %p78
      $region22: #{image_encoder_forward.17} parent=15 // pred_check_branch
        %171 = sbr.rel (%p169) target = $region24
      $region23: #{image_encoder_forward.17} parent=15 // pred_region
        %p172 = scmp.lt.s32.totalorder %s16, 7
        %s173 = scalar_select %p172, %s16, 7
        %p174 = scmp.lt.s32.totalorder %s18, 0
        %s175 = scalar_select %p174, %s18, 0
        %s176 = sadd.s32 %s175, %s173
        %s177 = smul.addr %s176, 4
        %s178 = scalar_lea.vmem %s1, %s177
      $region24: #{image_encoder_forward.17} parent=15 // pred_fallthru
        _
      // Predicated region
      $region25: #{image_encoder_forward.17} parent=15 // pred_check
        %p179 = pneg %p106
      $region26: #{image_encoder_forward.17} parent=15 // pred_check_branch
        %181 = sbr.rel (%p179) target = $region28
      $region27: #{image_encoder_forward.17} parent=15 // pred_region
        %p182 = scmp.lt.s32.totalorder %s16, 7
        %s183 = scalar_select %p182, %s16, 7
        %p184 = scmp.lt.s32.totalorder %s18, 0
        %s185 = scalar_select %p184, %s18, 0
        %s186 = sadd.s32 %s185, %s183
        %s187 = smul.addr %s186, 4
        %s188 = scalar_lea.vmem %s2, %s187
      $region28: #{image_encoder_forward.17} parent=15 // pred_fallthru
        _
    $region16: #{image_encoder_forward.17} parent=5 // pred_fallthru
      _
    %p189 = scmp.le.s32.totalorder 1, %s9
    %p190 = scmp.lt.s32.totalorder %s9, 9
    %p191 = pnand %p189, %p190
    %p192 = pneg %p191
    // Predicated region
    $region29: #{image_encoder_forward.17} parent=5 // pred_check
      _
    $region30: #{image_encoder_forward.17} parent=5 // pred_check_branch
      %194 = sbr.rel (%p191) target = $region32
    $region31: #{image_encoder_forward.17} parent=5 // pred_region
      %s195 = ssub.s32 %s9, 1
      %p196 = scmp.lt.s32.totalorder %s19, 7
      %s197 = scalar_select %p196, %s19, 7
      %p198 = scmp.lt.s32.totalorder %s20, 0
      %s199 = scalar_select %p198, %s20, 0
      %s200 = sadd.s32 %s199, %s197
      %s201 = smul.addr %s200, 4
      %s202 = scalar_lea.vmem %s0, %s201
      %p203 = pneg %p56
      %p204 = pneg %p53
      %p205 = scmp.lt.s32.totalorder %s19, 7
      %s206 = scalar_select %p205, %s19, 7
      %p207 = scmp.lt.s32.totalorder %s21, 0
      %s208 = scalar_select %p207, %s21, 0
      %s209 = sadd.s32 %s208, %s206
      %s210 = smul.addr %s209, 4
      %s211 = scalar_lea.vmem %s1, %s210
      %p212 = pneg %p84
      %p213 = pneg %p81
      %p214 = scmp.lt.s32.totalorder %s19, 7
      %s215 = scalar_select %p214, %s19, 7
      %p216 = scmp.lt.s32.totalorder %s21, 0
      %s217 = scalar_select %p216, %s21, 0
      %s218 = sadd.s32 %s217, %s215
      %s219 = smul.addr %s218, 4
      %s220 = scalar_lea.vmem %s2, %s219
      %p221 = pneg %p112
      %p222 = pneg %p109
      %p223 = pneg %p140
      %p224 = pneg %p137
      %p225 = scmp.lt.s32.totalorder %s19, 7
      %s226 = scalar_select %p225, %s19, 7
      %p227 = scmp.lt.s32.totalorder %s20, 0
      %s228 = scalar_select %p227, %s20, 0
      %s229 = sadd.s32 %s228, %s226
      %s230 = smul.addr %s229, 4
      %s231 = scalar_lea.vmem %s3, %s230
      %p232 = scmp.lt.s32.totalorder %s19, 7
      %s233 = scalar_select %p232, %s19, 7
      %p234 = scmp.lt.s32.totalorder %s20, 0
      %s235 = scalar_select %p234, %s20, 0
      %s236 = sadd.s32 %s235, %s233
      %s237 = smul.addr %s236, 4
      %s238 = scalar_lea.vmem %s0, %s237
      %p239 = scmp.lt.s32.totalorder %s19, 7
      %s240 = scalar_select %p239, %s19, 7
      %p241 = scmp.lt.s32.totalorder %s21, 0
      %s242 = scalar_select %p241, %s21, 0
      %s243 = sadd.s32 %s242, %s240
      %s244 = smul.addr %s243, 4
      %s245 = scalar_lea.vmem %s1, %s244
      %p246 = scmp.lt.s32.totalorder %s19, 7
      %s247 = scalar_select %p246, %s19, 7
      %p248 = scmp.lt.s32.totalorder %s21, 0
      %s249 = scalar_select %p248, %s21, 0
      %s250 = sadd.s32 %s249, %s247
      %s251 = smul.addr %s250, 4
      %s252 = scalar_lea.vmem %s2, %s251
      %p253 = scmp.lt.s32.totalorder %s19, 7
      %s254 = scalar_select %p253, %s19, 7
      %p255 = scmp.lt.s32.totalorder %s20, 0
      %s256 = scalar_select %p255, %s20, 0
      %s257 = sadd.s32 %s256, %s254
      %s258 = smul.addr %s257, 4
      %s259 = scalar_lea.vmem %s3, %s258
      %p261 = scmp.eq.s32.totalorder %s21, 0
      // Predicated region
      $region33: #{image_encoder_forward.17} parent=31 // pred_check
        %p262 = pneg %p261
      $region34: #{image_encoder_forward.17} parent=31 // pred_check_branch
        %264 = sbr.rel (%p262) target = $region36
      $region35: #{image_encoder_forward.17} parent=31 // pred_region
        %vm265 = vcmask 7168
        %266 = vst.msk [vmem:[#allocation2] sm:$0xff] %vm265, -inf
        %267 = vst.msk [vmem:[#allocation3] sm:$0xff] %vm265, 0.0
        %vm268 = vcmask 64512
        %269 = vst.msk [vmem:[#allocation4] sm:$0xff] %vm268, 0.0
      $region36: #{image_encoder_forward.17} parent=31 // pred_fallthru
        _
      %v270 = vld [vmem:[%s238] sm:$0xf]
      %v271 = vld [vmem:[%s245] sm:$0xf]
      %v272 = vld [vmem:[%s252] sm:$0xf]
      %vm273 = vcmask 64512
      %v275 = vsel %vm273, %v270, 0
      %v278 = vsel %vm273, %v271, 0
      %280 = vmatprep.subr.bf16.mxu0 0
      %281 = vmatpush1.bf16.xpose.msra.mxu0 %v278
      %282 = vmatprep.subr.bf16.mxu0 0
      %283 = vmatpush1.bf16.xpose.msra.mxu0 0
      %284 = vmatprep.subr.bf16.mxu0 0
      %285 = vmatpush1.bf16.xpose.msra.mxu0 0
      %286 = vmatprep.subr.bf16.mxu0 0
      %287 = vmatpush1.bf16.xpose.msra.mxu0 0
      %288 = vmatprep.subr.bf16.mxu0 0
      %289 = vmatpush1.bf16.xpose.msra.mxu0 0
      %290 = vmatprep.subr.bf16.mxu0 0
      %291 = vmatpush1.bf16.xpose.msra.mxu0 0
      %292 = vmatprep.subr.bf16.mxu0 0
      %293 = vmatpush1.bf16.xpose.msra.mxu0 0
      %294 = vmatprep.subr.bf16.mxu0 0
      %295 = vmatpush1.bf16.xpose.msra.mxu0 0
      %296 = vmatprep.subr.bf16.mxu0 0
      %297 = vmatpush1.bf16.xpose.msra.mxu0 0
      %298 = vmatprep.subr.bf16.mxu0 0
      %299 = vmatpush1.bf16.xpose.msra.mxu0 0
      %300 = vmatprep.subr.bf16.mxu0 0
      %301 = vmatpush1.bf16.xpose.msra.mxu0 0
      %302 = vmatprep.subr.bf16.mxu0 0
      %303 = vmatpush1.bf16.xpose.msra.mxu0 0
      %304 = vmatprep.subr.bf16.mxu0 0
      %305 = vmatpush1.bf16.xpose.msra.mxu0 0
      %306 = vmatprep.subr.bf16.mxu0 0
      %307 = vmatpush1.bf16.xpose.msra.mxu0 0
      %308 = vmatprep.subr.bf16.mxu0 0
      %309 = vmatpush1.bf16.xpose.msra.mxu0 0
      %310 = vmatprep.subr.bf16.mxu0 0
      %311 = vmatpush1.bf16.xpose.msra.mxu0 0
      %312 = vmatprep.mubr.bf16.mxu0 0
      %313 = vmatmul.mubr.bf16.gmra.mrb[0].mxu0 %v275
      %v314 = vpop.f32.mrb[0].mxu0
      %v315 = vadd.f32 0.0, %v314
      %v316 = vpop.f32.mrb[0].mxu0
      %v317 = vpop.f32.mrb[0].mxu0
      %v318 = vpop.f32.mrb[0].mxu0
      %319 = vdwg.mxu0
      %v320 = vmul.f32 %v315, 0.35355338
      %v321 = vld [vmem:[#allocation2] sm:$0xff]
      %v322 = vsel %vm273, %v320, -inf
      %323 = vmax.xlane.f32.xlu0 %v322
      %v324 = vpop.xlane.xlu0 %323
      %v325 = vmax.f32 %v321, %v324
      %v326 = vsub.f32 %v321, %v325
      %v327 = vmul.f32 %v326, 1.442695
      %v328 = vpow.pop %v327
      %330 = vset.pattern.permute.xlu0 0
      %331 = vperm.xlu0 %330, %v325
      %v332 = vpop.permute.xlu0 %331
      %v334 = vsub.f32 %v320, %v332
      %v335 = vmul.f32 %v334, 1.442695
      %v336 = vpow.pop %v335
      %v337 = vld [vmem:[#allocation3] sm:$0xff]
      %v338 = vmul.f32 %v328, %v337
      %v339 = vsel %vm273, %v336, 0.0
      %340 = vadd.xlane.f32.xlu0 %v339
      %v341 = vpop.xlane.xlu0 %340
      %v342 = vadd.f32 %v338, %v341
      %vm343 = vcmask 7168
      %344 = vst.msk [vmem:[#allocation3] sm:$0xff] %vm343, %v342
      %v345 = vld [vmem:[#allocation4] sm:$0xff]
      %347 = vset.pattern.permute.xlu0 0
      %348 = vperm.xlu0 %347, %v328
      %v349 = vpop.permute.xlu0 %348
      %v351 = vmul.f32 %v349, %v345
      %v352 = vpack.c.bf16 %v336, %v336
      %v354 = vsel %vm273, %v352, 0
      %vm356 = vcmask 1043456
      %v358 = vsel %vm356, %v272, 0
      %360 = vmatprep.subr.bf16.mxu0 0
      %361 = vmatpush1.bf16.msra.mxu0 %v358
      %362 = vmatprep.subr.bf16.mxu0 0
      %363 = vmatpush1.bf16.msra.mxu0 0
      %364 = vmatprep.subr.bf16.mxu0 0
      %365 = vmatpush1.bf16.msra.mxu0 0
      %366 = vmatprep.subr.bf16.mxu0 0
      %367 = vmatpush1.bf16.msra.mxu0 0
      %368 = vmatprep.subr.bf16.mxu0 0
      %369 = vmatpush1.bf16.msra.mxu0 0
      %370 = vmatprep.subr.bf16.mxu0 0
      %371 = vmatpush1.bf16.msra.mxu0 0
      %372 = vmatprep.subr.bf16.mxu0 0
      %373 = vmatpush1.bf16.msra.mxu0 0
      %374 = vmatprep.subr.bf16.mxu0 0
      %375 = vmatpush1.bf16.msra.mxu0 0
      %376 = vmatprep.subr.bf16.mxu0 0
      %377 = vmatpush1.bf16.msra.mxu0 0
      %378 = vmatprep.subr.bf16.mxu0 0
      %379 = vmatpush1.bf16.msra.mxu0 0
      %380 = vmatprep.subr.bf16.mxu0 0
      %381 = vmatpush1.bf16.msra.mxu0 0
      %382 = vmatprep.subr.bf16.mxu0 0
      %383 = vmatpush1.bf16.msra.mxu0 0
      %384 = vmatprep.subr.bf16.mxu0 0
      %385 = vmatpush1.bf16.msra.mxu0 0
      %386 = vmatprep.subr.bf16.mxu0 0
      %387 = vmatpush1.bf16.msra.mxu0 0
      %388 = vmatprep.subr.bf16.mxu0 0
      %389 = vmatpush1.bf16.msra.mxu0 0
      %390 = vmatprep.subr.bf16.mxu0 0
      %391 = vmatpush1.bf16.msra.mxu0 0
      %392 = vmatprep.mubr.bf16.mxu0 0
      %393 = vmatmul.mubr.bf16.gmra.mrb[0].mxu0 %v354
      %v394 = vpop.f32.mrb[0].mxu0
      %v395 = vadd.f32 0.0, %v394
      %v396 = vpop.f32.mrb[0].mxu0
      %v397 = vpop.f32.mrb[0].mxu0
      %v398 = vpop.f32.mrb[0].mxu0
      %399 = vdwg.mxu0
      %v400 = vadd.f32 %v351, %v395
      %401 = vst.msk [vmem:[#allocation4] sm:$0xff] %vm273, %v400
      %402 = vst.msk [vmem:[#allocation2] sm:$0xff] %vm343, %v325
      // Predicated region
      $region37: #{image_encoder_forward.17} parent=31 // pred_check
        %p403 = pneg %p261
      $region38: #{image_encoder_forward.17} parent=31 // pred_check_branch
        %405 = sbr.rel (%p403) target = $region40
      $region39: #{image_encoder_forward.17} parent=31 // pred_region
        %v406 = vld [vmem:[#allocation4] sm:$0xff]
        %v407 = vld [vmem:[#allocation3] sm:$0xff]
        %v408 = vrcp.pop %v407
        %410 = vset.pattern.permute.xlu0 0
        %411 = vperm.xlu0 %410, %v408
        %v412 = vpop.permute.xlu0 %411
        %v414 = vmul.f32 %v406, %v412
        %v415 = vpack.c.bf16 %v414, %v414
        %vm416 = vcmask 60416
        %417 = vst.msk [vmem:[%s259] sm:$0xf] %vm416, %v415
      $region40: #{image_encoder_forward.17} parent=31 // pred_fallthru
        _
      %p418 = scmp.lt.s32.totalorder %s19, 7
      %s419 = scalar_select %p418, %s19, 7
      %p420 = scmp.lt.s32.totalorder %s20, 0
      %s421 = scalar_select %p420, %s20, 0
      %s422 = sadd.s32 %s421, %s419
      %s423 = smul.addr %s422, 4
      %s424 = scalar_lea.vmem %s3, %s423
      // Predicated region
      $region41: #{image_encoder_forward.17} parent=31 // pred_check
        %p425 = pneg %p137
      $region42: #{image_encoder_forward.17} parent=31 // pred_check_branch
        %427 = sbr.rel (%p425) target = $region44
      $region43: #{image_encoder_forward.17} parent=31 // pred_region
        _
      $region44: #{image_encoder_forward.17} parent=31 // pred_fallthru
        _
    $region32: #{image_encoder_forward.17} parent=5 // pred_fallthru
      _
    %p428 = scmp.le.s32.totalorder 2, %s9
    // Predicated region
    $region45: #{image_encoder_forward.17} parent=5 // pred_check
      %p429 = pneg %p428
    $region46: #{image_encoder_forward.17} parent=5 // pred_check_branch
      %431 = sbr.rel (%p429) target = $region48
    $region47: #{image_encoder_forward.17} parent=5 // pred_region
      %s432 = ssub.s32 %s9, 2
      // Predicated region
      $region49: #{image_encoder_forward.17} parent=47 // pred_check
        %p433 = pneg %p143
      $region50: #{image_encoder_forward.17} parent=47 // pred_check_branch
        %435 = sbr.rel (%p433) target = $region52
      $region51: #{image_encoder_forward.17} parent=47 // pred_region
        %p436 = scmp.lt.s32.totalorder %s22, 7
        %s437 = scalar_select %p436, %s22, 7
        %p438 = scmp.lt.s32.totalorder %s23, 0
        %s439 = scalar_select %p438, %s23, 0
        %s440 = sadd.s32 %s439, %s437
        %s441 = smul.addr %s440, 4
        %s442 = scalar_lea.vmem %s3, %s441
      $region52: #{image_encoder_forward.17} parent=47 // pred_fallthru
        _
    $region48: #{image_encoder_forward.17} parent=5 // pred_fallthru
      _
  $region6: #{image_encoder_forward.17} parent=0 // loop_footer
    %s13 = sadd.s32 1, %s9
  $region7: #{image_encoder_forward.17} parent=0 // loop_footer_branch
    %8 = sbr.rel target = $region3
  $region8: #{image_encoder_forward.17} parent=0 // loop_exit
    _

// kernel: image_encoder_forward.18
$region0: #{image_encoder_forward.18}
  #allocation0 [shape = 'u32[]', space=smem, size = 0x4, offset = 0x4, fixed_abs, tag = 'smem constant byte address 0x4 - core index']
  #allocation1 [shape = 'u32[144,128]{1,0:T(1,128)}', space=vmem, size = 0x12000, scoped, tag = 'internal scratch']
  %s0 = inlined_call_operand.vmem [shape: f32[16,32], index: 0, kind: input, shape index: {}]
  %s1 = inlined_call_operand.vmem [shape: bf16[16,32], index: 1, kind: input, shape index: {}]
  %s2 = inlined_call_operand.vmem [shape: f32[1,32], index: 2, kind: input, shape index: {}]
  %s3 = inlined_call_operand.vmem [shape: f32[1,32], index: 3, kind: input, shape index: {}]
  %s4 = inlined_call_operand.vmem [shape: bf16[32,128], index: 4, kind: input, shape index: {}]
  %s5 = inlined_call_operand.vmem [shape: f32[1,128], index: 5, kind: input, shape index: {}]
  %s6 = inlined_call_operand.vmem [shape: bf16[128,32], index: 6, kind: input, shape index: {}]
  %s7 = inlined_call_operand.vmem [shape: f32[1,32], index: 7, kind: input, shape index: {}]
  %s8 = inlined_call_operand.vmem [shape: f32[16,32], index: 8, kind: output, shape index: {}]
  %s9 = sld [smem:[#allocation0]]
  $region42: #{image_encoder_forward.18} parent=0
    _
  %s11 = ssub.s32 1, %s9
  %s12 = scalar_select 0, %s11, %s9
  // Predicated region
  $region2: #{image_encoder_forward.18} parent=0 // pred_check
    _
  $region3: #{image_encoder_forward.18} parent=0 // pred_check_branch
    %14 = sbr.rel (0) target = $region5
  $region4: #{image_encoder_forward.18} parent=0 // pred_region
    _
  $region5: #{image_encoder_forward.18} parent=0 // pred_fallthru
    _
  // Predicated region
  $region6: #{image_encoder_forward.18} parent=0 // pred_check
    _
  $region7: #{image_encoder_forward.18} parent=0 // pred_check_branch
    %16 = sbr.rel (0) target = $region9
  $region8: #{image_encoder_forward.18} parent=0 // pred_region
    _
  $region9: #{image_encoder_forward.18} parent=0 // pred_fallthru
    _
  // Predicated region
  $region10: #{image_encoder_forward.18} parent=0 // pred_check
    _
  $region11: #{image_encoder_forward.18} parent=0 // pred_check_branch
    %18 = sbr.rel (0) target = $region13
  $region12: #{image_encoder_forward.18} parent=0 // pred_region
    _
  $region13: #{image_encoder_forward.18} parent=0 // pred_fallthru
    _
  // Predicated region
  $region14: #{image_encoder_forward.18} parent=0 // pred_check
    _
  $region15: #{image_encoder_forward.18} parent=0 // pred_check_branch
    %20 = sbr.rel (0) target = $region17
  $region16: #{image_encoder_forward.18} parent=0 // pred_region
    _
  $region17: #{image_encoder_forward.18} parent=0 // pred_fallthru
    _
  // Predicated region
  $region18: #{image_encoder_forward.18} parent=0 // pred_check
    _
  $region19: #{image_encoder_forward.18} parent=0 // pred_check_branch
    %22 = sbr.rel (0) target = $region21
  $region20: #{image_encoder_forward.18} parent=0 // pred_region
    _
  $region21: #{image_encoder_forward.18} parent=0 // pred_fallthru
    _
  // Predicated region
  $region22: #{image_encoder_forward.18} parent=0 // pred_check
    _
  $region23: #{image_encoder_forward.18} parent=0 // pred_check_branch
    %24 = sbr.rel (0) target = $region25
  $region24: #{image_encoder_forward.18} parent=0 // pred_region
    _
  $region25: #{image_encoder_forward.18} parent=0 // pred_fallthru
    _
  // Predicated region
  $region26: #{image_encoder_forward.18} parent=0 // pred_check
    _
  $region27: #{image_encoder_forward.18} parent=0 // pred_check_branch
    %26 = sbr.rel (0) target = $region29
  $region28: #{image_encoder_forward.18} parent=0 // pred_region
    _
  $region29: #{image_encoder_forward.18} parent=0 // pred_fallthru
    _
  // Predicated region
  $region30: #{image_encoder_forward.18} parent=0 // pred_check
    _
  $region31: #{image_encoder_forward.18} parent=0 // pred_check_branch
    %28 = sbr.rel (0) target = $region33
  $region32: #{image_encoder_forward.18} parent=0 // pred_region
    _
  $region33: #{image_encoder_forward.18} parent=0 // pred_fallthru
    _
  %v30 = vld [vmem:[%s0] sm:$0xff]
  %v31 = vld [vmem:[%s0 + $0x8] sm:$0xff]
  %v32 = vld [vmem:[%s1] sm:$0xf]
  %v33 = vld [vmem:[%s1 + $0x4] sm:$0xf]
  %v34 = vunpack.c.l.bf16 %v32
  %v35 = vunpack.c.l.bf16 %v33
  %v36 = vadd.f32 %v30, %v34
  %v37 = vadd.f32 %v31, %v35
  %v38 = vld [vmem:[%s2] sm:$0x1]
  %v39 = vld [vmem:[%s3] sm:$0x1]
  %v40 = vld [vmem:[%s4] sm:$0xf]
  %v41 = vld [vmem:[%s4 + $0x4] sm:$0xf]
  %v42 = vld [vmem:[%s4 + $0x8] sm:$0xf]
  %v43 = vld [vmem:[%s4 + $0xc] sm:$0xf]
  %v44 = vld [vmem:[%s5] sm:$0x1]
  %v45 = vld [vmem:[%s6] sm:$0xf]
  %v46 = vld [vmem:[%s6 + $0x4] sm:$0xf]
  %v47 = vld [vmem:[%s6 + $0x8] sm:$0xf]
  %v48 = vld [vmem:[%s6 + $0xc] sm:$0xf]
  %v49 = vld [vmem:[%s6 + $0x10] sm:$0xf]
  %v50 = vld [vmem:[%s6 + $0x14] sm:$0xf]
  %v51 = vld [vmem:[%s6 + $0x18] sm:$0xf]
  %v52 = vld [vmem:[%s6 + $0x1c] sm:$0xf]
  %v53 = vld [vmem:[%s6 + $0x20] sm:$0xf]
  %v54 = vld [vmem:[%s6 + $0x24] sm:$0xf]
  %v55 = vld [vmem:[%s6 + $0x28] sm:$0xf]
  %v56 = vld [vmem:[%s6 + $0x2c] sm:$0xf]
  %v57 = vld [vmem:[%s6 + $0x30] sm:$0xf]
  %v58 = vld [vmem:[%s6 + $0x34] sm:$0xf]
  %v59 = vld [vmem:[%s6 + $0x38] sm:$0xf]
  %v60 = vld [vmem:[%s6 + $0x3c] sm:$0xf]
  %v61 = vld [vmem:[%s7] sm:$0x1]
  %vm62 = vcmask 261120
  %v63 = vsel %vm62, %v36, 0.0
  %64 = vadd.xlane.f32.xlu0 %v63
  %v65 = vpop.xlane.xlu0 %64
  %v66 = vsel %vm62, %v37, 0.0
  %67 = vadd.xlane.f32.xlu0 %v66
  %v68 = vpop.xlane.xlu0 %67
  %v69 = vrcp.pop 32.0
  %v70 = vmul.f32 %v65, %v69
  %v71 = vmul.f32 %v68, %v69
  %v72 = vsub.f32 %v36, %v70
  %v73 = vsub.f32 %v37, %v71
  %v74 = vmul.f32 %v72, %v72
  %v75 = vmul.f32 %v73, %v73
  %v76 = vsel %vm62, %v74, 0.0
  %77 = vadd.xlane.f32.xlu0 %v76
  %v78 = vpop.xlane.xlu0 %77
  %v79 = vsel %vm62, %v75, 0.0
  %80 = vadd.xlane.f32.xlu0 %v79
  %v81 = vpop.xlane.xlu0 %80
  %v82 = vmul.f32 %v78, %v69
  %v83 = vmul.f32 %v81, %v69
  %v84 = vadd.f32 %v82, 1e-05
  %v85 = vadd.f32 %v83, 1e-05
  %v86 = vrsqrt.pop %v84
  %v87 = vrsqrt.pop %v85
  %v88 = vmul.f32 %v72, %v86
  %v89 = vmul.f32 %v73, %v87
  %v91 = vlaneseq
  %v92 = vshrl.u32 %v91, 7
  %v93 = vsub.s32 0, %v92
  %v94 = vrot.slane %v38, %v93
  %v96 = vmul.f32 %v88, %v94
  %v97 = vmul.f32 %v89, %v94
  %v99 = vlaneseq
  %v100 = vshrl.u32 %v99, 7
  %v101 = vsub.s32 0, %v100
  %v102 = vrot.slane %v39, %v101
  %v104 = vadd.f32 %v96, %v102
  %v105 = vadd.f32 %v97, %v102
  %v106 = vpack.c.bf16 %v105, %v104
  %v108 = vlaneseq
  %v109 = vshrl.u32 %v108, 7
  %v110 = vsub.s32 0, %v109
  %v111 = vrot.slane %v44, %v110
  %v117 = vunpack.c.l.b16 %v40
  %v118 = vunpack.c.l.b16 %v41
  %v119 = vunpack.c.l.b16 %v42
  %v120 = vunpack.c.l.b16 %v43
  %v121 = vpack.c.b16 %v118, %v117
  %v122 = vpack.c.b16 %v120, %v119
  %v126 = vsel %vm62, %v106, 0
  %128 = vmatprep.subr.bf16.mxu0 0
  %129 = vmatpush1.bf16.msra.mxu0 %v121
  %130 = vmatprep.subr.bf16.mxu0 0
  %131 = vmatpush1.bf16.msra.mxu0 %v122
  %132 = vmatprep.subr.bf16.mxu0 0
  %133 = vmatpush1.bf16.msra.mxu0 0
  %134 = vmatprep.subr.bf16.mxu0 0
  %135 = vmatpush1.bf16.msra.mxu0 0
  %136 = vmatprep.subr.bf16.mxu0 0
  %137 = vmatpush1.bf16.msra.mxu0 0
  %138 = vmatprep.subr.bf16.mxu0 0
  %139 = vmatpush1.bf16.msra.mxu0 0
  %140 = vmatprep.subr.bf16.mxu0 0
  %141 = vmatpush1.bf16.msra.mxu0 0
  %142 = vmatprep.subr.bf16.mxu0 0
  %143 = vmatpush1.bf16.msra.mxu0 0
  %144 = vmatprep.subr.bf16.mxu0 0
  %145 = vmatpush1.bf16.msra.mxu0 0
  %146 = vmatprep.subr.bf16.mxu0 0
  %147 = vmatpush1.bf16.msra.mxu0 0
  %148 = vmatprep.subr.bf16.mxu0 0
  %149 = vmatpush1.bf16.msra.mxu0 0
  %150 = vmatprep.subr.bf16.mxu0 0
  %151 = vmatpush1.bf16.msra.mxu0 0
  %152 = vmatprep.subr.bf16.mxu0 0
  %153 = vmatpush1.bf16.msra.mxu0 0
  %154 = vmatprep.subr.bf16.mxu0 0
  %155 = vmatpush1.bf16.msra.mxu0 0
  %156 = vmatprep.subr.bf16.mxu0 0
  %157 = vmatpush1.bf16.msra.mxu0 0
  %158 = vmatprep.subr.bf16.mxu0 0
  %159 = vmatpush1.bf16.msra.mxu0 0
  %160 = vmatprep.mubr.bf16.mxu0 0
  %161 = vmatmul.mubr.bf16.gmra.mrb[0].mxu0 %v126
  %v162 = vpop.f32.mrb[0].mxu0
  %v163 = vadd.f32 %v111, %v162
  %v164 = vpop.f32.mrb[0].mxu0
  %v165 = vpop.f32.mrb[0].mxu0
  %v166 = vadd.f32 %v111, %v165
  %v167 = vpop.f32.mrb[0].mxu0
  %168 = vdwg.mxu0
  %v169 = vmul.f32 %v163, 0.5
  %v170 = vmul.f32 %v166, 0.5
  %v171 = vmul.f32 %v163, 0.70710677
  %v172 = vmul.f32 %v166, 0.70710677
  %vm173 = vcmp.ge.f32.partialorder %v171, 0.0
  %vm174 = vcmp.ge.f32.partialorder %v172, 0.0
  %v175 = vsel %vm173, 1.0, -1.0
  %v176 = vsel %vm174, 1.0, -1.0
  %v177 = vand.u32 2147483647, %v171
  %v178 = vand.u32 2147483647, %v172
  %v179 = vmul.f32 %v177, 0.3275911
  %v180 = vmul.f32 %v178, 0.3275911
  %v181 = vadd.f32 %v179, 1.0
  %v182 = vadd.f32 %v180, 1.0
  %v183 = vrcp.pop %v181
  %v184 = vmul.f32 1.0, %v183
  %v185 = vrcp.pop %v182
  %v186 = vmul.f32 1.0, %v185
  %v187 = vmul.f32 %v184, 1.0614054
  %v188 = vmul.f32 %v186, 1.0614054
  %v189 = vadd.f32 %v187, -1.4531521
  %v190 = vadd.f32 %v188, -1.4531521
  %v191 = vmul.f32 %v189, %v184
  %v192 = vmul.f32 %v190, %v186
  %v193 = vadd.f32 %v191, 1.4214138
  %v194 = vadd.f32 %v192, 1.4214138
  %v195 = vmul.f32 %v193, %v184
  %v196 = vmul.f32 %v194, %v186
  %v197 = vadd.f32 %v195, -0.28449672
  %v198 = vadd.f32 %v196, -0.28449672
  %v199 = vmul.f32 %v197, %v184
  %v200 = vmul.f32 %v198, %v186
  %v201 = vadd.f32 %v199, 0.2548296
  %v202 = vadd.f32 %v200, 0.2548296
  %v203 = vmul.f32 %v201, %v184
  %v204 = vmul.f32 %v202, %v186
  %v205 = vsub.f32 0.0, %v177
  %v206 = vsub.f32 0.0, %v178
  %v207 = vmul.f32 %v205, %v177
  %v208 = vmul.f32 %v206, %v178
  %v209 = vmul.f32 %v207, 1.442695
  %v210 = vpow.pop %v209
  %v211 = vmul.f32 %v208, 1.442695
  %v212 = vpow.pop %v211
  %v213 = vmul.f32 %v203, %v210
  %v214 = vmul.f32 %v204, %v212
  %v215 = vsub.f32 1.0, %v213
  %v216 = vsub.f32 1.0, %v214
  %v217 = vmul.f32 %v175, %v215
  %v218 = vmul.f32 %v176, %v216
  %v219 = vadd.f32 %v217, 1.0
  %v220 = vadd.f32 %v218, 1.0
  %v221 = vmul.f32 %v169, %v219
  %v222 = vmul.f32 %v170, %v220
  %v223 = vpack.c.bf16 %v222, %v221
  %v240 = vunpack.c.l.b16 %v45
  %v241 = vunpack.c.l.b16 %v46
  %v242 = vunpack.c.l.b16 %v47
  %v243 = vunpack.c.l.b16 %v48
  %v244 = vunpack.c.l.b16 %v49
  %v245 = vunpack.c.l.b16 %v50
  %v246 = vunpack.c.l.b16 %v51
  %v247 = vunpack.c.l.b16 %v52
  %v248 = vunpack.c.l.b16 %v53
  %v249 = vunpack.c.l.b16 %v54
  %v250 = vunpack.c.l.b16 %v55
  %v251 = vunpack.c.l.b16 %v56
  %v252 = vunpack.c.l.b16 %v57
  %v253 = vunpack.c.l.b16 %v58
  %v254 = vunpack.c.l.b16 %v59
  %v255 = vunpack.c.l.b16 %v60
  %v256 = vpack.c.b16 %v241, %v240
  %v257 = vpack.c.b16 %v243, %v242
  %v258 = vpack.c.b16 %v245, %v244
  %v259 = vpack.c.b16 %v247, %v246
  %v260 = vpack.c.b16 %v249, %v248
  %v261 = vpack.c.b16 %v251, %v250
  %v262 = vpack.c.b16 %v253, %v252
  %v263 = vpack.c.b16 %v255, %v254
  %272 = vmatprep.subr.bf16.mxu0 0
  %273 = vmatpush1.bf16.msra.mxu0 %v256
  %274 = vmatprep.subr.bf16.mxu0 0
  %275 = vmatpush1.bf16.msra.mxu0 %v257
  %276 = vmatprep.subr.bf16.mxu0 0
  %277 = vmatpush1.bf16.msra.mxu0 %v258
  %278 = vmatprep.subr.bf16.mxu0 0
  %279 = vmatpush1.bf16.msra.mxu0 %v259
  %280 = vmatprep.subr.bf16.mxu0 0
  %281 = vmatpush1.bf16.msra.mxu0 %v260
  %282 = vmatprep.subr.bf16.mxu0 0
  %283 = vmatpush1.bf16.msra.mxu0 %v261
  %284 = vmatprep.subr.bf16.mxu0 0
  %285 = vmatpush1.bf16.msra.mxu0 %v262
  %286 = vmatprep.subr.bf16.mxu0 0
  %287 = vmatpush1.bf16.msra.mxu0 %v263
  %288 = vmatprep.subr.bf16.mxu0 0
  %289 = vmatpush1.bf16.msra.mxu0 0
  %290 = vmatprep.subr.bf16.mxu0 0
  %291 = vmatpush1.bf16.msra.mxu0 0
  %292 = vmatprep.subr.bf16.mxu0 0
  %293 = vmatpush1.bf16.msra.mxu0 0
  %294 = vmatprep.subr.bf16.mxu0 0
  %295 = vmatpush1.bf16.msra.mxu0 0
  %296 = vmatprep.subr.bf16.mxu0 0
  %297 = vmatpush1.bf16.msra.mxu0 0
  %298 = vmatprep.subr.bf16.mxu0 0
  %299 = vmatpush1.bf16.msra.mxu0 0
  %300 = vmatprep.subr.bf16.mxu0 0
  %301 = vmatpush1.bf16.msra.mxu0 0
  %302 = vmatprep.subr.bf16.mxu0 0
  %303 = vmatpush1.bf16.msra.mxu0 0
  %304 = vmatprep.mubr.bf16.mxu0 0
  %305 = vmatmul.mubr.bf16.gmra.mrb[0].mxu0 %v223
  %v306 = vpop.f32.mrb[0].mxu0
  %v307 = vadd.f32 0.0, %v306
  %v308 = vpop.f32.mrb[0].mxu0
  %v309 = vpop.f32.mrb[0].mxu0
  %v310 = vadd.f32 0.0, %v309
  %v311 = vpop.f32.mrb[0].mxu0
  %312 = vdwg.mxu0
  %v313 = vadd.f32 %v104, %v307
  %v314 = vadd.f32 %v105, %v310
  %v316 = vlaneseq
  %v317 = vshrl.u32 %v316, 7
  %v318 = vsub.s32 0, %v317
  %v319 = vrot.slane %v61, %v318
  %v321 = vadd.f32 %v313, %v319
  %v322 = vadd.f32 %v314, %v319
  %323 = vst.msk [vmem:[%s8] sm:$0xff] %vm62, %v321
  %324 = vst.msk [vmem:[%s8 + $0x8] sm:$0xff] %vm62, %v322
  // Predicated region
  $region34: #{image_encoder_forward.18} parent=0 // pred_check
    _
  $region35: #{image_encoder_forward.18} parent=0 // pred_check_branch
    %326 = sbr.rel (0) target = $region37
  $region36: #{image_encoder_forward.18} parent=0 // pred_region
    _
  $region37: #{image_encoder_forward.18} parent=0 // pred_fallthru
    _
  // Predicated region
  $region38: #{image_encoder_forward.18} parent=0 // pred_check
    _
  $region39: #{image_encoder_forward.18} parent=0 // pred_check_branch
    %328 = sbr.rel (0) target = $region41
  $region40: #{image_encoder_forward.18} parent=0 // pred_region
    _
  $region41: #{image_encoder_forward.18} parent=0 // pred_fallthru
    _

// kernel: image_encoder_forward.22
$region0: #{image_encoder_forward.22}
  #allocation0 [shape = 'u32[]', space=smem, size = 0x4, offset = 0x4, fixed_abs, tag = 'smem constant byte address 0x4 - core index']
  #allocation1 [shape = 'u32[144,128]{1,0:T(1,128)}', space=vmem, size = 0x12000, scoped, tag = 'internal scratch']
  #allocation2 [shape = 'f32[16,16]{1,0:T(8,128)}', space=vmem, size = 0x2000, scoped, tag = 'scratch operand']
  %s0 = inlined_call_operand.vmem [shape: bf16[16,32], index: 0, kind: input, shape index: {}]
  %s1 = inlined_call_operand.vmem [shape: bf16[32,16], index: 1, kind: input, shape index: {}]
  %s2 = inlined_call_operand.vmem [shape: f32[16,16], index: 2, kind: output, shape index: {}]
  %s3 = sld [smem:[#allocation0]]
  $region26: #{image_encoder_forward.22} parent=0
    _
  %s5 = ssub.s32 1, %s3
  %s6 = scalar_select 0, %s5, %s3
  // Predicated region
  $region2: #{image_encoder_forward.22} parent=0 // pred_check
    _
  $region3: #{image_encoder_forward.22} parent=0 // pred_check_branch
    %8 = sbr.rel (0) target = $region5
  $region4: #{image_encoder_forward.22} parent=0 // pred_region
    _
  $region5: #{image_encoder_forward.22} parent=0 // pred_fallthru
    _
  // Predicated region
  $region6: #{image_encoder_forward.22} parent=0 // pred_check
    _
  $region7: #{image_encoder_forward.22} parent=0 // pred_check_branch
    %10 = sbr.rel (0) target = $region9
  $region8: #{image_encoder_forward.22} parent=0 // pred_region
    _
  $region9: #{image_encoder_forward.22} parent=0 // pred_fallthru
    _
  %p12 = scmp.eq.s32.totalorder 0, 0
  // Predicated region
  $region10: #{image_encoder_forward.22} parent=0 // pred_check
    %p13 = pneg %p12
  $region11: #{image_encoder_forward.22} parent=0 // pred_check_branch
    %15 = sbr.rel (%p13) target = $region13
  $region12: #{image_encoder_forward.22} parent=0 // pred_region
    %vm16 = vcmask 130048
    %17 = vst.msk [vmem:[#allocation2] sm:$0xff] %vm16, 0.0
    %18 = vst.msk [vmem:[#allocation2 + $0x8] sm:$0xff] %vm16, 0.0
  $region13: #{image_encoder_forward.22} parent=0 // pred_fallthru
    _
  %v19 = vld [vmem:[#allocation2] sm:$0xff]
  %v20 = vld [vmem:[#allocation2 + $0x8] sm:$0xff]
  %v21 = vld [vmem:[%s0] sm:$0xf]
  %v22 = vld [vmem:[%s0 + $0x4] sm:$0xf]
  %v23 = vld [vmem:[%s1] sm:$0xf]
  %v24 = vld [vmem:[%s1 + $0x4] sm:$0xf]
  %v25 = vld [vmem:[%s1 + $0x8] sm:$0xf]
  %v26 = vld [vmem:[%s1 + $0xc] sm:$0xf]
  %v29 = vunpack.c.l.b16 %v21
  %v30 = vunpack.c.l.b16 %v22
  %v31 = vpack.c.b16 %v30, %v29
  %v36 = vunpack.c.l.b16 %v23
  %v37 = vunpack.c.l.b16 %v24
  %v38 = vunpack.c.l.b16 %v25
  %v39 = vunpack.c.l.b16 %v26
  %v40 = vpack.c.b16 %v37, %v36
  %v41 = vpack.c.b16 %v39, %v38
  %vm44 = vcmask 261120
  %v46 = vsel %vm44, %v31, 0
  %48 = vmatprep.subr.bf16.mxu0 0
  %49 = vmatpush1.bf16.msra.mxu0 %v40
  %50 = vmatprep.subr.bf16.mxu0 0
  %51 = vmatpush1.bf16.msra.mxu0 %v41
  %52 = vmatprep.subr.bf16.mxu0 0
  %53 = vmatpush1.bf16.msra.mxu0 0
  %54 = vmatprep.subr.bf16.mxu0 0
  %55 = vmatpush1.bf16.msra.mxu0 0
  %56 = vmatprep.subr.bf16.mxu0 0
  %57 = vmatpush1.bf16.msra.mxu0 0
  %58 = vmatprep.subr.bf16.mxu0 0
  %59 = vmatpush1.bf16.msra.mxu0 0
  %60 = vmatprep.subr.bf16.mxu0 0
  %61 = vmatpush1.bf16.msra.mxu0 0
  %62 = vmatprep.subr.bf16.mxu0 0
  %63 = vmatpush1.bf16.msra.mxu0 0
  %64 = vmatprep.subr.bf16.mxu0 0
  %65 = vmatpush1.bf16.msra.mxu0 0
  %66 = vmatprep.subr.bf16.mxu0 0
  %67 = vmatpush1.bf16.msra.mxu0 0
  %68 = vmatprep.subr.bf16.mxu0 0
  %69 = vmatpush1.bf16.msra.mxu0 0
  %70 = vmatprep.subr.bf16.mxu0 0
  %71 = vmatpush1.bf16.msra.mxu0 0
  %72 = vmatprep.subr.bf16.mxu0 0
  %73 = vmatpush1.bf16.msra.mxu0 0
  %74 = vmatprep.subr.bf16.mxu0 0
  %75 = vmatpush1.bf16.msra.mxu0 0
  %76 = vmatprep.subr.bf16.mxu0 0
  %77 = vmatpush1.bf16.msra.mxu0 0
  %78 = vmatprep.subr.bf16.mxu0 0
  %79 = vmatpush1.bf16.msra.mxu0 0
  %80 = vmatprep.mubr.bf16.mxu0 0
  %81 = vmatmul.mubr.bf16.gmra.mrb[0].mxu0 %v46
  %v82 = vpop.f32.mrb[0].mxu0
  %v83 = vadd.f32 0.0, %v82
  %v84 = vpop.f32.mrb[0].mxu0
  %v85 = vpop.f32.mrb[0].mxu0
  %v86 = vadd.f32 0.0, %v85
  %v87 = vpop.f32.mrb[0].mxu0
  %88 = vdwg.mxu0
  %v89 = vadd.f32 %v19, %v83
  %v90 = vadd.f32 %v20, %v86
  %vm91 = vcmask 130048
  %92 = vst.msk [vmem:[#allocation2] sm:$0xff] %vm91, %v89
  %93 = vst.msk [vmem:[#allocation2 + $0x8] sm:$0xff] %vm91, %v90
  // Predicated region
  $region14: #{image_encoder_forward.22} parent=0 // pred_check
    %p94 = pneg %p12
  $region15: #{image_encoder_forward.22} parent=0 // pred_check_branch
    %96 = sbr.rel (%p94) target = $region17
  $region16: #{image_encoder_forward.22} parent=0 // pred_region
    %v97 = vld [vmem:[#allocation2] sm:$0xff]
    %v98 = vld [vmem:[#allocation2 + $0x8] sm:$0xff]
    %99 = vst.msk [vmem:[%s2] sm:$0xff] %vm91, %v97
    %100 = vst.msk [vmem:[%s2 + $0x8] sm:$0xff] %vm91, %v98
  $region17: #{image_encoder_forward.22} parent=0 // pred_fallthru
    _
  // Predicated region
  $region18: #{image_encoder_forward.22} parent=0 // pred_check
    _
  $region19: #{image_encoder_forward.22} parent=0 // pred_check_branch
    %102 = sbr.rel (0) target = $region21
  $region20: #{image_encoder_forward.22} parent=0 // pred_region
    _
  $region21: #{image_encoder_forward.22} parent=0 // pred_fallthru
    _
  // Predicated region
  $region22: #{image_encoder_forward.22} parent=0 // pred_check
    _
  $region23: #{image_encoder_forward.22} parent=0 // pred_check_branch
    %104 = sbr.rel (0) target = $region25
  $region24: #{image_encoder_forward.22} parent=0 // pred_region
    _
  $region25: #{image_encoder_forward.22} parent=0 // pred_fallthru
    _

// kernel: image_encoder_forward.23
$region0: #{image_encoder_forward.23}
  #allocation0 [shape = 'u32[]', space=smem, size = 0x4, offset = 0x4, fixed_abs, tag = 'smem constant byte address 0x4 - core index']
  #allocation1 [shape = 'u32[144,128]{1,0:T(1,128)}', space=vmem, size = 0x12000, scoped, tag = 'internal scratch']
  %s0 = inlined_call_operand.vmem [shape: f32[16,16], index: 0, kind: input, shape index: {}]
  %s1 = inlined_call_operand.vmem [shape: f32[1,16], index: 1, kind: input, shape index: {}]
  %s2 = inlined_call_operand.vmem [shape: f32[1,16], index: 2, kind: input, shape index: {}]
  %s3 = inlined_call_operand.vmem [shape: f32[16,16], index: 3, kind: output, shape index: {}]
  %s4 = sld [smem:[#allocation0]]
  $region22: #{image_encoder_forward.23} parent=0
    _
  %s6 = ssub.s32 1, %s4
  %s7 = scalar_select 0, %s6, %s4
  // Predicated region
  $region2: #{image_encoder_forward.23} parent=0 // pred_check
    _
  $region3: #{image_encoder_forward.23} parent=0 // pred_check_branch
    %9 = sbr.rel (0) target = $region5
  $region4: #{image_encoder_forward.23} parent=0 // pred_region
    _
  $region5: #{image_encoder_forward.23} parent=0 // pred_fallthru
    _
  // Predicated region
  $region6: #{image_encoder_forward.23} parent=0 // pred_check
    _
  $region7: #{image_encoder_forward.23} parent=0 // pred_check_branch
    %11 = sbr.rel (0) target = $region9
  $region8: #{image_encoder_forward.23} parent=0 // pred_region
    _
  $region9: #{image_encoder_forward.23} parent=0 // pred_fallthru
    _
  // Predicated region
  $region10: #{image_encoder_forward.23} parent=0 // pred_check
    _
  $region11: #{image_encoder_forward.23} parent=0 // pred_check_branch
    %13 = sbr.rel (0) target = $region13
  $region12: #{image_encoder_forward.23} parent=0 // pred_region
    _
  $region13: #{image_encoder_forward.23} parent=0 // pred_fallthru
    _
  %v14 = vld [vmem:[%s0] sm:$0xff]
  %v15 = vld [vmem:[%s0 + $0x8] sm:$0xff]
  %vm16 = vcmask 130048
  %v17 = vsel %vm16, %v14, 0.0
  %18 = vadd.xlane.f32.xlu0 %v17
  %v19 = vpop.xlane.xlu0 %18
  %v20 = vsel %vm16, %v15, 0.0
  %21 = vadd.xlane.f32.xlu0 %v20
  %v22 = vpop.xlane.xlu0 %21
  %v23 = vrcp.pop 16.0
  %v24 = vmul.f32 %v19, %v23
  %v25 = vmul.f32 %v22, %v23
  %v26 = vsub.f32 %v14, %v24
  %v27 = vsub.f32 %v15, %v25
  %v28 = vmul.f32 %v26, %v26
  %v29 = vmul.f32 %v27, %v27
  %v30 = vsel %vm16, %v28, 0.0
  %31 = vadd.xlane.f32.xlu0 %v30
  %v32 = vpop.xlane.xlu0 %31
  %v33 = vsel %vm16, %v29, 0.0
  %34 = vadd.xlane.f32.xlu0 %v33
  %v35 = vpop.xlane.xlu0 %34
  %v36 = vmul.f32 %v32, %v23
  %v37 = vmul.f32 %v35, %v23
  %v38 = vadd.f32 %v36, 1e-06
  %v39 = vadd.f32 %v37, 1e-06
  %v40 = vrsqrt.pop %v38
  %v41 = vrsqrt.pop %v39
  %v42 = vmul.f32 %v26, %v40
  %v43 = vmul.f32 %v27, %v41
  %v44 = vld [vmem:[%s1] sm:$0x1]
  %v46 = vlaneseq
  %v47 = vshrl.u32 %v46, 7
  %v48 = vsub.s32 0, %v47
  %v49 = vrot.slane %v44, %v48
  %v51 = vmul.f32 %v42, %v49
  %v52 = vmul.f32 %v43, %v49
  %v53 = vld [vmem:[%s2] sm:$0x1]
  %v55 = vlaneseq
  %v56 = vshrl.u32 %v55, 7
  %v57 = vsub.s32 0, %v56
  %v58 = vrot.slane %v53, %v57
  %v60 = vadd.f32 %v51, %v58
  %v61 = vadd.f32 %v52, %v58
  %62 = vst.msk [vmem:[%s3] sm:$0xff] %vm16, %v60
  %63 = vst.msk [vmem:[%s3 + $0x8] sm:$0xff] %vm16, %v61
  // Predicated region
  $region14: #{image_encoder_forward.23} parent=0 // pred_check
    _
  $region15: #{image_encoder_forward.23} parent=0 // pred_check_branch
    %65 = sbr.rel (0) target = $region17
  $region16: #{image_encoder_forward.23} parent=0 // pred_region
    _
  $region17: #{image_encoder_forward.23} parent=0 // pred_fallthru
    _
  // Predicated region
  $region18: #{image_encoder_forward.23} parent=0 // pred_check
    _
  $region19: #{image_encoder_forward.23} parent=0 // pred_check_branch
    %67 = sbr.rel (0) target = $region21
  $region20: #{image_encoder_forward.23} parent=0 // pred_region
    _
  $region21: #{image_encoder_forward.23} parent=0 // pred_fallthru
    _

// kernel: image_encoder_forward.25
$region0: #{image_encoder_forward.25}
  #allocation0 [shape = 'u32[]', space=smem, size = 0x4, offset = 0x4, fixed_abs, tag = 'smem constant byte address 0x4 - core index']
  #allocation1 [shape = 'u32[144,128]{1,0:T(1,128)}', space=vmem, size = 0x12000, scoped, tag = 'internal scratch']
  %s0 = inlined_call_operand.vmem [shape: f32[16,16], index: 0, kind: input, shape index: {}]
  %s1 = inlined_call_operand.vmem [shape: f32[1,16], index: 1, kind: input, shape index: {}]
  %s2 = inlined_call_operand.vmem [shape: f32[1,16], index: 2, kind: input, shape index: {}]
  %s3 = inlined_call_operand.hbm [shape: f32[16,16], index: 3, kind: output, shape index: {}]
  %s4 = sld [smem:[#allocation0]]
  $region22: #{image_encoder_forward.25} parent=0
    _
  %s6 = ssub.s32 1, %s4
  %s7 = scalar_select 0, %s6, %s4
  $region1: #{image_encoder_forward.25} parent=0
    #allocation2 [shape = 'u8[8192]{0}', space=vmem, size = 0x2000, scoped, tag = 'output window, operand 0, single buffered']
    #allocation3 [shape = 's32[1]{0}', space=sflag, size = 0x4, scoped, tag = 'scoped memory for image_encoder_forward.25']
    %8 = vsyncpa [#allocation3], 0
    // Predicated region
    $region2: #{image_encoder_forward.25} parent=1 // pred_check
      _
    $region3: #{image_encoder_forward.25} parent=1 // pred_check_branch
      %10 = sbr.rel (0) target = $region5
    $region4: #{image_encoder_forward.25} parent=1 // pred_region
      _
    $region5: #{image_encoder_forward.25} parent=1 // pred_fallthru
      _
    // Predicated region
    $region6: #{image_encoder_forward.25} parent=1 // pred_check
      _
    $region7: #{image_encoder_forward.25} parent=1 // pred_check_branch
      %12 = sbr.rel (0) target = $region9
    $region8: #{image_encoder_forward.25} parent=1 // pred_region
      _
    $region9: #{image_encoder_forward.25} parent=1 // pred_fallthru
      _
    // Predicated region
    $region10: #{image_encoder_forward.25} parent=1 // pred_check
      _
    $region11: #{image_encoder_forward.25} parent=1 // pred_check_branch
      %14 = sbr.rel (0) target = $region13
    $region12: #{image_encoder_forward.25} parent=1 // pred_region
      _
    $region13: #{image_encoder_forward.25} parent=1 // pred_fallthru
      _
    %v15 = vld [vmem:[%s0] sm:$0xff]
    %v16 = vld [vmem:[%s0 + $0x8] sm:$0xff]
    %vm17 = vcmask 130048
    %v18 = vsel %vm17, %v15, 0.0
    %19 = vadd.xlane.f32.xlu0 %v18
    %v20 = vpop.xlane.xlu0 %19
    %v21 = vsel %vm17, %v16, 0.0
    %22 = vadd.xlane.f32.xlu0 %v21
    %v23 = vpop.xlane.xlu0 %22
    %v24 = vrcp.pop 16.0
    %v25 = vmul.f32 %v20, %v24
    %v26 = vmul.f32 %v23, %v24
    %v27 = vsub.f32 %v15, %v25
    %v28 = vsub.f32 %v16, %v26
    %v29 = vmul.f32 %v27, %v27
    %v30 = vmul.f32 %v28, %v28
    %v31 = vsel %vm17, %v29, 0.0
    %32 = vadd.xlane.f32.xlu0 %v31
    %v33 = vpop.xlane.xlu0 %32
    %v34 = vsel %vm17, %v30, 0.0
    %35 = vadd.xlane.f32.xlu0 %v34
    %v36 = vpop.xlane.xlu0 %35
    %v37 = vmul.f32 %v33, %v24
    %v38 = vmul.f32 %v36, %v24
    %v39 = vadd.f32 %v37, 1e-06
    %v40 = vadd.f32 %v38, 1e-06
    %v41 = vrsqrt.pop %v39
    %v42 = vrsqrt.pop %v40
    %v43 = vmul.f32 %v27, %v41
    %v44 = vmul.f32 %v28, %v42
    %v45 = vld [vmem:[%s1] sm:$0x1]
    %v47 = vlaneseq
    %v48 = vshrl.u32 %v47, 7
    %v49 = vsub.s32 0, %v48
    %v50 = vrot.slane %v45, %v49
    %v52 = vmul.f32 %v43, %v50
    %v53 = vmul.f32 %v44, %v50
    %v54 = vld [vmem:[%s2] sm:$0x1]
    %v56 = vlaneseq
    %v57 = vshrl.u32 %v56, 7
    %v58 = vsub.s32 0, %v57
    %v59 = vrot.slane %v54, %v58
    %v61 = vadd.f32 %v52, %v59
    %v62 = vadd.f32 %v53, %v59
    %63 = vst.msk [vmem:[#allocation2] sm:$0xff] %vm17, %v61
    %64 = vst.msk [vmem:[#allocation2 + $0x8] sm:$0xff] %vm17, %v62
    // Predicated region
    $region14: #{image_encoder_forward.25} parent=1 // pred_check
      _
    $region15: #{image_encoder_forward.25} parent=1 // pred_check_branch
      %66 = sbr.rel (0) target = $region17
    $region16: #{image_encoder_forward.25} parent=1 // pred_region
      %s68 = ssub.s32 256, 256
      %69 = vsyncadd [#allocation3], %s68
      %s70 = sshll.u32 [#allocation2], 4
      %s71 = int_to_ptr.vmem [resolvable:$true] %s70
      %76 = dma.vmem_to_hbm [thread:$0]  %s71, 256, %s3, [#allocation3], 128, 128, 8
    $region17: #{image_encoder_forward.25} parent=1 // pred_fallthru
      _
    // Predicated region
    $region18: #{image_encoder_forward.25} parent=1 // pred_check
      _
    $region19: #{image_encoder_forward.25} parent=1 // pred_check_branch
      %78 = sbr.rel (0) target = $region21
    $region20: #{image_encoder_forward.25} parent=1 // pred_region
      %79 = dma.done [#allocation3], 256
    $region21: #{image_encoder_forward.25} parent=1 // pred_fallthru
      _
    %80 = vsyncpa [#allocation3], 1

// kernel: image_encoder_forward.24
$region0: #{image_encoder_forward.24}
  #allocation0 [shape = 'u32[]', space=smem, size = 0x4, offset = 0x4, fixed_abs, tag = 'smem constant byte address 0x4 - core index']
  #allocation1 [shape = 'u32[144,128]{1,0:T(1,128)}', space=vmem, size = 0x12000, scoped, tag = 'internal scratch']
  %s0 = inlined_call_operand.vmem [shape: f32[2,4,24,16], index: 0, kind: input, shape index: {}]
  %s1 = inlined_call_operand.vmem [shape: bf16[3,3,3,16,16], index: 1, kind: input, shape index: {}]
  %s2 = inlined_call_operand.vmem [shape: f32[2,2,8,16], index: 2, kind: output, shape index: {}]
  %s3 = sld [smem:[#allocation0]]
  $region45: #{image_encoder_forward.24} parent=0
    _
  %s5 = ssub.s32 1, %s3
  %s6 = scalar_select 0, %s5, %s3
  loop: start=0, step=1, limit=14
  $region2: #{image_encoder_forward.24} parent=0 // loop_pre_header
    _
  $region3: #{image_encoder_forward.24} parent=0 // loop_header
    %s8 = sphi 0, %s12
    %p9 = scmp.ge.s32.totalorder %s8, 14
    %s15 = sphi 0, %s34
    %s16 = sphi 0, %s30
    %s17 = sphi 0, %s26
    %s18 = sphi 0, %s15
    %s19 = sphi 0, %s16
    %s20 = sphi 0, %s17
    %s21 = sphi 0, %s18
    %s22 = sphi 0, %s19
    %s23 = sphi 0, %s20
    %s41 = sphi 0, %s43
    %s44 = sphi 0, %s41
    %s45 = sphi 0, %s44
    %s61 = sphi 0, %s45
    %s67 = sphi 0, %s69
    %s70 = sphi 0, %s67
    %s71 = sphi 0, %s70
    %s87 = sphi 0, %s71
    %s95 = sphi 0, %s97
    %s98 = sphi 0, %s95
    %s99 = sphi 0, %s98
    %s115 = sphi 0, %s99
  $region4: #{image_encoder_forward.24} parent=0 // loop_header_branch
    %11 = sbr.rel (%p9) target = $region8
  $region5: #{image_encoder_forward.24} parent=0 // loop_body
    %s13 = ssub.s32 %s8, 1
    %s14 = ssub.s32 %s8, 2
    %s24 = sadd.s32 1, %s17
    %p25 = scmp.ge.s32.totalorder %s24, 3
    %s26 = scalar_select %p25, 0, %s24
    %s27 = sadd.s32 1, %s16
    %s28 = scalar_select %p25, %s27, %s16
    %p29 = scmp.ge.s32.totalorder %s28, 2
    %s30 = scalar_select %p29, 0, %s28
    %s31 = sadd.s32 1, %s15
    %s32 = scalar_select %p29, %s31, %s15
    %p33 = scmp.ge.s32.totalorder %s32, 2
    %s34 = scalar_select %p33, 0, %s32
    %s35 = sadd.s32 %s16, %s17
    %s36 = sadd.s32 %s30, %s26
    %s37 = ssub.s32 %s15, %s34
    %s38 = ssub.s32 %s35, %s36
    %s39 = sor.u32 %s37, %s38
    %p40 = scmp.eq.s32.totalorder %s39, 0
    %s42 = sadd.s32 %s41, 1
    %s43 = scalar_select %p40, %s41, %s42
    %p46 = pneg %p40
    %p47 = scmp.eq.s32.totalorder %s8, 11
    %p48 = por %p46, %p47
    %p49 = scmp.ne.s32.totalorder %s41, %s44
    %p50 = scmp.eq.s32.totalorder %s8, 0
    %p51 = por %p49, %p50
    %p52 = scmp.ne.s32.totalorder %s41, %s44
    %p53 = scmp.eq.s32.totalorder %s13, 11
    %p54 = por %p52, %p53
    %p55 = scmp.ne.s32.totalorder %s44, %s45
    %p56 = scmp.eq.s32.totalorder %s13, 0
    %p57 = por %p55, %p56
    %p58 = scmp.ne.s32.totalorder %s44, %s45
    %p59 = scmp.eq.s32.totalorder %s14, 11
    %p60 = por %p58, %p59
    %p62 = scmp.ne.s32.totalorder %s45, %s61
    %p63 = scmp.eq.s32.totalorder %s14, 0
    %p64 = por %p62, %p63
    %s65 = ssub.s32 %s17, %s26
    %p66 = scmp.eq.s32.totalorder %s65, 0
    %s68 = sadd.s32 %s67, 1
    %s69 = scalar_select %p66, %s67, %s68
    %p72 = pneg %p66
    %p73 = scmp.eq.s32.totalorder %s8, 11
    %p74 = por %p72, %p73
    %p75 = scmp.ne.s32.totalorder %s67, %s70
    %p76 = scmp.eq.s32.totalorder %s8, 0
    %p77 = por %p75, %p76
    %p78 = scmp.ne.s32.totalorder %s67, %s70
    %p79 = scmp.eq.s32.totalorder %s13, 11
    %p80 = por %p78, %p79
    %p81 = scmp.ne.s32.totalorder %s70, %s71
    %p82 = scmp.eq.s32.totalorder %s13, 0
    %p83 = por %p81, %p82
    %p84 = scmp.ne.s32.totalorder %s70, %s71
    %p85 = scmp.eq.s32.totalorder %s14, 11
    %p86 = por %p84, %p85
    %p88 = scmp.ne.s32.totalorder %s71, %s87
    %p89 = scmp.eq.s32.totalorder %s14, 0
    %p90 = por %p88, %p89
    %s91 = ssub.s32 %s15, %s34
    %s92 = ssub.s32 %s16, %s30
    %s93 = sor.u32 %s91, %s92
    %p94 = scmp.eq.s32.totalorder %s93, 0
    %s96 = sadd.s32 %s95, 1
    %s97 = scalar_select %p94, %s95, %s96
    %p100 = pneg %p94
    %p101 = scmp.eq.s32.totalorder %s8, 11
    %p102 = por %p100, %p101
    %p103 = scmp.ne.s32.totalorder %s95, %s98
    %p104 = scmp.eq.s32.totalorder %s8, 0
    %p105 = por %p103, %p104
    %p106 = scmp.ne.s32.totalorder %s95, %s98
    %p107 = scmp.eq.s32.totalorder %s13, 11
    %p108 = por %p106, %p107
    %p109 = scmp.ne.s32.totalorder %s98, %s99
    %p110 = scmp.eq.s32.totalorder %s13, 0
    %p111 = por %p109, %p110
    %p112 = scmp.ne.s32.totalorder %s98, %s99
    %p113 = scmp.eq.s32.totalorder %s14, 11
    %p114 = por %p112, %p113
    %p116 = scmp.ne.s32.totalorder %s99, %s115
    %p117 = scmp.eq.s32.totalorder %s14, 0
    %p118 = por %p116, %p117
    %p119 = scmp.le.s32.totalorder 1, %s8
    %p120 = scmp.lt.s32.totalorder %s8, 13
    %p121 = pnand %p119, %p120
    %p122 = pneg %p121
    // Predicated region
    $region9: #{image_encoder_forward.24} parent=5 // pred_check
      _
    $region10: #{image_encoder_forward.24} parent=5 // pred_check_branch
      %124 = sbr.rel (%p121) target = $region12
    $region11: #{image_encoder_forward.24} parent=5 // pred_region
      %s125 = ssub.s32 %s8, 1
    $region12: #{image_encoder_forward.24} parent=5 // pred_fallthru
      _
    %p126 = scmp.lt.s32.totalorder %s8, 12
    // Predicated region
    $region13: #{image_encoder_forward.24} parent=5 // pred_check
      %p127 = pneg %p126
    $region14: #{image_encoder_forward.24} parent=5 // pred_check_branch
      %129 = sbr.rel (%p127) target = $region16
    $region15: #{image_encoder_forward.24} parent=5 // pred_region
      // Predicated region
      $region17: #{image_encoder_forward.24} parent=15 // pred_check
        %p130 = pneg %p51
      $region18: #{image_encoder_forward.24} parent=15 // pred_check_branch
        %132 = sbr.rel (%p130) target = $region20
      $region19: #{image_encoder_forward.24} parent=15 // pred_region
        %s133 = sadd.s32 %s16, %s17
        %p134 = scmp.lt.s32.totalorder %s15, 1
        %s135 = scalar_select %p134, %s15, 1
        %p136 = scmp.lt.s32.totalorder %s133, 3
        %s137 = scalar_select %p136, %s133, 3
        %s138 = smul.addr %s137, 3
        %s139 = smul.addr %s135, 12
        %s140 = sadd.s32 %s138, %s139
        %s141 = smul.addr %s140, 8
        %s142 = scalar_lea.vmem %s0, %s141
        %s143 = sadd.s32 %s16, %s17
      $region20: #{image_encoder_forward.24} parent=15 // pred_fallthru
        _
      // Predicated region
      $region21: #{image_encoder_forward.24} parent=15 // pred_check
        %p144 = pneg %p77
      $region22: #{image_encoder_forward.24} parent=15 // pred_check_branch
        %146 = sbr.rel (%p144) target = $region24
      $region23: #{image_encoder_forward.24} parent=15 // pred_region
        %p147 = scmp.lt.s32.totalorder %s17, 2
        %s148 = scalar_select %p147, %s17, 2
        %s149 = smul.addr %s148, 18
        %s150 = smul.addr %s149, 4
        %s151 = scalar_lea.vmem %s1, %s150
      $region24: #{image_encoder_forward.24} parent=15 // pred_fallthru
        _
    $region16: #{image_encoder_forward.24} parent=5 // pred_fallthru
      _
    %p152 = scmp.le.s32.totalorder 1, %s8
    %p153 = scmp.lt.s32.totalorder %s8, 13
    %p154 = pnand %p152, %p153
    %p155 = pneg %p154
    // Predicated region
    $region25: #{image_encoder_forward.24} parent=5 // pred_check
      _
    $region26: #{image_encoder_forward.24} parent=5 // pred_check_branch
      %157 = sbr.rel (%p154) target = $region28
    $region27: #{image_encoder_forward.24} parent=5 // pred_region
      %s158 = ssub.s32 %s8, 1
      %s159 = sadd.s32 %s19, %s20
      %p160 = scmp.lt.s32.totalorder %s18, 1
      %s161 = scalar_select %p160, %s18, 1
      %p162 = scmp.lt.s32.totalorder %s159, 3
      %s163 = scalar_select %p162, %s159, 3
      %s164 = smul.addr %s163, 3
      %s165 = smul.addr %s161, 12
      %s166 = sadd.s32 %s164, %s165
      %s167 = smul.addr %s166, 8
      %s168 = scalar_lea.vmem %s0, %s167
      %p169 = pneg %p57
      %p170 = pneg %p54
      %p171 = scmp.lt.s32.totalorder %s20, 2
      %s172 = scalar_select %p171, %s20, 2
      %s173 = smul.addr %s172, 18
      %s174 = smul.addr %s173, 4
      %s175 = scalar_lea.vmem %s1, %s174
      %p176 = pneg %p83
      %p177 = pneg %p80
      %p178 = pneg %p111
      %p179 = pneg %p108
      %p180 = scmp.lt.s32.totalorder %s18, 1
      %s181 = scalar_select %p180, %s18, 1
      %p182 = scmp.lt.s32.totalorder %s19, 1
      %s183 = scalar_select %p182, %s19, 1
      %s184 = smul.addr %s181, 2
      %s185 = sadd.s32 %s183, %s184
      %s186 = smul.addr %s185, 8
      %s187 = scalar_lea.vmem %s2, %s186
      %s188 = sadd.s32 %s19, %s20
      %p189 = scmp.lt.s32.totalorder %s18, 1
      %s190 = scalar_select %p189, %s18, 1
      %p191 = scmp.lt.s32.totalorder %s188, 3
      %s192 = scalar_select %p191, %s188, 3
      %s193 = smul.addr %s192, 3
      %s194 = smul.addr %s190, 12
      %s195 = sadd.s32 %s193, %s194
      %s196 = smul.addr %s195, 8
      %s197 = scalar_lea.vmem %s0, %s196
      %s198 = sadd.s32 %s19, %s20
      %p199 = scmp.lt.s32.totalorder %s20, 2
      %s200 = scalar_select %p199, %s20, 2
      %s201 = smul.addr %s200, 18
      %s202 = smul.addr %s201, 4
      %s203 = scalar_lea.vmem %s1, %s202
      %p204 = scmp.lt.s32.totalorder %s18, 1
      %s205 = scalar_select %p204, %s18, 1
      %p206 = scmp.lt.s32.totalorder %s19, 1
      %s207 = scalar_select %p206, %s19, 1
      %s208 = smul.addr %s205, 2
      %s209 = sadd.s32 %s207, %s208
      %s210 = smul.addr %s209, 8
      %s211 = scalar_lea.vmem %s2, %s210
      %p213 = scmp.eq.s32.totalorder %s20, 0
      // Predicated region
      $region29: #{image_encoder_forward.24} parent=27 // pred_check
        %p214 = pneg %p213
      $region30: #{image_encoder_forward.24} parent=27 // pred_check_branch
        %216 = sbr.rel (%p214) target = $region32
      $region31: #{image_encoder_forward.24} parent=27 // pred_region
        %vm217 = vcmask 130048
        %218 = vst.msk [vmem:[%s211] sm:$0xff] %vm217, 0.0
      $region32: #{image_encoder_forward.24} parent=27 // pred_fallthru
        _
      %v219 = vld [vmem:[%s197] sm:$0xff]
      %v220 = vpack.c.bf16 %v219, %v219
      %v221 = vld [vmem:[%s211] sm:$0xff]
      %v222 = vld [vmem:[%s203] sm:$0xf]
      %v223 = vld [vmem:[%s203 + $0x4] sm:$0xf]
      %v226 = vunpack.c.l.b16 %v222
      %v227 = vunpack.c.l.b16 %v223
      %v228 = vpack.c.b16 %v227, %v226
      %vm230 = vcmask 130048
      %v232 = vsel %vm230, %v220, 0
      %234 = vmatprep.subr.bf16.mxu0 0
      %235 = vmatpush1.bf16.msra.mxu0 %v228
      %236 = vmatprep.subr.bf16.mxu0 0
      %237 = vmatpush1.bf16.msra.mxu0 0
      %238 = vmatprep.subr.bf16.mxu0 0
      %239 = vmatpush1.bf16.msra.mxu0 0
      %240 = vmatprep.subr.bf16.mxu0 0
      %241 = vmatpush1.bf16.msra.mxu0 0
      %242 = vmatprep.subr.bf16.mxu0 0
      %243 = vmatpush1.bf16.msra.mxu0 0
      %244 = vmatprep.subr.bf16.mxu0 0
      %245 = vmatpush1.bf16.msra.mxu0 0
      %246 = vmatprep.subr.bf16.mxu0 0
      %247 = vmatpush1.bf16.msra.mxu0 0
      %248 = vmatprep.subr.bf16.mxu0 0
      %249 = vmatpush1.bf16.msra.mxu0 0
      %250 = vmatprep.subr.bf16.mxu0 0
      %251 = vmatpush1.bf16.msra.mxu0 0
      %252 = vmatprep.subr.bf16.mxu0 0
      %253 = vmatpush1.bf16.msra.mxu0 0
      %254 = vmatprep.subr.bf16.mxu0 0
      %255 = vmatpush1.bf16.msra.mxu0 0
      %256 = vmatprep.subr.bf16.mxu0 0
      %257 = vmatpush1.bf16.msra.mxu0 0
      %258 = vmatprep.subr.bf16.mxu0 0
      %259 = vmatpush1.bf16.msra.mxu0 0
      %260 = vmatprep.subr.bf16.mxu0 0
      %261 = vmatpush1.bf16.msra.mxu0 0
      %262 = vmatprep.subr.bf16.mxu0 0
      %263 = vmatpush1.bf16.msra.mxu0 0
      %264 = vmatprep.subr.bf16.mxu0 0
      %265 = vmatpush1.bf16.msra.mxu0 0
      %266 = vmatprep.mubr.bf16.mxu0 0
      %267 = vmatmul.mubr.bf16.gmra.mrb[0].mxu0 %v232
      %v268 = vpop.f32.mrb[0].mxu0
      %v269 = vadd.f32 0.0, %v268
      %v270 = vpop.f32.mrb[0].mxu0
      %v271 = vpop.f32.mrb[0].mxu0
      %v272 = vpop.f32.mrb[0].mxu0
      %273 = vdwg.mxu0
      %v274 = vadd.f32 %v221, %v269
      %275 = vst.msk [vmem:[%s211] sm:$0xff] %vm230, %v274
      %v276 = vld [vmem:[%s197 + $0x1] sm:$0xff]
      %v277 = vpack.c.bf16 %v276, %v276
      %v278 = vld [vmem:[%s211] sm:$0xff]
      %s279 = scalar_lea.vmem %s203, 8
      %v280 = vld [vmem:[%s279] sm:$0xf]
      %v281 = vld [vmem:[%s279 + $0x4] sm:$0xf]
      %v284 = vunpack.c.l.b16 %v280
      %v285 = vunpack.c.l.b16 %v281
      %v286 = vpack.c.b16 %v285, %v284
      %v289 = vsel %vm230, %v277, 0
      %291 = vmatprep.subr.bf16.mxu0 0
      %292 = vmatpush1.bf16.msra.mxu0 %v286
      %293 = vmatprep.subr.bf16.mxu0 0
      %294 = vmatpush1.bf16.msra.mxu0 0
      %295 = vmatprep.subr.bf16.mxu0 0
      %296 = vmatpush1.bf16.msra.mxu0 0
      %297 = vmatprep.subr.bf16.mxu0 0
      %298 = vmatpush1.bf16.msra.mxu0 0
      %299 = vmatprep.subr.bf16.mxu0 0
      %300 = vmatpush1.bf16.msra.mxu0 0
      %301 = vmatprep.subr.bf16.mxu0 0
      %302 = vmatpush1.bf16.msra.mxu0 0
      %303 = vmatprep.subr.bf16.mxu0 0
      %304 = vmatpush1.bf16.msra.mxu0 0
      %305 = vmatprep.subr.bf16.mxu0 0
      %306 = vmatpush1.bf16.msra.mxu0 0
      %307 = vmatprep.subr.bf16.mxu0 0
      %308 = vmatpush1.bf16.msra.mxu0 0
      %309 = vmatprep.subr.bf16.mxu0 0
      %310 = vmatpush1.bf16.msra.mxu0 0
      %311 = vmatprep.subr.bf16.mxu0 0
      %312 = vmatpush1.bf16.msra.mxu0 0
      %313 = vmatprep.subr.bf16.mxu0 0
      %314 = vmatpush1.bf16.msra.mxu0 0
      %315 = vmatprep.subr.bf16.mxu0 0
      %316 = vmatpush1.bf16.msra.mxu0 0
      %317 = vmatprep.subr.bf16.mxu0 0
      %318 = vmatpush1.bf16.msra.mxu0 0
      %319 = vmatprep.subr.bf16.mxu0 0
      %320 = vmatpush1.bf16.msra.mxu0 0
      %321 = vmatprep.subr.bf16.mxu0 0
      %322 = vmatpush1.bf16.msra.mxu0 0
      %323 = vmatprep.mubr.bf16.mxu0 0
      %324 = vmatmul.mubr.bf16.gmra.mrb[0].mxu0 %v289
      %v325 = vpop.f32.mrb[0].mxu0
      %v326 = vadd.f32 0.0, %v325
      %v327 = vpop.f32.mrb[0].mxu0
      %v328 = vpop.f32.mrb[0].mxu0
      %v329 = vpop.f32.mrb[0].mxu0
      %330 = vdwg.mxu0
      %v331 = vadd.f32 %v278, %v326
      %332 = vst.msk [vmem:[%s211] sm:$0xff] %vm230, %v331
      %v333 = vld [vmem:[%s197 + $0x2] sm:$0xff]
      %v334 = vpack.c.bf16 %v333, %v333
      %v335 = vld [vmem:[%s211] sm:$0xff]
      %s336 = scalar_lea.vmem %s203, 16
      %v337 = vld [vmem:[%s336] sm:$0xf]
      %v338 = vld [vmem:[%s336 + $0x4] sm:$0xf]
      %v341 = vunpack.c.l.b16 %v337
      %v342 = vunpack.c.l.b16 %v338
      %v343 = vpack.c.b16 %v342, %v341
      %v346 = vsel %vm230, %v334, 0
      %348 = vmatprep.subr.bf16.mxu0 0
      %349 = vmatpush1.bf16.msra.mxu0 %v343
      %350 = vmatprep.subr.bf16.mxu0 0
      %351 = vmatpush1.bf16.msra.mxu0 0
      %352 = vmatprep.subr.bf16.mxu0 0
      %353 = vmatpush1.bf16.msra.mxu0 0
      %354 = vmatprep.subr.bf16.mxu0 0
      %355 = vmatpush1.bf16.msra.mxu0 0
      %356 = vmatprep.subr.bf16.mxu0 0
      %357 = vmatpush1.bf16.msra.mxu0 0
      %358 = vmatprep.subr.bf16.mxu0 0
      %359 = vmatpush1.bf16.msra.mxu0 0
      %360 = vmatprep.subr.bf16.mxu0 0
      %361 = vmatpush1.bf16.msra.mxu0 0
      %362 = vmatprep.subr.bf16.mxu0 0
      %363 = vmatpush1.bf16.msra.mxu0 0
      %364 = vmatprep.subr.bf16.mxu0 0
      %365 = vmatpush1.bf16.msra.mxu0 0
      %366 = vmatprep.subr.bf16.mxu0 0
      %367 = vmatpush1.bf16.msra.mxu0 0
      %368 = vmatprep.subr.bf16.mxu0 0
      %369 = vmatpush1.bf16.msra.mxu0 0
      %370 = vmatprep.subr.bf16.mxu0 0
      %371 = vmatpush1.bf16.msra.mxu0 0
      %372 = vmatprep.subr.bf16.mxu0 0
      %373 = vmatpush1.bf16.msra.mxu0 0
      %374 = vmatprep.subr.bf16.mxu0 0
      %375 = vmatpush1.bf16.msra.mxu0 0
      %376 = vmatprep.subr.bf16.mxu0 0
      %377 = vmatpush1.bf16.msra.mxu0 0
      %378 = vmatprep.subr.bf16.mxu0 0
      %379 = vmatpush1.bf16.msra.mxu0 0
      %380 = vmatprep.mubr.bf16.mxu0 0
      %381 = vmatmul.mubr.bf16.gmra.mrb[0].mxu0 %v346
      %v382 = vpop.f32.mrb[0].mxu0
      %v383 = vadd.f32 0.0, %v382
      %v384 = vpop.f32.mrb[0].mxu0
      %v385 = vpop.f32.mrb[0].mxu0
      %v386 = vpop.f32.mrb[0].mxu0
      %387 = vdwg.mxu0
      %v388 = vadd.f32 %v335, %v383
      %389 = vst.msk [vmem:[%s211] sm:$0xff] %vm230, %v388
      %v390 = vld [vmem:[%s197 + $0x4] sm:$0xff]
      %v391 = vpack.c.bf16 %v390, %v390
      %v392 = vld [vmem:[%s211] sm:$0xff]
      %s393 = scalar_lea.vmem %s203, 24
      %v394 = vld [vmem:[%s393] sm:$0xf]
      %v395 = vld [vmem:[%s393 + $0x4] sm:$0xf]
      %v398 = vunpack.c.l.b16 %v394
      %v399 = vunpack.c.l.b16 %v395
      %v400 = vpack.c.b16 %v399, %v398
      %v403 = vsel %vm230, %v391, 0
      %405 = vmatprep.subr.bf16.mxu0 0
      %406 = vmatpush1.bf16.msra.mxu0 %v400
      %407 = vmatprep.subr.bf16.mxu0 0
      %408 = vmatpush1.bf16.msra.mxu0 0
      %409 = vmatprep.subr.bf16.mxu0 0
      %410 = vmatpush1.bf16.msra.mxu0 0
      %411 = vmatprep.subr.bf16.mxu0 0
      %412 = vmatpush1.bf16.msra.mxu0 0
      %413 = vmatprep.subr.bf16.mxu0 0
      %414 = vmatpush1.bf16.msra.mxu0 0
      %415 = vmatprep.subr.bf16.mxu0 0
      %416 = vmatpush1.bf16.msra.mxu0 0
      %417 = vmatprep.subr.bf16.mxu0 0
      %418 = vmatpush1.bf16.msra.mxu0 0
      %419 = vmatprep.subr.bf16.mxu0 0
      %420 = vmatpush1.bf16.msra.mxu0 0
      %421 = vmatprep.subr.bf16.mxu0 0
      %422 = vmatpush1.bf16.msra.mxu0 0
      %423 = vmatprep.subr.bf16.mxu0 0
      %424 = vmatpush1.bf16.msra.mxu0 0
      %425 = vmatprep.subr.bf16.mxu0 0
      %426 = vmatpush1.bf16.msra.mxu0 0
      %427 = vmatprep.subr.bf16.mxu0 0
      %428 = vmatpush1.bf16.msra.mxu0 0
      %429 = vmatprep.subr.bf16.mxu0 0
      %430 = vmatpush1.bf16.msra.mxu0 0
      %431 = vmatprep.subr.bf16.mxu0 0
      %432 = vmatpush1.bf16.msra.mxu0 0
      %433 = vmatprep.subr.bf16.mxu0 0
      %434 = vmatpush1.bf16.msra.mxu0 0
      %435 = vmatprep.subr.bf16.mxu0 0
      %436 = vmatpush1.bf16.msra.mxu0 0
      %437 = vmatprep.mubr.bf16.mxu0 0
      %438 = vmatmul.mubr.bf16.gmra.mrb[0].mxu0 %v403
      %v439 = vpop.f32.mrb[0].mxu0
      %v440 = vadd.f32 0.0, %v439
      %v441 = vpop.f32.mrb[0].mxu0
      %v442 = vpop.f32.mrb[0].mxu0
      %v443 = vpop.f32.mrb[0].mxu0
      %444 = vdwg.mxu0
      %v445 = vadd.f32 %v392, %v440
      %446 = vst.msk [vmem:[%s211] sm:$0xff] %vm230, %v445
      %v447 = vld [vmem:[%s197 + $0x5] sm:$0xff]
      %v448 = vpack.c.bf16 %v447, %v447
      %v449 = vld [vmem:[%s211] sm:$0xff]
      %s450 = scalar_lea.vmem %s203, 32
      %v451 = vld [vmem:[%s450] sm:$0xf]
      %v452 = vld [vmem:[%s450 + $0x4] sm:$0xf]
      %v455 = vunpack.c.l.b16 %v451
      %v456 = vunpack.c.l.b16 %v452
      %v457 = vpack.c.b16 %v456, %v455
      %v460 = vsel %vm230, %v448, 0
      %462 = vmatprep.subr.bf16.mxu0 0
      %463 = vmatpush1.bf16.msra.mxu0 %v457
      %464 = vmatprep.subr.bf16.mxu0 0
      %465 = vmatpush1.bf16.msra.mxu0 0
      %466 = vmatprep.subr.bf16.mxu0 0
      %467 = vmatpush1.bf16.msra.mxu0 0
      %468 = vmatprep.subr.bf16.mxu0 0
      %469 = vmatpush1.bf16.msra.mxu0 0
      %470 = vmatprep.subr.bf16.mxu0 0
      %471 = vmatpush1.bf16.msra.mxu0 0
      %472 = vmatprep.subr.bf16.mxu0 0
      %473 = vmatpush1.bf16.msra.mxu0 0
      %474 = vmatprep.subr.bf16.mxu0 0
      %475 = vmatpush1.bf16.msra.mxu0 0
      %476 = vmatprep.subr.bf16.mxu0 0
      %477 = vmatpush1.bf16.msra.mxu0 0
      %478 = vmatprep.subr.bf16.mxu0 0
      %479 = vmatpush1.bf16.msra.mxu0 0
      %480 = vmatprep.subr.bf16.mxu0 0
      %481 = vmatpush1.bf16.msra.mxu0 0
      %482 = vmatprep.subr.bf16.mxu0 0
      %483 = vmatpush1.bf16.msra.mxu0 0
      %484 = vmatprep.subr.bf16.mxu0 0
      %485 = vmatpush1.bf16.msra.mxu0 0
      %486 = vmatprep.subr.bf16.mxu0 0
      %487 = vmatpush1.bf16.msra.mxu0 0
      %488 = vmatprep.subr.bf16.mxu0 0
      %489 = vmatpush1.bf16.msra.mxu0 0
      %490 = vmatprep.subr.bf16.mxu0 0
      %491 = vmatpush1.bf16.msra.mxu0 0
      %492 = vmatprep.subr.bf16.mxu0 0
      %493 = vmatpush1.bf16.msra.mxu0 0
      %494 = vmatprep.mubr.bf16.mxu0 0
      %495 = vmatmul.mubr.bf16.gmra.mrb[0].mxu0 %v460
      %v496 = vpop.f32.mrb[0].mxu0
      %v497 = vadd.f32 0.0, %v496
      %v498 = vpop.f32.mrb[0].mxu0
      %v499 = vpop.f32.mrb[0].mxu0
      %v500 = vpop.f32.mrb[0].mxu0
      %501 = vdwg.mxu0
      %v502 = vadd.f32 %v449, %v497
      %503 = vst.msk [vmem:[%s211] sm:$0xff] %vm230, %v502
      %v504 = vld [vmem:[%s197 + $0x6] sm:$0xff]
      %v505 = vpack.c.bf16 %v504, %v504
      %v506 = vld [vmem:[%s211] sm:$0xff]
      %s507 = scalar_lea.vmem %s203, 40
      %v508 = vld [vmem:[%s507] sm:$0xf]
      %v509 = vld [vmem:[%s507 + $0x4] sm:$0xf]
      %v512 = vunpack.c.l.b16 %v508
      %v513 = vunpack.c.l.b16 %v509
      %v514 = vpack.c.b16 %v513, %v512
      %v517 = vsel %vm230, %v505, 0
      %519 = vmatprep.subr.bf16.mxu0 0
      %520 = vmatpush1.bf16.msra.mxu0 %v514
      %521 = vmatprep.subr.bf16.mxu0 0
      %522 = vmatpush1.bf16.msra.mxu0 0
      %523 = vmatprep.subr.bf16.mxu0 0
      %524 = vmatpush1.bf16.msra.mxu0 0
      %525 = vmatprep.subr.bf16.mxu0 0
      %526 = vmatpush1.bf16.msra.mxu0 0
      %527 = vmatprep.subr.bf16.mxu0 0
      %528 = vmatpush1.bf16.msra.mxu0 0
      %529 = vmatprep.subr.bf16.mxu0 0
      %530 = vmatpush1.bf16.msra.mxu0 0
      %531 = vmatprep.subr.bf16.mxu0 0
      %532 = vmatpush1.bf16.msra.mxu0 0
      %533 = vmatprep.subr.bf16.mxu0 0
      %534 = vmatpush1.bf16.msra.mxu0 0
      %535 = vmatprep.subr.bf16.mxu0 0
      %536 = vmatpush1.bf16.msra.mxu0 0
      %537 = vmatprep.subr.bf16.mxu0 0
      %538 = vmatpush1.bf16.msra.mxu0 0
      %539 = vmatprep.subr.bf16.mxu0 0
      %540 = vmatpush1.bf16.msra.mxu0 0
      %541 = vmatprep.subr.bf16.mxu0 0
      %542 = vmatpush1.bf16.msra.mxu0 0
      %543 = vmatprep.subr.bf16.mxu0 0
      %544 = vmatpush1.bf16.msra.mxu0 0
      %545 = vmatprep.subr.bf16.mxu0 0
      %546 = vmatpush1.bf16.msra.mxu0 0
      %547 = vmatprep.subr.bf16.mxu0 0
      %548 = vmatpush1.bf16.msra.mxu0 0
      %549 = vmatprep.subr.bf16.mxu0 0
      %550 = vmatpush1.bf16.msra.mxu0 0
      %551 = vmatprep.mubr.bf16.mxu0 0
      %552 = vmatmul.mubr.bf16.gmra.mrb[0].mxu0 %v517
      %v553 = vpop.f32.mrb[0].mxu0
      %v554 = vadd.f32 0.0, %v553
      %v555 = vpop.f32.mrb[0].mxu0
      %v556 = vpop.f32.mrb[0].mxu0
      %v557 = vpop.f32.mrb[0].mxu0
      %558 = vdwg.mxu0
      %v559 = vadd.f32 %v506, %v554
      %560 = vst.msk [vmem:[%s211] sm:$0xff] %vm230, %v559
      %v561 = vld [vmem:[%s197 + $0x8] sm:$0xff]
      %v562 = vpack.c.bf16 %v561, %v561
      %v563 = vld [vmem:[%s211] sm:$0xff]
      %s564 = scalar_lea.vmem %s203, 48
      %v565 = vld [vmem:[%s564] sm:$0xf]
      %v566 = vld [vmem:[%s564 + $0x4] sm:$0xf]
      %v569 = vunpack.c.l.b16 %v565
      %v570 = vunpack.c.l.b16 %v566
      %v571 = vpack.c.b16 %v570, %v569
      %v574 = vsel %vm230, %v562, 0
      %576 = vmatprep.subr.bf16.mxu0 0
      %577 = vmatpush1.bf16.msra.mxu0 %v571
      %578 = vmatprep.subr.bf16.mxu0 0
      %579 = vmatpush1.bf16.msra.mxu0 0
      %580 = vmatprep.subr.bf16.mxu0 0
      %581 = vmatpush1.bf16.msra.mxu0 0
      %582 = vmatprep.subr.bf16.mxu0 0
      %583 = vmatpush1.bf16.msra.mxu0 0
      %584 = vmatprep.subr.bf16.mxu0 0
      %585 = vmatpush1.bf16.msra.mxu0 0
      %586 = vmatprep.subr.bf16.mxu0 0
      %587 = vmatpush1.bf16.msra.mxu0 0
      %588 = vmatprep.subr.bf16.mxu0 0
      %589 = vmatpush1.bf16.msra.mxu0 0
      %590 = vmatprep.subr.bf16.mxu0 0
      %591 = vmatpush1.bf16.msra.mxu0 0
      %592 = vmatprep.subr.bf16.mxu0 0
      %593 = vmatpush1.bf16.msra.mxu0 0
      %594 = vmatprep.subr.bf16.mxu0 0
      %595 = vmatpush1.bf16.msra.mxu0 0
      %596 = vmatprep.subr.bf16.mxu0 0
      %597 = vmatpush1.bf16.msra.mxu0 0
      %598 = vmatprep.subr.bf16.mxu0 0
      %599 = vmatpush1.bf16.msra.mxu0 0
      %600 = vmatprep.subr.bf16.mxu0 0
      %601 = vmatpush1.bf16.msra.mxu0 0
      %602 = vmatprep.subr.bf16.mxu0 0
      %603 = vmatpush1.bf16.msra.mxu0 0
      %604 = vmatprep.subr.bf16.mxu0 0
      %605 = vmatpush1.bf16.msra.mxu0 0
      %606 = vmatprep.subr.bf16.mxu0 0
      %607 = vmatpush1.bf16.msra.mxu0 0
      %608 = vmatprep.mubr.bf16.mxu0 0
      %609 = vmatmul.mubr.bf16.gmra.mrb[0].mxu0 %v574
      %v610 = vpop.f32.mrb[0].mxu0
      %v611 = vadd.f32 0.0, %v610
      %v612 = vpop.f32.mrb[0].mxu0
      %v613 = vpop.f32.mrb[0].mxu0
      %v614 = vpop.f32.mrb[0].mxu0
      %615 = vdwg.mxu0
      %v616 = vadd.f32 %v563, %v611
      %617 = vst.msk [vmem:[%s211] sm:$0xff] %vm230, %v616
      %v618 = vld [vmem:[%s197 + $0x9] sm:$0xff]
      %v619 = vpack.c.bf16 %v618, %v618
      %v620 = vld [vmem:[%s211] sm:$0xff]
      %s621 = scalar_lea.vmem %s203, 56
      %v622 = vld [vmem:[%s621] sm:$0xf]
      %v623 = vld [vmem:[%s621 + $0x4] sm:$0xf]
      %v626 = vunpack.c.l.b16 %v622
      %v627 = vunpack.c.l.b16 %v623
      %v628 = vpack.c.b16 %v627, %v626
      %v631 = vsel %vm230, %v619, 0
      %633 = vmatprep.subr.bf16.mxu0 0
      %634 = vmatpush1.bf16.msra.mxu0 %v628
      %635 = vmatprep.subr.bf16.mxu0 0
      %636 = vmatpush1.bf16.msra.mxu0 0
      %637 = vmatprep.subr.bf16.mxu0 0
      %638 = vmatpush1.bf16.msra.mxu0 0
      %639 = vmatprep.subr.bf16.mxu0 0
      %640 = vmatpush1.bf16.msra.mxu0 0
      %641 = vmatprep.subr.bf16.mxu0 0
      %642 = vmatpush1.bf16.msra.mxu0 0
      %643 = vmatprep.subr.bf16.mxu0 0
      %644 = vmatpush1.bf16.msra.mxu0 0
      %645 = vmatprep.subr.bf16.mxu0 0
      %646 = vmatpush1.bf16.msra.mxu0 0
      %647 = vmatprep.subr.bf16.mxu0 0
      %648 = vmatpush1.bf16.msra.mxu0 0
      %649 = vmatprep.subr.bf16.mxu0 0
      %650 = vmatpush1.bf16.msra.mxu0 0
      %651 = vmatprep.subr.bf16.mxu0 0
      %652 = vmatpush1.bf16.msra.mxu0 0
      %653 = vmatprep.subr.bf16.mxu0 0
      %654 = vmatpush1.bf16.msra.mxu0 0
      %655 = vmatprep.subr.bf16.mxu0 0
      %656 = vmatpush1.bf16.msra.mxu0 0
      %657 = vmatprep.subr.bf16.mxu0 0
      %658 = vmatpush1.bf16.msra.mxu0 0
      %659 = vmatprep.subr.bf16.mxu0 0
      %660 = vmatpush1.bf16.msra.mxu0 0
      %661 = vmatprep.subr.bf16.mxu0 0
      %662 = vmatpush1.bf16.msra.mxu0 0
      %663 = vmatprep.subr.bf16.mxu0 0
      %664 = vmatpush1.bf16.msra.mxu0 0
      %665 = vmatprep.mubr.bf16.mxu0 0
      %666 = vmatmul.mubr.bf16.gmra.mrb[0].mxu0 %v631
      %v667 = vpop.f32.mrb[0].mxu0
      %v668 = vadd.f32 0.0, %v667
      %v669 = vpop.f32.mrb[0].mxu0
      %v670 = vpop.f32.mrb[0].mxu0
      %v671 = vpop.f32.mrb[0].mxu0
      %672 = vdwg.mxu0
      %v673 = vadd.f32 %v620, %v668
      %674 = vst.msk [vmem:[%s211] sm:$0xff] %vm230, %v673
      %v675 = vld [vmem:[%s197 + $0xa] sm:$0xff]
      %v676 = vpack.c.bf16 %v675, %v675
      %v677 = vld [vmem:[%s211] sm:$0xff]
      %s678 = scalar_lea.vmem %s203, 64
      %v679 = vld [vmem:[%s678] sm:$0xf]
      %v680 = vld [vmem:[%s678 + $0x4] sm:$0xf]
      %v683 = vunpack.c.l.b16 %v679
      %v684 = vunpack.c.l.b16 %v680
      %v685 = vpack.c.b16 %v684, %v683
      %v688 = vsel %vm230, %v676, 0
      %690 = vmatprep.subr.bf16.mxu0 0
      %691 = vmatpush1.bf16.msra.mxu0 %v685
      %692 = vmatprep.subr.bf16.mxu0 0
      %693 = vmatpush1.bf16.msra.mxu0 0
      %694 = vmatprep.subr.bf16.mxu0 0
      %695 = vmatpush1.bf16.msra.mxu0 0
      %696 = vmatprep.subr.bf16.mxu0 0
      %697 = vmatpush1.bf16.msra.mxu0 0
      %698 = vmatprep.subr.bf16.mxu0 0
      %699 = vmatpush1.bf16.msra.mxu0 0
      %700 = vmatprep.subr.bf16.mxu0 0
      %701 = vmatpush1.bf16.msra.mxu0 0
      %702 = vmatprep.subr.bf16.mxu0 0
      %703 = vmatpush1.bf16.msra.mxu0 0
      %704 = vmatprep.subr.bf16.mxu0 0
      %705 = vmatpush1.bf16.msra.mxu0 0
      %706 = vmatprep.subr.bf16.mxu0 0
      %707 = vmatpush1.bf16.msra.mxu0 0
      %708 = vmatprep.subr.bf16.mxu0 0
      %709 = vmatpush1.bf16.msra.mxu0 0
      %710 = vmatprep.subr.bf16.mxu0 0
      %711 = vmatpush1.bf16.msra.mxu0 0
      %712 = vmatprep.subr.bf16.mxu0 0
      %713 = vmatpush1.bf16.msra.mxu0 0
      %714 = vmatprep.subr.bf16.mxu0 0
      %715 = vmatpush1.bf16.msra.mxu0 0
      %716 = vmatprep.subr.bf16.mxu0 0
      %717 = vmatpush1.bf16.msra.mxu0 0
      %718 = vmatprep.subr.bf16.mxu0 0
      %719 = vmatpush1.bf16.msra.mxu0 0
      %720 = vmatprep.subr.bf16.mxu0 0
      %721 = vmatpush1.bf16.msra.mxu0 0
      %722 = vmatprep.mubr.bf16.mxu0 0
      %723 = vmatmul.mubr.bf16.gmra.mrb[0].mxu0 %v688
      %v724 = vpop.f32.mrb[0].mxu0
      %v725 = vadd.f32 0.0, %v724
      %v726 = vpop.f32.mrb[0].mxu0
      %v727 = vpop.f32.mrb[0].mxu0
      %v728 = vpop.f32.mrb[0].mxu0
      %729 = vdwg.mxu0
      %v730 = vadd.f32 %v677, %v725
      %731 = vst.msk [vmem:[%s211] sm:$0xff] %vm230, %v730
      %p732 = scmp.lt.s32.totalorder %s18, 1
      %s733 = scalar_select %p732, %s18, 1
      %p734 = scmp.lt.s32.totalorder %s19, 1
      %s735 = scalar_select %p734, %s19, 1
      %s736 = smul.addr %s733, 2
      %s737 = sadd.s32 %s735, %s736
      %s738 = smul.addr %s737, 8
      %s739 = scalar_lea.vmem %s2, %s738
      // Predicated region
      $region33: #{image_encoder_forward.24} parent=27 // pred_check
        %p740 = pneg %p108
      $region34: #{image_encoder_forward.24} parent=27 // pred_check_branch
        %742 = sbr.rel (%p740) target = $region36
      $region35: #{image_encoder_forward.24} parent=27 // pred_region
        _
      $region36: #{image_encoder_forward.24} parent=27 // pred_fallthru
        _
    $region28: #{image_encoder_forward.24} parent=5 // pred_fallthru
      _
    %p743 = scmp.le.s32.totalorder 2, %s8
    // Predicated region
    $region37: #{image_encoder_forward.24} parent=5 // pred_check
      %p744 = pneg %p743
    $region38: #{image_encoder_forward.24} parent=5 // pred_check_branch
      %746 = sbr.rel (%p744) target = $region40
    $region39: #{image_encoder_forward.24} parent=5 // pred_region
      %s747 = ssub.s32 %s8, 2
      // Predicated region
      $region41: #{image_encoder_forward.24} parent=39 // pred_check
        %p748 = pneg %p114
      $region42: #{image_encoder_forward.24} parent=39 // pred_check_branch
        %750 = sbr.rel (%p748) target = $region44
      $region43: #{image_encoder_forward.24} parent=39 // pred_region
        %p751 = scmp.lt.s32.totalorder %s21, 1
        %s752 = scalar_select %p751, %s21, 1
        %p753 = scmp.lt.s32.totalorder %s22, 1
        %s754 = scalar_select %p753, %s22, 1
        %s755 = smul.addr %s752, 2
        %s756 = sadd.s32 %s754, %s755
        %s757 = smul.addr %s756, 8
        %s758 = scalar_lea.vmem %s2, %s757
      $region44: #{image_encoder_forward.24} parent=39 // pred_fallthru
        _
    $region40: #{image_encoder_forward.24} parent=5 // pred_fallthru
      _
  $region6: #{image_encoder_forward.24} parent=0 // loop_footer
    %s12 = sadd.s32 1, %s8
  $region7: #{image_encoder_forward.24} parent=0 // loop_footer_branch
    %7 = sbr.rel target = $region3
  $region8: #{image_encoder_forward.24} parent=0 // loop_exit
    _

</llo_original>
